<compile_context>
chip_gen: v5e
topology: v5e:2x2
jax: 0.10.0
libtpu: 0.0.40
codegen_flags: <defaults>
</compile_context>

<pallas_src>
import math

import jax
import jax.numpy as jnp
from jax.experimental import pallas as pl
from jax.experimental.pallas import tpu as pltpu


def _round_up(v, m):
    return ((v + m - 1) // m) * m


# ---------------------------------------------------------------------------
# Kernel: fused MLP  y = fc2(GELU(fc1(x)))
#   grid = (row tiles: "parallel", hidden-dim tiles: "arbitrary" reduction)
#   bf16 MXU operands, f32 VMEM accumulator, GELU math in f32.
# ---------------------------------------------------------------------------
def mlp_kernel(x_ref, w1_ref, b1_ref, w2_ref, b2_ref, o_ref, acc_ref):
    h_idx = pl.program_id(1)

    @pl.when(h_idx == 0)
    def _init():
        acc_ref[...] = jnp.zeros_like(acc_ref)

    # fc1 partial over this hidden slice; cast x to bf16 in-kernel (no wrapper HBM pass).
    x_bf = x_ref[...].astype(jnp.bfloat16)
    h = jnp.dot(x_bf, w1_ref[...], preferred_element_type=jnp.float32)
    h = h + b1_ref[...]                                   # (1, th) bias broadcast, f32
    # exact (erf) GELU — matches PyTorch nn.GELU default; keep math in f32.
    h = 0.5 * h * (1.0 + jax.lax.erf(h * (1.0 / math.sqrt(2.0))))
    # dropout(p=0.0) == identity.
    acc_ref[...] += jnp.dot(h.astype(w2_ref.dtype), w2_ref[...],
                            preferred_element_type=jnp.float32)

    @pl.when(h_idx == pl.num_programs(1) - 1)
    def _finalize():
        o_ref[...] = (acc_ref[...] + b2_ref[...]).astype(o_ref.dtype)


def _tpu_defaults():
    """Generation-aware default tiles and VMEM capacity."""
    try:
        kind = jax.devices()[0].device_kind.lower()
    except Exception:
        kind = ""
    if "v6" in kind:
        tm = 1024          # v6e: 918 TF/s / ~1.35 TB/s -> need ~680 rows/weight-byte
    elif "v7" in kind:
        tm = 512           # v7x: knee ~310; keep >=2 row tiles for the 2 TCs
    else:
        tm = 512           # v5e (knee ~240) and unknown devices
    th = 512               # multiple of 256 -> fills the 256-wide v6e/v7x MXU
    try:
        vmem_cap = int(pltpu.get_tpu_info().vmem_capacity_bytes)
    except Exception:
        vmem_cap = 64 << 20    # conservative (v7x-sized) fallback
    return tm, th, vmem_cap


def _pick_th(H, th_req):
    """Largest lane-aligned divisor of H <= th_req; prefer 256-multiples (v6e/v7x MXU).
    Falls back to full H only when H isn't 128-aligned (no valid tiling)."""
    th_req = max(128, min(th_req, H))
    if H % 128 != 0:
        return H
    for step in (256, 128):
        t = (th_req // step) * step
        while t >= step:
            if H % t == 0:
                return t
            t -= step
    return H


def mlp_pallas(x, w1, b1, w2, b2, *, tm=None, th=None):
    """x: [B, N, D]. Weights stored (in, out). Returns [B, N, O] in x.dtype."""
    B, N, D = x.shape
    H = w1.shape[1]
    O = w2.shape[1]
    M = B * N

    tm_def, th_def, vmem_cap = _tpu_defaults()
    tm = tm_def if tm is None else tm
    th = th_def if th is None else th

    # ---- tile selection ---------------------------------------------------
    # Row tile: multiple of 16 (bf16 sublane packing); don't over-pad tiny M;
    # keep >= 2 row tiles so the "parallel" axis can shard across 2 TCs (v7x).
    tm = max(16, min(tm, _round_up(M, 16)))
    if M > 16 and _round_up(M, tm) // tm < 2:
        tm = max(16, _round_up(pl.cdiv(M, 2), 16))
    M_pad = _round_up(M, tm)                     # handles ragged token counts
    th = _pick_th(H, th)

    # ---- operand prep -------------------------------------------------------
    # x stays in its native dtype (bf16 cast happens in-kernel); only pad if ragged.
    x2 = x.reshape(M, D)
    if M_pad != M:
        x2 = jnp.pad(x2, ((0, M_pad - M), (0, 0)))
    # Weights should already be bf16 (cast once at setup); only cast if caller passed f32.
    w1b = w1 if w1.dtype == jnp.bfloat16 else w1.astype(jnp.bfloat16)
    w2b = w2 if w2.dtype == jnp.bfloat16 else w2.astype(jnp.bfloat16)
    b1_2d = b1.reshape(1, H).astype(jnp.float32)
    b2_2d = b2.reshape(1, O).astype(jnp.float32)

    # ---- VMEM budget: double-buffered tiles + accumulator + fused temps ------
    x_bytes = x.dtype.itemsize
    o_bytes = x.dtype.itemsize
    est = 2 * (tm * D * x_bytes      # x tile (native dtype)
               + D * th * 2          # fc1 weight slice (bf16)
               + th * 4              # fc1 bias slice (f32)
               + th * O * 2          # fc2 weight slice (bf16)
               + O * 4               # fc2 bias (f32)
               + tm * O * o_bytes)   # output tile (x.dtype)
    est += tm * O * 4                # f32 accumulator scratch
    est += tm * th * 6               # fused fc1->GELU f32 temp + its bf16 copy
    est += tm * D * 2                # in-kernel bf16 copy of the x tile
    cap = vmem_cap - max(8 << 20, vmem_cap // 8)   # leave >= 8 MiB (or 1/8) headroom
    vmem_limit = int(min(max(est + (8 << 20), 32 << 20), cap))

    grid = (M_pad // tm, H // th)    # reduction (H) axis last

    out = pl.pallas_call(
        mlp_kernel,
        out_shape=jax.ShapeDtypeStruct((M_pad, O), x.dtype),
        grid_spec=pltpu.PrefetchScalarGridSpec(
            num_scalar_prefetch=0,
            grid=grid,
            in_specs=[
                pl.BlockSpec((tm, D), lambda i, h: (i, 0)),   # token rows (reused over h)
                pl.BlockSpec((D, th), lambda i, h: (0, h)),   # fc1 weight slice
                pl.BlockSpec((1, th), lambda i, h: (0, h)),   # fc1 bias slice
                pl.BlockSpec((th, O), lambda i, h: (h, 0)),   # fc2 weight slice
                pl.BlockSpec((1, O), lambda i, h: (0, 0)),    # fc2 bias
            ],
            out_specs=pl.BlockSpec((tm, O), lambda i, h: (i, 0)),
            scratch_shapes=[pltpu.VMEM((tm, O), jnp.float32)],
        ),
        compiler_params=pltpu.CompilerParams(
            dimension_semantics=("parallel", "arbitrary"),
            vmem_limit_bytes=vmem_limit),
    )(x2, w1b, b1_2d, w2b, b2_2d)

    if M_pad != M:
        out = out[:M]
    return out.reshape(B, N, O)


def init_mlp_params(key, in_features, hidden_features, out_features,
                    layer_id=1, init_std=0.02):
    """Mimics VisionTransformer init: trunc_normal(std=0.02) weights, zero biases,
    fc2 rescaled by 1/sqrt(2*layer_id). Stored as (in, out); weights cast to bf16 ONCE
    at setup so forward calls don't pay per-call HBM convert passes."""
    k1, k2 = jax.random.split(key)
    w1 = init_std * jax.random.truncated_normal(
        k1, -2.0, 2.0, (in_features, hidden_features), jnp.float32)
    b1 = jnp.zeros((hidden_features,), jnp.float32)
    w2 = init_std * jax.random.truncated_normal(
        k2, -2.0, 2.0, (hidden_features, out_features), jnp.float32)
    w2 = w2 / math.sqrt(2.0 * layer_id)
    b2 = jnp.zeros((out_features,), jnp.float32)
    return w1.astype(jnp.bfloat16), b1, w2.astype(jnp.bfloat16), b2


def mlp_ref(x, w1, b1, w2, b2):
    """Pure-JAX reference with the same bf16-operand / f32-accumulation recipe."""
    h = jnp.dot(x.astype(jnp.bfloat16), w1.astype(jnp.bfloat16),
                preferred_element_type=jnp.float32) + b1
    h = 0.5 * h * (1.0 + jax.lax.erf(h * (1.0 / math.sqrt(2.0))))
    o = jnp.dot(h.astype(jnp.bfloat16), w2.astype(jnp.bfloat16),
                preferred_element_type=jnp.float32) + b2
    return o.astype(x.dtype)


if __name__ == "__main__":
    # Small but lane-dense ViT-like shapes: ~196 tokens/image, embed dim 128, mlp_ratio 4.
    B, N = 2, 200          # M = 400 tokens -> exercises ragged padding / row-tile split
    D = 128                # in_features (multiple of 128, lane-dense output)
    H = 4 * D              # hidden_features = mlp_ratio * dim
    O = D                  # out_features = in_features

    key = jax.random.PRNGKey(0)
    kx, kp = jax.random.split(key)
    x = jax.random.normal(kx, (B, N, D), jnp.float32)
    w1, b1, w2, b2 = init_mlp_params(kp, D, H, O)

    y_ref = mlp_ref(x, w1, b1, w2, b2)

    # 1) generation-aware default tiles (tm clamps/splits to 2 row tiles of 208, th = H).
    y = jax.block_until_ready(mlp_pallas(x, w1, b1, w2, b2))
    assert y.shape == (B, N, O) and y.dtype == x.dtype
    err = float(jnp.max(jnp.abs(y - y_ref)))
    assert jnp.allclose(y, y_ref, atol=1e-2, rtol=1e-2), f"default tiles mismatch ({err})"

    # 2) explicit small tiles: exercises multi-step H reduction (grid=(4,2)) + row padding.
    y2 = jax.block_until_ready(mlp_pallas(x, w1, b1, w2, b2, tm=128, th=256))
    err2 = float(jnp.max(jnp.abs(y2 - y_ref)))
    assert jnp.allclose(y2, y_ref, atol=1e-2, rtol=1e-2), f"small tiles mismatch ({err2})"

    print("KERNEL_OK")
</pallas_src>

<mosaic_0001>
module attributes {stable_mosaic.version = 11 : i64} {
  func.func @mlp_kernel(%arg0: i32, %arg1: i32, %arg2: memref<208x128xf32, #tpu.memory_space<vmem>>, %arg3: memref<128x512xbf16, #tpu.memory_space<vmem>>, %arg4: memref<1x512xf32, #tpu.memory_space<vmem>>, %arg5: memref<512x128xbf16, #tpu.memory_space<vmem>>, %arg6: memref<1x128xf32, #tpu.memory_space<vmem>>, %arg7: memref<208x128xf32, #tpu.memory_space<vmem>>, %arg8: memref<208x128xf32, #tpu.memory_space<vmem>>) attributes {dimension_semantics = [#tpu.dimension_semantics<parallel>, #tpu.dimension_semantics<arbitrary>], iteration_bounds = array<i64: 2, 1>, scalar_prefetch = 0 : i64, scratch_operands = 1 : i64, tpu.core_type = #tpu.core_type<tc>, window_params = [{transform_indices = @transform_0, window_bounds = array<i64: 208, 128>}, {transform_indices = @transform_1, window_bounds = array<i64: 128, 512>}, {transform_indices = @transform_2, window_bounds = array<i64: 1, 512>}, {transform_indices = @transform_3, window_bounds = array<i64: 512, 128>}, {pipeline_mode = #tpu.pipeline_mode<synchronous>, transform_indices = @transform_4, window_bounds = array<i64: 1, 128>}, {transform_indices = @transform_5, window_bounds = array<i64: 208, 128>}]} {
    %c0_i32 = arith.constant 0 : i32
    %0 = arith.cmpi eq, %arg1, %c0_i32 : i32
    %1 = arith.extui %0 : i1 to i32
    %c0_i32_0 = arith.constant 0 : i32
    %2 = arith.cmpi ne, %1, %c0_i32_0 : i32
    scf.if %2 {
      %cst_18 = arith.constant 0.000000e+00 : f32
      %27 = vector.broadcast %cst_18 : f32 to vector<208x128xf32>
      %c0_19 = arith.constant 0 : index
      %c0_20 = arith.constant 0 : index
      %28 = vector.load %arg8[%c0_19, %c0_20] : memref<208x128xf32, #tpu.memory_space<vmem>>, vector<208x128xf32>
      tpu.vector_store %arg8[%c0_19, %c0_20], %27 {strides = array<i32>} : memref<208x128xf32, #tpu.memory_space<vmem>>, vector<208x128xf32>,
    } else {
    }
    %c0 = arith.constant 0 : index
    %c0_1 = arith.constant 0 : index
    %3 = vector.load %arg2[%c0, %c0_1] : memref<208x128xf32, #tpu.memory_space<vmem>>, vector<208x128xf32>
    %4 = arith.truncf %3 : vector<208x128xf32> to vector<208x128xbf16>
    %c0_2 = arith.constant 0 : index
    %c0_3 = arith.constant 0 : index
    %5 = vector.load %arg3[%c0_2, %c0_3] : memref<128x512xbf16, #tpu.memory_space<vmem>>, vector<128x512xbf16>
    %cst = arith.constant dense<0.000000e+00> : vector<208x512xf32>
    %6 = tpu.matmul %4, %5, %cst {dimension_numbers = #tpu.dot_dimension_numbers<[1], [0], [0], [1], [0, 0, 1, 1], [], []>} : vector<208x128xbf16>, vector<128x512xbf16>, vector<208x512xf32> -> vector<208x512xf32>
    %c0_4 = arith.constant 0 : index
    %c0_5 = arith.constant 0 : index
    %7 = vector.load %arg4[%c0_4, %c0_5] : memref<1x512xf32, #tpu.memory_space<vmem>>, vector<1x512xf32>
    %8 = vector.broadcast %7 : vector<1x512xf32> to vector<208x512xf32>
    %9 = arith.addf %6, %8 : vector<208x512xf32>
    %cst_6 = arith.constant 5.000000e-01 : f32
    %10 = vector.broadcast %cst_6 : f32 to vector<208x512xf32>
    %11 = arith.mulf %10, %9 : vector<208x512xf32>
    %cst_7 = arith.constant 0.707106769 : f32
    %12 = vector.broadcast %cst_7 : f32 to vector<208x512xf32>
    %13 = arith.mulf %9, %12 : vector<208x512xf32>
    %14 = math.erf %13 : vector<208x512xf32>
    %cst_8 = arith.constant 1.000000e+00 : f32
    %15 = vector.broadcast %cst_8 : f32 to vector<208x512xf32>
    %16 = arith.addf %15, %14 : vector<208x512xf32>
    %17 = arith.mulf %11, %16 : vector<208x512xf32>
    %c0_9 = arith.constant 0 : index
    %c0_10 = arith.constant 0 : index
    %18 = vector.load %arg8[%c0_9, %c0_10] : memref<208x128xf32, #tpu.memory_space<vmem>>, vector<208x128xf32>
    %19 = arith.truncf %17 : vector<208x512xf32> to vector<208x512xbf16>
    %c0_11 = arith.constant 0 : index
    %c0_12 = arith.constant 0 : index
    %20 = vector.load %arg5[%c0_11, %c0_12] : memref<512x128xbf16, #tpu.memory_space<vmem>>, vector<512x128xbf16>
    %cst_13 = arith.constant dense<0.000000e+00> : vector<208x128xf32>
    %21 = tpu.matmul %19, %20, %cst_13 {dimension_numbers = #tpu.dot_dimension_numbers<[1], [0], [0], [1], [0, 0, 1, 1], [], []>} : vector<208x512xbf16>, vector<512x128xbf16>, vector<208x128xf32> -> vector<208x128xf32>
    %22 = arith.addf %18, %21 : vector<208x128xf32>
    %c0_14 = arith.constant 0 : index
    %c0_15 = arith.constant 0 : index
    %23 = vector.load %arg8[%c0_14, %c0_15] : memref<208x128xf32, #tpu.memory_space<vmem>>, vector<208x128xf32>
    tpu.vector_store %arg8[%c0_14, %c0_15], %22 {strides = array<i32>} : memref<208x128xf32, #tpu.memory_space<vmem>>, vector<208x128xf32>,
    %c0_i32_16 = arith.constant 0 : i32
    %24 = arith.cmpi eq, %arg1, %c0_i32_16 : i32
    %25 = arith.extui %24 : i1 to i32
    %c0_i32_17 = arith.constant 0 : i32
    %26 = arith.cmpi ne, %25, %c0_i32_17 : i32
    scf.if %26 {
      %c0_18 = arith.constant 0 : index
      %c0_19 = arith.constant 0 : index
      %27 = vector.load %arg8[%c0_18, %c0_19] : memref<208x128xf32, #tpu.memory_space<vmem>>, vector<208x128xf32>
      %c0_20 = arith.constant 0 : index
      %c0_21 = arith.constant 0 : index
      %28 = vector.load %arg6[%c0_20, %c0_21] : memref<1x128xf32, #tpu.memory_space<vmem>>, vector<1x128xf32>
      %29 = vector.broadcast %28 : vector<1x128xf32> to vector<208x128xf32>
      %30 = arith.addf %27, %29 : vector<208x128xf32>
      %c0_22 = arith.constant 0 : index
      %c0_23 = arith.constant 0 : index
      %31 = vector.load %arg7[%c0_22, %c0_23] : memref<208x128xf32, #tpu.memory_space<vmem>>, vector<208x128xf32>
      tpu.vector_store %arg7[%c0_22, %c0_23], %30 {strides = array<i32>} : memref<208x128xf32, #tpu.memory_space<vmem>>, vector<208x128xf32>,
    } else {
    }
    return
  }
  func.func @transform_0(%arg0: i32, %arg1: i32) -> (i32, i32) {
    %c0_i32 = arith.constant 0 : i32
    %c0_i32_0 = arith.constant 0 : i32
    return %arg0, %c0_i32 : i32, i32
  }
  func.func @transform_1(%arg0: i32, %arg1: i32) -> (i32, i32) {
    %c0_i32 = arith.constant 0 : i32
    %c0_i32_0 = arith.constant 0 : i32
    return %c0_i32, %arg1 : i32, i32
  }
  func.func @transform_2(%arg0: i32, %arg1: i32) -> (i32, i32) {
    %c0_i32 = arith.constant 0 : i32
    %c0_i32_0 = arith.constant 0 : i32
    return %c0_i32, %arg1 : i32, i32
  }
  func.func @transform_3(%arg0: i32, %arg1: i32) -> (i32, i32) {
    %c0_i32 = arith.constant 0 : i32
    %c0_i32_0 = arith.constant 0 : i32
    return %arg1, %c0_i32 : i32, i32
  }
  func.func @transform_4(%arg0: i32, %arg1: i32) -> (i32, i32) {
    %c0_i32 = arith.constant 0 : i32
    %c0_i32_0 = arith.constant 0 : i32
    %c0_i32_1 = arith.constant 0 : i32
    return %c0_i32, %c0_i32_0 : i32, i32
  }
  func.func @transform_5(%arg0: i32, %arg1: i32) -> (i32, i32) {
    %c0_i32 = arith.constant 0 : i32
    %c0_i32_0 = arith.constant 0 : i32
    return %arg0, %c0_i32 : i32, i32
  }
}

</mosaic_0001>

<llo_original>
// kernel: tpu_custom_call.1
$region0: #{tpu_custom_call.1}
  #allocation0 [shape = 'u32[]', space=smem, size = 0x4, offset = 0x4, fixed_abs, tag = 'smem constant byte address 0x4 - core index']
  #allocation1 [shape = 'u32[72,128]{1,0:T(1,128)}', space=vmem, size = 0x9000, scoped, tag = 'internal scratch']
  #allocation2 [shape = 'f32[208,128]{1,0:T(8,128)}', space=vmem, size = 0x1a000, scoped, tag = 'scratch operand']
  %s0 = inlined_call_operand.hbm [shape: f32[416,128], index: 0, kind: input, shape index: {}]
  %s1 = inlined_call_operand.hbm [shape: bf16[128,512], index: 1, kind: input, shape index: {}]
  %s2 = inlined_call_operand.hbm [shape: f32[1,512], index: 2, kind: input, shape index: {}]
  %s3 = inlined_call_operand.hbm [shape: bf16[512,128], index: 3, kind: input, shape index: {}]
  %s4 = inlined_call_operand.vmem [shape: f32[1,128], index: 4, kind: input, shape index: {}]
  %s5 = inlined_call_operand.hbm [shape: f32[416,128], index: 5, kind: output, shape index: {}]
  %s6 = sld [smem:[#allocation0]]
  $region77: #{tpu_custom_call.1} parent=0
    _
  %s8 = ssub.s32 1, %s6
  %s9 = scalar_select 0, %s8, %s6
  $region1: #{tpu_custom_call.1} parent=0
    #allocation3 [shape = 'u8[212992]{0}', space=vmem, size = 0x34000, scoped, tag = 'input window, operand 0']
    #allocation4 [shape = 's32[2]{0}', space=sflag, size = 0x8, scoped, tag = 'scoped memory for tpu_custom_call.1']
    #allocation5 [shape = 's32[2]{0}', space=sflag, size = 0x8, scoped, tag = 'scoped memory for tpu_custom_call.1']
    #allocation6 [shape = 'u8[131072]{0}', space=vmem, size = 0x20000, scoped, tag = 'input window, operand 1, single buffered']
    #allocation7 [shape = 's32[1]{0}', space=sflag, size = 0x4, scoped, tag = 'scoped memory for tpu_custom_call.1']
    #allocation8 [shape = 'u8[2048]{0}', space=vmem, size = 0x800, scoped, tag = 'input window, operand 2, single buffered']
    #allocation9 [shape = 'u8[131072]{0}', space=vmem, size = 0x20000, scoped, tag = 'input window, operand 3, single buffered']
    #allocation10 [shape = 's32[1]{0}', space=sflag, size = 0x4, scoped, tag = 'scoped memory for tpu_custom_call.1']
    #allocation11 [shape = 'u8[212992]{0}', space=vmem, size = 0x34000, scoped, tag = 'output window, operand 0']
    %10 = vsyncpa [#allocation4], 0
    %s11 = scalar_lea.sflag [#allocation4], 1
    %12 = vsyncpa %s11, 0
    %13 = vsyncpa [#allocation7], 0
    %14 = vsyncpa [#allocation10], 0
    %15 = vsyncpa [#allocation5], 0
    %s16 = scalar_lea.sflag [#allocation5], 1
    %17 = vsyncpa %s16, 0
    loop: start=0, step=1, limit=4
    $region2: #{tpu_custom_call.1} parent=1 // loop_pre_header
      _
    $region3: #{tpu_custom_call.1} parent=1 // loop_header
      %s19 = sphi 0, %s23
      %p20 = scmp.ge.s32.totalorder %s19, 4
      %s26 = sphi 0, %s38
      %s27 = sphi 0, %s34
      %s28 = sphi 0, %s26
      %s29 = sphi 0, %s27
      %s30 = sphi 0, %s28
      %s31 = sphi 0, %s29
      %s41 = sphi 0, %s43
      %s44 = sphi 0, %s41
      %s45 = sphi 0, %s44
      %s61 = sphi 0, %s45
      %s67 = sphi 0, %s69
      %s70 = sphi 0, %s67
      %s71 = sphi 0, %s70
      %s87 = sphi 0, %s71
      %s93 = sphi 0, %s95
      %s96 = sphi 0, %s93
      %s97 = sphi 0, %s96
      %s113 = sphi 0, %s97
      %s119 = sphi 0, %s121
      %s122 = sphi 0, %s119
      %s123 = sphi 0, %s122
      %s139 = sphi 0, %s123
      %s143 = sphi 0, %s143
      %s145 = sphi 0, %s143
      %s146 = sphi 0, %s145
      %s160 = sphi 0, %s146
      %s166 = sphi 0, %s168
      %s169 = sphi 0, %s166
      %s170 = sphi 0, %s169
      %s186 = sphi 0, %s170
    $region4: #{tpu_custom_call.1} parent=1 // loop_header_branch
      %22 = sbr.rel (%p20) target = $region8
    $region5: #{tpu_custom_call.1} parent=1 // loop_body
      %s24 = ssub.s32 %s19, 1
      %s25 = ssub.s32 %s19, 2
      %s32 = sadd.s32 1, %s27
      %p33 = scmp.ge.s32.totalorder %s32, 1
      %s34 = scalar_select %p33, 0, %s32
      %s35 = sadd.s32 1, %s26
      %s36 = scalar_select %p33, %s35, %s26
      %p37 = scmp.ge.s32.totalorder %s36, 2
      %s38 = scalar_select %p37, 0, %s36
      %s39 = ssub.s32 %s26, %s38
      %p40 = scmp.eq.s32.totalorder %s39, 0
      %s42 = sadd.s32 %s41, 1
      %s43 = scalar_select %p40, %s41, %s42
      %p46 = pneg %p40
      %p47 = scmp.eq.s32.totalorder %s19, 1
      %p48 = por %p46, %p47
      %p49 = scmp.ne.s32.totalorder %s41, %s44
      %p50 = scmp.eq.s32.totalorder %s19, 0
      %p51 = por %p49, %p50
      %p52 = scmp.ne.s32.totalorder %s41, %s44
      %p53 = scmp.eq.s32.totalorder %s24, 1
      %p54 = por %p52, %p53
      %p55 = scmp.ne.s32.totalorder %s44, %s45
      %p56 = scmp.eq.s32.totalorder %s24, 0
      %p57 = por %p55, %p56
      %p58 = scmp.ne.s32.totalorder %s44, %s45
      %p59 = scmp.eq.s32.totalorder %s25, 1
      %p60 = por %p58, %p59
      %p62 = scmp.ne.s32.totalorder %s45, %s61
      %p63 = scmp.eq.s32.totalorder %s25, 0
      %p64 = por %p62, %p63
      %s65 = ssub.s32 %s27, %s34
      %p66 = scmp.eq.s32.totalorder %s65, 0
      %s68 = sadd.s32 %s67, 1
      %s69 = scalar_select %p66, %s67, %s68
      %p72 = pneg %p66
      %p73 = scmp.eq.s32.totalorder %s19, 1
      %p74 = por %p72, %p73
      %p75 = scmp.ne.s32.totalorder %s67, %s70
      %p76 = scmp.eq.s32.totalorder %s19, 0
      %p77 = por %p75, %p76
      %p78 = scmp.ne.s32.totalorder %s67, %s70
      %p79 = scmp.eq.s32.totalorder %s24, 1
      %p80 = por %p78, %p79
      %p81 = scmp.ne.s32.totalorder %s70, %s71
      %p82 = scmp.eq.s32.totalorder %s24, 0
      %p83 = por %p81, %p82
      %p84 = scmp.ne.s32.totalorder %s70, %s71
      %p85 = scmp.eq.s32.totalorder %s25, 1
      %p86 = por %p84, %p85
      %p88 = scmp.ne.s32.totalorder %s71, %s87
      %p89 = scmp.eq.s32.totalorder %s25, 0
      %p90 = por %p88, %p89
      %s91 = ssub.s32 %s27, %s34
      %p92 = scmp.eq.s32.totalorder %s91, 0
      %s94 = sadd.s32 %s93, 1
      %s95 = scalar_select %p92, %s93, %s94
      %p98 = pneg %p92
      %p99 = scmp.eq.s32.totalorder %s19, 1
      %p100 = por %p98, %p99
      %p101 = scmp.ne.s32.totalorder %s93, %s96
      %p102 = scmp.eq.s32.totalorder %s19, 0
      %p103 = por %p101, %p102
      %p104 = scmp.ne.s32.totalorder %s93, %s96
      %p105 = scmp.eq.s32.totalorder %s24, 1
      %p106 = por %p104, %p105
      %p107 = scmp.ne.s32.totalorder %s96, %s97
      %p108 = scmp.eq.s32.totalorder %s24, 0
      %p109 = por %p107, %p108
      %p110 = scmp.ne.s32.totalorder %s96, %s97
      %p111 = scmp.eq.s32.totalorder %s25, 1
      %p112 = por %p110, %p111
      %p114 = scmp.ne.s32.totalorder %s97, %s113
      %p115 = scmp.eq.s32.totalorder %s25, 0
      %p116 = por %p114, %p115
      %s117 = ssub.s32 %s27, %s34
      %p118 = scmp.eq.s32.totalorder %s117, 0
      %s120 = sadd.s32 %s119, 1
      %s121 = scalar_select %p118, %s119, %s120
      %p124 = pneg %p118
      %p125 = scmp.eq.s32.totalorder %s19, 1
      %p126 = por %p124, %p125
      %p127 = scmp.ne.s32.totalorder %s119, %s122
      %p128 = scmp.eq.s32.totalorder %s19, 0
      %p129 = por %p127, %p128
      %p130 = scmp.ne.s32.totalorder %s119, %s122
      %p131 = scmp.eq.s32.totalorder %s24, 1
      %p132 = por %p130, %p131
      %p133 = scmp.ne.s32.totalorder %s122, %s123
      %p134 = scmp.eq.s32.totalorder %s24, 0
      %p135 = por %p133, %p134
      %p136 = scmp.ne.s32.totalorder %s122, %s123
      %p137 = scmp.eq.s32.totalorder %s25, 1
      %p138 = por %p136, %p137
      %p140 = scmp.ne.s32.totalorder %s123, %s139
      %p141 = scmp.eq.s32.totalorder %s25, 0
      %p142 = por %p140, %p141
      %s144 = sadd.s32 %s143, 1
      %p147 = scmp.eq.s32.totalorder %s19, 1
      %p148 = scmp.ne.s32.totalorder %s143, %s145
      %p149 = scmp.eq.s32.totalorder %s19, 0
      %p150 = por %p148, %p149
      %p151 = scmp.ne.s32.totalorder %s143, %s145
      %p152 = scmp.eq.s32.totalorder %s24, 1
      %p153 = por %p151, %p152
      %p154 = scmp.ne.s32.totalorder %s145, %s146
      %p155 = scmp.eq.s32.totalorder %s24, 0
      %p156 = por %p154, %p155
      %p157 = scmp.ne.s32.totalorder %s145, %s146
      %p158 = scmp.eq.s32.totalorder %s25, 1
      %p159 = por %p157, %p158
      %p161 = scmp.ne.s32.totalorder %s146, %s160
      %p162 = scmp.eq.s32.totalorder %s25, 0
      %p163 = por %p161, %p162
      %s164 = ssub.s32 %s26, %s38
      %p165 = scmp.eq.s32.totalorder %s164, 0
      %s167 = sadd.s32 %s166, 1
      %s168 = scalar_select %p165, %s166, %s167
      %p171 = pneg %p165
      %p172 = scmp.eq.s32.totalorder %s19, 1
      %p173 = por %p171, %p172
      %p174 = scmp.ne.s32.totalorder %s166, %s169
      %p175 = scmp.eq.s32.totalorder %s19, 0
      %p176 = por %p174, %p175
      %p177 = scmp.ne.s32.totalorder %s166, %s169
      %p178 = scmp.eq.s32.totalorder %s24, 1
      %p179 = por %p177, %p178
      %p180 = scmp.ne.s32.totalorder %s169, %s170
      %p181 = scmp.eq.s32.totalorder %s24, 0
      %p182 = por %p180, %p181
      %p183 = scmp.ne.s32.totalorder %s169, %s170
      %p184 = scmp.eq.s32.totalorder %s25, 1
      %p185 = por %p183, %p184
      %p187 = scmp.ne.s32.totalorder %s170, %s186
      %p188 = scmp.eq.s32.totalorder %s25, 0
      %p189 = por %p187, %p188
      %p190 = scmp.le.s32.totalorder 1, %s19
      %p191 = scmp.lt.s32.totalorder %s19, 3
      %p192 = pnand %p190, %p191
      %p193 = pneg %p192
      // Predicated region
      $region9: #{tpu_custom_call.1} parent=5 // pred_check
        _
      $region10: #{tpu_custom_call.1} parent=5 // pred_check_branch
        %195 = sbr.rel (%p192) target = $region12
      $region11: #{tpu_custom_call.1} parent=5 // pred_region
        %s196 = ssub.s32 %s19, 1
        // Predicated region
        $region13: #{tpu_custom_call.1} parent=11 // pred_check
          %p197 = pneg %p83
        $region14: #{tpu_custom_call.1} parent=11 // pred_check_branch
          %199 = sbr.rel (%p197) target = $region16
        $region15: #{tpu_custom_call.1} parent=11 // pred_region
          %s200 = smul.u32 4, %s29
          %202 = vsyncadd [#allocation7], 0
          %s203 = smul.addr %s200, 4
          %s204 = scalar_lea.hbm %s1, %s203
          %s205 = sshll.u32 %s204, 4
          %s206 = int_to_ptr.hbm [resolvable:$true] %s205
          %s207 = sshll.u32 [#allocation6], 4
          %s208 = int_to_ptr.vmem [resolvable:$true] %s207
          %213 = dma.hbm_to_vmem [thread:$0]  %s206, 4096, %s208, [#allocation7], 256, 256, 16
        $region16: #{tpu_custom_call.1} parent=11 // pred_fallthru
          _
        // Predicated region
        $region17: #{tpu_custom_call.1} parent=11 // pred_check
          %p214 = pneg %p109
        $region18: #{tpu_custom_call.1} parent=11 // pred_check_branch
          %216 = sbr.rel (%p214) target = $region20
        $region19: #{tpu_custom_call.1} parent=11 // pred_region
          %s217 = smul.u32 4, %s29
          %219 = vsyncadd [#allocation7], 0
          %s220 = scalar_lea.hbm %s2, %s217
          %s222 = sshll.u32 %s220, 4
          %s223 = int_to_ptr.hbm [resolvable:$true] %s222
          %s224 = sshll.u32 [#allocation8], 4
          %s225 = int_to_ptr.vmem [resolvable:$true] %s224
          %227 = dma.hbm_to_vmem [thread:$0]  %s223, 64, %s225, [#allocation7]
        $region20: #{tpu_custom_call.1} parent=11 // pred_fallthru
          _
        // Predicated region
        $region21: #{tpu_custom_call.1} parent=11 // pred_check
          %p228 = pneg %p135
        $region22: #{tpu_custom_call.1} parent=11 // pred_check_branch
          %230 = sbr.rel (%p228) target = $region24
        $region23: #{tpu_custom_call.1} parent=11 // pred_region
          %s231 = smul.u32 64, %s29
          %233 = vsyncadd [#allocation10], 0
          %s234 = smul.addr %s231, 4
          %s235 = scalar_lea.hbm %s3, %s234
          %s236 = sshll.u32 %s235, 4
          %s237 = int_to_ptr.hbm [resolvable:$true] %s236
          %s238 = sshll.u32 [#allocation9], 4
          %s239 = int_to_ptr.vmem [resolvable:$true] %s238
          %244 = dma.hbm_to_vmem [thread:$0]  %s237, 4096, %s239, [#allocation10], 64, 64, 4
        $region24: #{tpu_custom_call.1} parent=11 // pred_fallthru
          _
        // Predicated region
        $region25: #{tpu_custom_call.1} parent=11 // pred_check
          %p245 = pneg %p156
        $region26: #{tpu_custom_call.1} parent=11 // pred_check_branch
          %247 = sbr.rel (%p245) target = $region28
        $region27: #{tpu_custom_call.1} parent=11 // pred_region
          _
        $region28: #{tpu_custom_call.1} parent=11 // pred_fallthru
          _
      $region12: #{tpu_custom_call.1} parent=5 // pred_fallthru
        _
      %p248 = scmp.lt.s32.totalorder %s19, 2
      // Predicated region
      $region29: #{tpu_custom_call.1} parent=5 // pred_check
        %p249 = pneg %p248
      $region30: #{tpu_custom_call.1} parent=5 // pred_check_branch
        %251 = sbr.rel (%p249) target = $region32
      $region31: #{tpu_custom_call.1} parent=5 // pred_region
        // Predicated region
        $region33: #{tpu_custom_call.1} parent=31 // pred_check
          %p252 = pneg %p51
        $region34: #{tpu_custom_call.1} parent=31 // pred_check_branch
          %254 = sbr.rel (%p252) target = $region36
        $region35: #{tpu_custom_call.1} parent=31 // pred_region
          %s255 = sand.u32 %s41, 1
          %s256 = scalar_lea.sflag [#allocation4], %s255
          %s257 = sand.u32 %s41, 1
          %s258 = smul.addr %s257, 208
          %s259 = scalar_lea.vmem [#allocation3], %s258
          %s260 = smul.u32 26, %s26
          %262 = vsyncadd %s256, 0
          %s263 = smul.addr %s260, 8
          %s264 = scalar_lea.hbm %s0, %s263
          %s265 = sshll.u32 %s264, 4
          %s266 = int_to_ptr.hbm [resolvable:$true] %s265
          %s267 = sshll.u32 %s259, 4
          %s268 = int_to_ptr.vmem [resolvable:$true] %s267
          %273 = dma.hbm_to_vmem [thread:$0]  %s266, 3328, %s268, %s256, 128, 128, 8
        $region36: #{tpu_custom_call.1} parent=31 // pred_fallthru
          _
      $region32: #{tpu_custom_call.1} parent=5 // pred_fallthru
        _
      %p274 = scmp.le.s32.totalorder 1, %s19
      %p275 = scmp.lt.s32.totalorder %s19, 3
      %p276 = pnand %p274, %p275
      %p277 = pneg %p276
      // Predicated region
      $region37: #{tpu_custom_call.1} parent=5 // pred_check
        _
      $region38: #{tpu_custom_call.1} parent=5 // pred_check_branch
        %279 = sbr.rel (%p276) target = $region40
      $region39: #{tpu_custom_call.1} parent=5 // pred_region
        %s280 = ssub.s32 %s19, 1
        %s281 = sand.u32 %s44, 1
        %s282 = scalar_lea.sflag [#allocation4], %s281
        %s283 = sand.u32 %s44, 1
        %s284 = smul.addr %s283, 208
        %s285 = scalar_lea.vmem [#allocation3], %s284
        // Predicated region
        $region41: #{tpu_custom_call.1} parent=39 // pred_check
          %p286 = pneg %p57
        $region42: #{tpu_custom_call.1} parent=39 // pred_check_branch
          %288 = sbr.rel (%p286) target = $region44
        $region43: #{tpu_custom_call.1} parent=39 // pred_region
          %290 = dma.done %s282, 3328
        $region44: #{tpu_custom_call.1} parent=39 // pred_fallthru
          _
        // Predicated region
        $region45: #{tpu_custom_call.1} parent=39 // pred_check
          %p291 = pneg %p83
        $region46: #{tpu_custom_call.1} parent=39 // pred_check_branch
          %293 = sbr.rel (%p291) target = $region48
        $region47: #{tpu_custom_call.1} parent=39 // pred_region
          %295 = dma.done [#allocation7], 4096
        $region48: #{tpu_custom_call.1} parent=39 // pred_fallthru
          _
        // Predicated region
        $region49: #{tpu_custom_call.1} parent=39 // pred_check
          %p296 = pneg %p109
        $region50: #{tpu_custom_call.1} parent=39 // pred_check_branch
          %298 = sbr.rel (%p296) target = $region52
        $region51: #{tpu_custom_call.1} parent=39 // pred_region
          %300 = dma.done [#allocation7], 64
        $region52: #{tpu_custom_call.1} parent=39 // pred_fallthru
          _
        // Predicated region
        $region53: #{tpu_custom_call.1} parent=39 // pred_check
          %p301 = pneg %p135
        $region54: #{tpu_custom_call.1} parent=39 // pred_check_branch
          %303 = sbr.rel (%p301) target = $region56
        $region55: #{tpu_custom_call.1} parent=39 // pred_region
          %305 = dma.done [#allocation10], 4096
        $region56: #{tpu_custom_call.1} parent=39 // pred_fallthru
          _
        %s306 = sand.u32 %s44, 1
        %s307 = scalar_lea.sflag [#allocation4], %s306
        %s308 = sand.u32 %s44, 1
        %s309 = smul.addr %s308, 208
        %s310 = scalar_lea.vmem [#allocation3], %s309
        %p311 = pneg %p57
        %p312 = pneg %p54
        %p313 = pneg %p83
        %p314 = pneg %p80
        %p315 = pneg %p109
        %p316 = pneg %p106
        %p317 = pneg %p135
        %p318 = pneg %p132
        %p319 = pneg %p156
        %p320 = pneg %p153
        %p321 = pneg %p182
        %p322 = pneg %p179
        %s323 = sand.u32 %s169, 1
        %s324 = scalar_lea.sflag [#allocation5], %s323
        %s325 = sand.u32 %s169, 1
        %s326 = smul.addr %s325, 208
        %s327 = scalar_lea.vmem [#allocation11], %s326
        %s328 = smul.u32 26, %s28
        %s329 = smul.u32 4, %s29
        %s330 = smul.u32 4, %s29
        %s331 = smul.u32 64, %s29
        %s332 = smul.u32 26, %s28
        %p333 = scmp.eq.s32.totalorder %s29, 0
        // Predicated region
        $region57: #{tpu_custom_call.1} parent=39 // pred_check
          %p334 = pneg %p333
        $region58: #{tpu_custom_call.1} parent=39 // pred_check_branch
          %336 = sbr.rel (%p334) target = $region60
        $region59: #{tpu_custom_call.1} parent=39 // pred_region
          %337 = vst [vmem:[#allocation2] sm:$0xff] 0.0
          %338 = vst [vmem:[#allocation2 + $0x8] sm:$0xff] 0.0
          %339 = vst [vmem:[#allocation2 + $0x10] sm:$0xff] 0.0
          %340 = vst [vmem:[#allocation2 + $0x18] sm:$0xff] 0.0
          %341 = vst [vmem:[#allocation2 + $0x20] sm:$0xff] 0.0
          %342 = vst [vmem:[#allocation2 + $0x28] sm:$0xff] 0.0
          %343 = vst [vmem:[#allocation2 + $0x30] sm:$0xff] 0.0
          %344 = vst [vmem:[#allocation2 + $0x38] sm:$0xff] 0.0
          %345 = vst [vmem:[#allocation2 + $0x40] sm:$0xff] 0.0
          %346 = vst [vmem:[#allocation2 + $0x48] sm:$0xff] 0.0
          %347 = vst [vmem:[#allocation2 + $0x50] sm:$0xff] 0.0
          %348 = vst [vmem:[#allocation2 + $0x58] sm:$0xff] 0.0
          %349 = vst [vmem:[#allocation2 + $0x60] sm:$0xff] 0.0
          %350 = vst [vmem:[#allocation2 + $0x68] sm:$0xff] 0.0
          %351 = vst [vmem:[#allocation2 + $0x70] sm:$0xff] 0.0
          %352 = vst [vmem:[#allocation2 + $0x78] sm:$0xff] 0.0
          %353 = vst [vmem:[#allocation2 + $0x80] sm:$0xff] 0.0
          %354 = vst [vmem:[#allocation2 + $0x88] sm:$0xff] 0.0
          %355 = vst [vmem:[#allocation2 + $0x90] sm:$0xff] 0.0
          %356 = vst [vmem:[#allocation2 + $0x98] sm:$0xff] 0.0
          %357 = vst [vmem:[#allocation2 + $0xa0] sm:$0xff] 0.0
          %358 = vst [vmem:[#allocation2 + $0xa8] sm:$0xff] 0.0
          %359 = vst [vmem:[#allocation2 + $0xb0] sm:$0xff] 0.0
          %360 = vst [vmem:[#allocation2 + $0xb8] sm:$0xff] 0.0
          %361 = vst [vmem:[#allocation2 + $0xc0] sm:$0xff] 0.0
          %362 = vst [vmem:[#allocation2 + $0xc8] sm:$0xff] 0.0
        $region60: #{tpu_custom_call.1} parent=39 // pred_fallthru
          _
        %v363 = vld [vmem:[%s285] sm:$0xff]
        %v364 = vld [vmem:[%s285 + $0x8] sm:$0xff]
        %v365 = vld [vmem:[%s285 + $0x10] sm:$0xff]
        %v366 = vld [vmem:[%s285 + $0x18] sm:$0xff]
        %v367 = vld [vmem:[%s285 + $0x20] sm:$0xff]
        %v368 = vld [vmem:[%s285 + $0x28] sm:$0xff]
        %v369 = vld [vmem:[%s285 + $0x30] sm:$0xff]
        %v370 = vld [vmem:[%s285 + $0x38] sm:$0xff]
        %v371 = vld [vmem:[%s285 + $0x40] sm:$0xff]
        %v372 = vld [vmem:[%s285 + $0x48] sm:$0xff]
        %v373 = vld [vmem:[%s285 + $0x50] sm:$0xff]
        %v374 = vld [vmem:[%s285 + $0x58] sm:$0xff]
        %v375 = vld [vmem:[%s285 + $0x60] sm:$0xff]
        %v376 = vld [vmem:[%s285 + $0x68] sm:$0xff]
        %v377 = vld [vmem:[%s285 + $0x70] sm:$0xff]
        %v378 = vld [vmem:[%s285 + $0x78] sm:$0xff]
        %v379 = vld [vmem:[%s285 + $0x80] sm:$0xff]
        %v380 = vld [vmem:[%s285 + $0x88] sm:$0xff]
        %v381 = vld [vmem:[%s285 + $0x90] sm:$0xff]
        %v382 = vld [vmem:[%s285 + $0x98] sm:$0xff]
        %v383 = vld [vmem:[%s285 + $0xa0] sm:$0xff]
        %v384 = vld [vmem:[%s285 + $0xa8] sm:$0xff]
        %v385 = vld [vmem:[%s285 + $0xb0] sm:$0xff]
        %v386 = vld [vmem:[%s285 + $0xb8] sm:$0xff]
        %v387 = vld [vmem:[%s285 + $0xc0] sm:$0xff]
        %v388 = vld [vmem:[%s285 + $0xc8] sm:$0xff]
        %v389 = vpack.c.bf16 %v364, %v363
        %v390 = vpack.c.bf16 %v366, %v365
        %v391 = vpack.c.bf16 %v368, %v367
        %v392 = vpack.c.bf16 %v370, %v369
        %v393 = vpack.c.bf16 %v372, %v371
        %v394 = vpack.c.bf16 %v374, %v373
        %v395 = vpack.c.bf16 %v376, %v375
        %v396 = vpack.c.bf16 %v378, %v377
        %v397 = vpack.c.bf16 %v380, %v379
        %v398 = vpack.c.bf16 %v382, %v381
        %v399 = vpack.c.bf16 %v384, %v383
        %v400 = vpack.c.bf16 %v386, %v385
        %v401 = vpack.c.bf16 %v388, %v387
        %v402 = vld [vmem:[#allocation6] sm:$0xff]
        %v403 = vld [vmem:[#allocation6 + $0x8] sm:$0xff]
        %v404 = vld [vmem:[#allocation6 + $0x10] sm:$0xff]
        %v405 = vld [vmem:[#allocation6 + $0x18] sm:$0xff]
        %v406 = vld [vmem:[#allocation6 + $0x20] sm:$0xff]
        %v407 = vld [vmem:[#allocation6 + $0x28] sm:$0xff]
        %v408 = vld [vmem:[#allocation6 + $0x30] sm:$0xff]
        %v409 = vld [vmem:[#allocation6 + $0x38] sm:$0xff]
        %v410 = vld [vmem:[#allocation6 + $0x40] sm:$0xff]
        %v411 = vld [vmem:[#allocation6 + $0x48] sm:$0xff]
        %v412 = vld [vmem:[#allocation6 + $0x50] sm:$0xff]
        %v413 = vld [vmem:[#allocation6 + $0x58] sm:$0xff]
        %v414 = vld [vmem:[#allocation6 + $0x60] sm:$0xff]
        %v415 = vld [vmem:[#allocation6 + $0x68] sm:$0xff]
        %v416 = vld [vmem:[#allocation6 + $0x70] sm:$0xff]
        %v417 = vld [vmem:[#allocation6 + $0x78] sm:$0xff]
        %v418 = vld [vmem:[#allocation6 + $0x80] sm:$0xff]
        %v419 = vld [vmem:[#allocation6 + $0x88] sm:$0xff]
        %v420 = vld [vmem:[#allocation6 + $0x90] sm:$0xff]
        %v421 = vld [vmem:[#allocation6 + $0x98] sm:$0xff]
        %v422 = vld [vmem:[#allocation6 + $0xa0] sm:$0xff]
        %v423 = vld [vmem:[#allocation6 + $0xa8] sm:$0xff]
        %v424 = vld [vmem:[#allocation6 + $0xb0] sm:$0xff]
        %v425 = vld [vmem:[#allocation6 + $0xb8] sm:$0xff]
        %v426 = vld [vmem:[#allocation6 + $0xc0] sm:$0xff]
        %v427 = vld [vmem:[#allocation6 + $0xc8] sm:$0xff]
        %v428 = vld [vmem:[#allocation6 + $0xd0] sm:$0xff]
        %v429 = vld [vmem:[#allocation6 + $0xd8] sm:$0xff]
        %v430 = vld [vmem:[#allocation6 + $0xe0] sm:$0xff]
        %v431 = vld [vmem:[#allocation6 + $0xe8] sm:$0xff]
        %v432 = vld [vmem:[#allocation6 + $0xf0] sm:$0xff]
        %v433 = vld [vmem:[#allocation6 + $0xf8] sm:$0xff]
        %v434 = vld [vmem:[#allocation8] sm:$0xf]
        %v436 = vperm.slane %v434, 0
        %v437 = vperm.slane %v434, 1
        %v438 = vperm.slane %v434, 2
        %v439 = vperm.slane %v434, 3
        %v476 = vunpack.c.l.b16 %v402
        %v477 = vunpack.c.h.b16 %v402
        %v478 = vunpack.c.l.b16 %v403
        %v479 = vunpack.c.h.b16 %v403
        %v480 = vunpack.c.l.b16 %v404
        %v481 = vunpack.c.h.b16 %v404
        %v482 = vunpack.c.l.b16 %v405
        %v483 = vunpack.c.h.b16 %v405
        %v484 = vunpack.c.l.b16 %v406
        %v485 = vunpack.c.h.b16 %v406
        %v486 = vunpack.c.l.b16 %v407
        %v487 = vunpack.c.h.b16 %v407
        %v488 = vunpack.c.l.b16 %v408
        %v489 = vunpack.c.h.b16 %v408
        %v490 = vunpack.c.l.b16 %v409
        %v491 = vunpack.c.h.b16 %v409
        %v492 = vunpack.c.l.b16 %v410
        %v493 = vunpack.c.h.b16 %v410
        %v494 = vunpack.c.l.b16 %v411
        %v495 = vunpack.c.h.b16 %v411
        %v496 = vunpack.c.l.b16 %v412
        %v497 = vunpack.c.h.b16 %v412
        %v498 = vunpack.c.l.b16 %v413
        %v499 = vunpack.c.h.b16 %v413
        %v500 = vunpack.c.l.b16 %v414
        %v501 = vunpack.c.h.b16 %v414
        %v502 = vunpack.c.l.b16 %v415
        %v503 = vunpack.c.h.b16 %v415
        %v504 = vunpack.c.l.b16 %v416
        %v505 = vunpack.c.h.b16 %v416
        %v506 = vunpack.c.l.b16 %v417
        %v507 = vunpack.c.h.b16 %v417
        %v508 = vunpack.c.l.b16 %v418
        %v509 = vunpack.c.h.b16 %v418
        %v510 = vunpack.c.l.b16 %v419
        %v511 = vunpack.c.h.b16 %v419
        %v512 = vunpack.c.l.b16 %v420
        %v513 = vunpack.c.h.b16 %v420
        %v514 = vunpack.c.l.b16 %v421
        %v515 = vunpack.c.h.b16 %v421
        %v516 = vunpack.c.l.b16 %v422
        %v517 = vunpack.c.h.b16 %v422
        %v518 = vunpack.c.l.b16 %v423
        %v519 = vunpack.c.h.b16 %v423
        %v520 = vunpack.c.l.b16 %v424
        %v521 = vunpack.c.h.b16 %v424
        %v522 = vunpack.c.l.b16 %v425
        %v523 = vunpack.c.h.b16 %v425
        %v524 = vunpack.c.l.b16 %v426
        %v525 = vunpack.c.h.b16 %v426
        %v526 = vunpack.c.l.b16 %v427
        %v527 = vunpack.c.h.b16 %v427
        %v528 = vunpack.c.l.b16 %v428
        %v529 = vunpack.c.h.b16 %v428
        %v530 = vunpack.c.l.b16 %v429
        %v531 = vunpack.c.h.b16 %v429
        %v532 = vunpack.c.l.b16 %v430
        %v533 = vunpack.c.h.b16 %v430
        %v534 = vunpack.c.l.b16 %v431
        %v535 = vunpack.c.h.b16 %v431
        %v536 = vunpack.c.l.b16 %v432
        %v537 = vunpack.c.h.b16 %v432
        %v538 = vunpack.c.l.b16 %v433
        %v539 = vunpack.c.h.b16 %v433
        %v540 = vpack.c.b16 %v480, %v476
        %v541 = vpack.c.b16 %v481, %v477
        %v542 = vpack.c.b16 %v482, %v478
        %v543 = vpack.c.b16 %v483, %v479
        %v544 = vpack.c.b16 %v488, %v484
        %v545 = vpack.c.b16 %v489, %v485
        %v546 = vpack.c.b16 %v490, %v486
        %v547 = vpack.c.b16 %v491, %v487
        %v548 = vpack.c.b16 %v496, %v492
        %v549 = vpack.c.b16 %v497, %v493
        %v550 = vpack.c.b16 %v498, %v494
        %v551 = vpack.c.b16 %v499, %v495
        %v552 = vpack.c.b16 %v504, %v500
        %v553 = vpack.c.b16 %v505, %v501
        %v554 = vpack.c.b16 %v506, %v502
        %v555 = vpack.c.b16 %v507, %v503
        %v556 = vpack.c.b16 %v512, %v508
        %v557 = vpack.c.b16 %v513, %v509
        %v558 = vpack.c.b16 %v514, %v510
        %v559 = vpack.c.b16 %v515, %v511
        %v560 = vpack.c.b16 %v520, %v516
        %v561 = vpack.c.b16 %v521, %v517
        %v562 = vpack.c.b16 %v522, %v518
        %v563 = vpack.c.b16 %v523, %v519
        %v564 = vpack.c.b16 %v528, %v524
        %v565 = vpack.c.b16 %v529, %v525
        %v566 = vpack.c.b16 %v530, %v526
        %v567 = vpack.c.b16 %v531, %v527
        %v568 = vpack.c.b16 %v536, %v532
        %v569 = vpack.c.b16 %v537, %v533
        %v570 = vpack.c.b16 %v538, %v534
        %v571 = vpack.c.b16 %v539, %v535
        %604 = vmatpush.bf16.msra.mxu0 %v568
        %605 = vmatpush.bf16.msra.mxu0 %v564
        %606 = vmatpush.bf16.msra.mxu0 %v560
        %607 = vmatpush.bf16.msra.mxu0 %v556
        %608 = vmatpush.bf16.msra.mxu0 %v552
        %609 = vmatpush.bf16.msra.mxu0 %v548
        %610 = vmatpush.bf16.msra.mxu0 %v544
        %611 = vmatpush.bf16.msra.mxu0 %v540
        %612 = vmatmul.bf16.gmra.mxu0 %v389
        %v613 = vpop.f32.mrf.mxu0
        %v614 = vadd.f32 %v436, %v613
        %v615 = vpop.f32.mrf.mxu0
        %v616 = vadd.f32 %v436, %v615
        %617 = vmatmul.bf16.gmra.mxu0 %v390
        %v618 = vpop.f32.mrf.mxu0
        %v619 = vadd.f32 %v436, %v618
        %v620 = vpop.f32.mrf.mxu0
        %v621 = vadd.f32 %v436, %v620
        %622 = vmatmul.bf16.gmra.mxu0 %v391
        %v623 = vpop.f32.mrf.mxu0
        %v624 = vadd.f32 %v436, %v623
        %v625 = vpop.f32.mrf.mxu0
        %v626 = vadd.f32 %v436, %v625
        %627 = vmatmul.bf16.gmra.mxu0 %v392
        %v628 = vpop.f32.mrf.mxu0
        %v629 = vadd.f32 %v436, %v628
        %v630 = vpop.f32.mrf.mxu0
        %v631 = vadd.f32 %v436, %v630
        %632 = vmatmul.bf16.gmra.mxu0 %v393
        %v633 = vpop.f32.mrf.mxu0
        %v634 = vadd.f32 %v436, %v633
        %v635 = vpop.f32.mrf.mxu0
        %v636 = vadd.f32 %v436, %v635
        %637 = vmatmul.bf16.gmra.mxu0 %v394
        %v638 = vpop.f32.mrf.mxu0
        %v639 = vadd.f32 %v436, %v638
        %v640 = vpop.f32.mrf.mxu0
        %v641 = vadd.f32 %v436, %v640
        %642 = vmatmul.bf16.gmra.mxu0 %v395
        %v643 = vpop.f32.mrf.mxu0
        %v644 = vadd.f32 %v436, %v643
        %v645 = vpop.f32.mrf.mxu0
        %v646 = vadd.f32 %v436, %v645
        %647 = vmatmul.bf16.gmra.mxu0 %v396
        %v648 = vpop.f32.mrf.mxu0
        %v649 = vadd.f32 %v436, %v648
        %v650 = vpop.f32.mrf.mxu0
        %v651 = vadd.f32 %v436, %v650
        %652 = vmatmul.bf16.gmra.mxu0 %v397
        %v653 = vpop.f32.mrf.mxu0
        %v654 = vadd.f32 %v436, %v653
        %v655 = vpop.f32.mrf.mxu0
        %v656 = vadd.f32 %v436, %v655
        %657 = vmatmul.bf16.gmra.mxu0 %v398
        %v658 = vpop.f32.mrf.mxu0
        %v659 = vadd.f32 %v436, %v658
        %v660 = vpop.f32.mrf.mxu0
        %v661 = vadd.f32 %v436, %v660
        %662 = vmatmul.bf16.gmra.mxu0 %v399
        %v663 = vpop.f32.mrf.mxu0
        %v664 = vadd.f32 %v436, %v663
        %v665 = vpop.f32.mrf.mxu0
        %v666 = vadd.f32 %v436, %v665
        %667 = vmatmul.bf16.gmra.mxu0 %v400
        %v668 = vpop.f32.mrf.mxu0
        %v669 = vadd.f32 %v436, %v668
        %v670 = vpop.f32.mrf.mxu0
        %v671 = vadd.f32 %v436, %v670
        %672 = vmatmul.bf16.gmra.mxu0 %v401
        %v673 = vpop.f32.mrf.mxu0
        %v674 = vadd.f32 %v436, %v673
        %v675 = vpop.f32.mrf.mxu0
        %v676 = vadd.f32 %v436, %v675
        %677 = vdwg.mxu0
        %678 = vmatpush.bf16.msra.mxu0 %v569
        %679 = vmatpush.bf16.msra.mxu0 %v565
        %680 = vmatpush.bf16.msra.mxu0 %v561
        %681 = vmatpush.bf16.msra.mxu0 %v557
        %682 = vmatpush.bf16.msra.mxu0 %v553
        %683 = vmatpush.bf16.msra.mxu0 %v549
        %684 = vmatpush.bf16.msra.mxu0 %v545
        %685 = vmatpush.bf16.msra.mxu0 %v541
        %686 = vmatmul.bf16.gmra.mxu0 %v389
        %v687 = vpop.f32.mrf.mxu0
        %v688 = vadd.f32 %v437, %v687
        %v689 = vpop.f32.mrf.mxu0
        %v690 = vadd.f32 %v437, %v689
        %691 = vmatmul.bf16.gmra.mxu0 %v390
        %v692 = vpop.f32.mrf.mxu0
        %v693 = vadd.f32 %v437, %v692
        %v694 = vpop.f32.mrf.mxu0
        %v695 = vadd.f32 %v437, %v694
        %696 = vmatmul.bf16.gmra.mxu0 %v391
        %v697 = vpop.f32.mrf.mxu0
        %v698 = vadd.f32 %v437, %v697
        %v699 = vpop.f32.mrf.mxu0
        %v700 = vadd.f32 %v437, %v699
        %701 = vmatmul.bf16.gmra.mxu0 %v392
        %v702 = vpop.f32.mrf.mxu0
        %v703 = vadd.f32 %v437, %v702
        %v704 = vpop.f32.mrf.mxu0
        %v705 = vadd.f32 %v437, %v704
        %706 = vmatmul.bf16.gmra.mxu0 %v393
        %v707 = vpop.f32.mrf.mxu0
        %v708 = vadd.f32 %v437, %v707
        %v709 = vpop.f32.mrf.mxu0
        %v710 = vadd.f32 %v437, %v709
        %711 = vmatmul.bf16.gmra.mxu0 %v394
        %v712 = vpop.f32.mrf.mxu0
        %v713 = vadd.f32 %v437, %v712
        %v714 = vpop.f32.mrf.mxu0
        %v715 = vadd.f32 %v437, %v714
        %716 = vmatmul.bf16.gmra.mxu0 %v395
        %v717 = vpop.f32.mrf.mxu0
        %v718 = vadd.f32 %v437, %v717
        %v719 = vpop.f32.mrf.mxu0
        %v720 = vadd.f32 %v437, %v719
        %721 = vmatmul.bf16.gmra.mxu0 %v396
        %v722 = vpop.f32.mrf.mxu0
        %v723 = vadd.f32 %v437, %v722
        %v724 = vpop.f32.mrf.mxu0
        %v725 = vadd.f32 %v437, %v724
        %726 = vmatmul.bf16.gmra.mxu0 %v397
        %v727 = vpop.f32.mrf.mxu0
        %v728 = vadd.f32 %v437, %v727
        %v729 = vpop.f32.mrf.mxu0
        %v730 = vadd.f32 %v437, %v729
        %731 = vmatmul.bf16.gmra.mxu0 %v398
        %v732 = vpop.f32.mrf.mxu0
        %v733 = vadd.f32 %v437, %v732
        %v734 = vpop.f32.mrf.mxu0
        %v735 = vadd.f32 %v437, %v734
        %736 = vmatmul.bf16.gmra.mxu0 %v399
        %v737 = vpop.f32.mrf.mxu0
        %v738 = vadd.f32 %v437, %v737
        %v739 = vpop.f32.mrf.mxu0
        %v740 = vadd.f32 %v437, %v739
        %741 = vmatmul.bf16.gmra.mxu0 %v400
        %v742 = vpop.f32.mrf.mxu0
        %v743 = vadd.f32 %v437, %v742
        %v744 = vpop.f32.mrf.mxu0
        %v745 = vadd.f32 %v437, %v744
        %746 = vmatmul.bf16.gmra.mxu0 %v401
        %v747 = vpop.f32.mrf.mxu0
        %v748 = vadd.f32 %v437, %v747
        %v749 = vpop.f32.mrf.mxu0
        %v750 = vadd.f32 %v437, %v749
        %751 = vdwg.mxu0
        %752 = vmatpush.bf16.msra.mxu0 %v570
        %753 = vmatpush.bf16.msra.mxu0 %v566
        %754 = vmatpush.bf16.msra.mxu0 %v562
        %755 = vmatpush.bf16.msra.mxu0 %v558
        %756 = vmatpush.bf16.msra.mxu0 %v554
        %757 = vmatpush.bf16.msra.mxu0 %v550
        %758 = vmatpush.bf16.msra.mxu0 %v546
        %759 = vmatpush.bf16.msra.mxu0 %v542
        %760 = vmatmul.bf16.gmra.mxu0 %v389
        %v761 = vpop.f32.mrf.mxu0
        %v762 = vadd.f32 %v438, %v761
        %v763 = vpop.f32.mrf.mxu0
        %v764 = vadd.f32 %v438, %v763
        %765 = vmatmul.bf16.gmra.mxu0 %v390
        %v766 = vpop.f32.mrf.mxu0
        %v767 = vadd.f32 %v438, %v766
        %v768 = vpop.f32.mrf.mxu0
        %v769 = vadd.f32 %v438, %v768
        %770 = vmatmul.bf16.gmra.mxu0 %v391
        %v771 = vpop.f32.mrf.mxu0
        %v772 = vadd.f32 %v438, %v771
        %v773 = vpop.f32.mrf.mxu0
        %v774 = vadd.f32 %v438, %v773
        %775 = vmatmul.bf16.gmra.mxu0 %v392
        %v776 = vpop.f32.mrf.mxu0
        %v777 = vadd.f32 %v438, %v776
        %v778 = vpop.f32.mrf.mxu0
        %v779 = vadd.f32 %v438, %v778
        %780 = vmatmul.bf16.gmra.mxu0 %v393
        %v781 = vpop.f32.mrf.mxu0
        %v782 = vadd.f32 %v438, %v781
        %v783 = vpop.f32.mrf.mxu0
        %v784 = vadd.f32 %v438, %v783
        %785 = vmatmul.bf16.gmra.mxu0 %v394
        %v786 = vpop.f32.mrf.mxu0
        %v787 = vadd.f32 %v438, %v786
        %v788 = vpop.f32.mrf.mxu0
        %v789 = vadd.f32 %v438, %v788
        %790 = vmatmul.bf16.gmra.mxu0 %v395
        %v791 = vpop.f32.mrf.mxu0
        %v792 = vadd.f32 %v438, %v791
        %v793 = vpop.f32.mrf.mxu0
        %v794 = vadd.f32 %v438, %v793
        %795 = vmatmul.bf16.gmra.mxu0 %v396
        %v796 = vpop.f32.mrf.mxu0
        %v797 = vadd.f32 %v438, %v796
        %v798 = vpop.f32.mrf.mxu0
        %v799 = vadd.f32 %v438, %v798
        %800 = vmatmul.bf16.gmra.mxu0 %v397
        %v801 = vpop.f32.mrf.mxu0
        %v802 = vadd.f32 %v438, %v801
        %v803 = vpop.f32.mrf.mxu0
        %v804 = vadd.f32 %v438, %v803
        %805 = vmatmul.bf16.gmra.mxu0 %v398
        %v806 = vpop.f32.mrf.mxu0
        %v807 = vadd.f32 %v438, %v806
        %v808 = vpop.f32.mrf.mxu0
        %v809 = vadd.f32 %v438, %v808
        %810 = vmatmul.bf16.gmra.mxu0 %v399
        %v811 = vpop.f32.mrf.mxu0
        %v812 = vadd.f32 %v438, %v811
        %v813 = vpop.f32.mrf.mxu0
        %v814 = vadd.f32 %v438, %v813
        %815 = vmatmul.bf16.gmra.mxu0 %v400
        %v816 = vpop.f32.mrf.mxu0
        %v817 = vadd.f32 %v438, %v816
        %v818 = vpop.f32.mrf.mxu0
        %v819 = vadd.f32 %v438, %v818
        %820 = vmatmul.bf16.gmra.mxu0 %v401
        %v821 = vpop.f32.mrf.mxu0
        %v822 = vadd.f32 %v438, %v821
        %v823 = vpop.f32.mrf.mxu0
        %v824 = vadd.f32 %v438, %v823
        %825 = vdwg.mxu0
        %826 = vmatpush.bf16.msra.mxu0 %v571
        %827 = vmatpush.bf16.msra.mxu0 %v567
        %828 = vmatpush.bf16.msra.mxu0 %v563
        %829 = vmatpush.bf16.msra.mxu0 %v559
        %830 = vmatpush.bf16.msra.mxu0 %v555
        %831 = vmatpush.bf16.msra.mxu0 %v551
        %832 = vmatpush.bf16.msra.mxu0 %v547
        %833 = vmatpush.bf16.msra.mxu0 %v543
        %834 = vmatmul.bf16.gmra.mxu0 %v389
        %v835 = vpop.f32.mrf.mxu0
        %v836 = vadd.f32 %v439, %v835
        %v837 = vpop.f32.mrf.mxu0
        %v838 = vadd.f32 %v439, %v837
        %839 = vmatmul.bf16.gmra.mxu0 %v390
        %v840 = vpop.f32.mrf.mxu0
        %v841 = vadd.f32 %v439, %v840
        %v842 = vpop.f32.mrf.mxu0
        %v843 = vadd.f32 %v439, %v842
        %844 = vmatmul.bf16.gmra.mxu0 %v391
        %v845 = vpop.f32.mrf.mxu0
        %v846 = vadd.f32 %v439, %v845
        %v847 = vpop.f32.mrf.mxu0
        %v848 = vadd.f32 %v439, %v847
        %849 = vmatmul.bf16.gmra.mxu0 %v392
        %v850 = vpop.f32.mrf.mxu0
        %v851 = vadd.f32 %v439, %v850
        %v852 = vpop.f32.mrf.mxu0
        %v853 = vadd.f32 %v439, %v852
        %854 = vmatmul.bf16.gmra.mxu0 %v393
        %v855 = vpop.f32.mrf.mxu0
        %v856 = vadd.f32 %v439, %v855
        %v857 = vpop.f32.mrf.mxu0
        %v858 = vadd.f32 %v439, %v857
        %859 = vmatmul.bf16.gmra.mxu0 %v394
        %v860 = vpop.f32.mrf.mxu0
        %v861 = vadd.f32 %v439, %v860
        %v862 = vpop.f32.mrf.mxu0
        %v863 = vadd.f32 %v439, %v862
        %864 = vmatmul.bf16.gmra.mxu0 %v395
        %v865 = vpop.f32.mrf.mxu0
        %v866 = vadd.f32 %v439, %v865
        %v867 = vpop.f32.mrf.mxu0
        %v868 = vadd.f32 %v439, %v867
        %869 = vmatmul.bf16.gmra.mxu0 %v396
        %v870 = vpop.f32.mrf.mxu0
        %v871 = vadd.f32 %v439, %v870
        %v872 = vpop.f32.mrf.mxu0
        %v873 = vadd.f32 %v439, %v872
        %874 = vmatmul.bf16.gmra.mxu0 %v397
        %v875 = vpop.f32.mrf.mxu0
        %v876 = vadd.f32 %v439, %v875
        %v877 = vpop.f32.mrf.mxu0
        %v878 = vadd.f32 %v439, %v877
        %879 = vmatmul.bf16.gmra.mxu0 %v398
        %v880 = vpop.f32.mrf.mxu0
        %v881 = vadd.f32 %v439, %v880
        %v882 = vpop.f32.mrf.mxu0
        %v883 = vadd.f32 %v439, %v882
        %884 = vmatmul.bf16.gmra.mxu0 %v399
        %v885 = vpop.f32.mrf.mxu0
        %v886 = vadd.f32 %v439, %v885
        %v887 = vpop.f32.mrf.mxu0
        %v888 = vadd.f32 %v439, %v887
        %889 = vmatmul.bf16.gmra.mxu0 %v400
        %v890 = vpop.f32.mrf.mxu0
        %v891 = vadd.f32 %v439, %v890
        %v892 = vpop.f32.mrf.mxu0
        %v893 = vadd.f32 %v439, %v892
        %894 = vmatmul.bf16.gmra.mxu0 %v401
        %v895 = vpop.f32.mrf.mxu0
        %v896 = vadd.f32 %v439, %v895
        %v897 = vpop.f32.mrf.mxu0
        %v898 = vadd.f32 %v439, %v897
        %899 = vdwg.mxu0
        %v900 = vmul.f32 %v614, 0.5
        %v901 = vmul.f32 %v688, 0.5
        %v902 = vmul.f32 %v762, 0.5
        %v903 = vmul.f32 %v836, 0.5
        %v904 = vmul.f32 %v616, 0.5
        %v905 = vmul.f32 %v690, 0.5
        %v906 = vmul.f32 %v764, 0.5
        %v907 = vmul.f32 %v838, 0.5
        %v908 = vmul.f32 %v619, 0.5
        %v909 = vmul.f32 %v693, 0.5
        %v910 = vmul.f32 %v767, 0.5
        %v911 = vmul.f32 %v841, 0.5
        %v912 = vmul.f32 %v621, 0.5
        %v913 = vmul.f32 %v695, 0.5
        %v914 = vmul.f32 %v769, 0.5
        %v915 = vmul.f32 %v843, 0.5
        %v916 = vmul.f32 %v624, 0.5
        %v917 = vmul.f32 %v698, 0.5
        %v918 = vmul.f32 %v772, 0.5
        %v919 = vmul.f32 %v846, 0.5
        %v920 = vmul.f32 %v626, 0.5
        %v921 = vmul.f32 %v700, 0.5
        %v922 = vmul.f32 %v774, 0.5
        %v923 = vmul.f32 %v848, 0.5
        %v924 = vmul.f32 %v629, 0.5
        %v925 = vmul.f32 %v703, 0.5
        %v926 = vmul.f32 %v777, 0.5
        %v927 = vmul.f32 %v851, 0.5
        %v928 = vmul.f32 %v631, 0.5
        %v929 = vmul.f32 %v705, 0.5
        %v930 = vmul.f32 %v779, 0.5
        %v931 = vmul.f32 %v853, 0.5
        %v932 = vmul.f32 %v634, 0.5
        %v933 = vmul.f32 %v708, 0.5
        %v934 = vmul.f32 %v782, 0.5
        %v935 = vmul.f32 %v856, 0.5
        %v936 = vmul.f32 %v636, 0.5
        %v937 = vmul.f32 %v710, 0.5
        %v938 = vmul.f32 %v784, 0.5
        %v939 = vmul.f32 %v858, 0.5
        %v940 = vmul.f32 %v639, 0.5
        %v941 = vmul.f32 %v713, 0.5
        %v942 = vmul.f32 %v787, 0.5
        %v943 = vmul.f32 %v861, 0.5
        %v944 = vmul.f32 %v641, 0.5
        %v945 = vmul.f32 %v715, 0.5
        %v946 = vmul.f32 %v789, 0.5
        %v947 = vmul.f32 %v863, 0.5
        %v948 = vmul.f32 %v644, 0.5
        %v949 = vmul.f32 %v718, 0.5
        %v950 = vmul.f32 %v792, 0.5
        %v951 = vmul.f32 %v866, 0.5
        %v952 = vmul.f32 %v646, 0.5
        %v953 = vmul.f32 %v720, 0.5
        %v954 = vmul.f32 %v794, 0.5
        %v955 = vmul.f32 %v868, 0.5
        %v956 = vmul.f32 %v649, 0.5
        %v957 = vmul.f32 %v723, 0.5
        %v958 = vmul.f32 %v797, 0.5
        %v959 = vmul.f32 %v871, 0.5
        %v960 = vmul.f32 %v651, 0.5
        %v961 = vmul.f32 %v725, 0.5
        %v962 = vmul.f32 %v799, 0.5
        %v963 = vmul.f32 %v873, 0.5
        %v964 = vmul.f32 %v654, 0.5
        %v965 = vmul.f32 %v728, 0.5
        %v966 = vmul.f32 %v802, 0.5
        %v967 = vmul.f32 %v876, 0.5
        %v968 = vmul.f32 %v656, 0.5
        %v969 = vmul.f32 %v730, 0.5
        %v970 = vmul.f32 %v804, 0.5
        %v971 = vmul.f32 %v878, 0.5
        %v972 = vmul.f32 %v659, 0.5
        %v973 = vmul.f32 %v733, 0.5
        %v974 = vmul.f32 %v807, 0.5
        %v975 = vmul.f32 %v881, 0.5
        %v976 = vmul.f32 %v661, 0.5
        %v977 = vmul.f32 %v735, 0.5
        %v978 = vmul.f32 %v809, 0.5
        %v979 = vmul.f32 %v883, 0.5
        %v980 = vmul.f32 %v664, 0.5
        %v981 = vmul.f32 %v738, 0.5
        %v982 = vmul.f32 %v812, 0.5
        %v983 = vmul.f32 %v886, 0.5
        %v984 = vmul.f32 %v666, 0.5
        %v985 = vmul.f32 %v740, 0.5
        %v986 = vmul.f32 %v814, 0.5
        %v987 = vmul.f32 %v888, 0.5
        %v988 = vmul.f32 %v669, 0.5
        %v989 = vmul.f32 %v743, 0.5
        %v990 = vmul.f32 %v817, 0.5
        %v991 = vmul.f32 %v891, 0.5
        %v992 = vmul.f32 %v671, 0.5
        %v993 = vmul.f32 %v745, 0.5
        %v994 = vmul.f32 %v819, 0.5
        %v995 = vmul.f32 %v893, 0.5
        %v996 = vmul.f32 %v674, 0.5
        %v997 = vmul.f32 %v748, 0.5
        %v998 = vmul.f32 %v822, 0.5
        %v999 = vmul.f32 %v896, 0.5
        %v1000 = vmul.f32 %v676, 0.5
        %v1001 = vmul.f32 %v750, 0.5
        %v1002 = vmul.f32 %v824, 0.5
        %v1003 = vmul.f32 %v898, 0.5
        %v1004 = vmul.f32 %v614, 0.70710677
        %v1005 = vmul.f32 %v688, 0.70710677
        %v1006 = vmul.f32 %v762, 0.70710677
        %v1007 = vmul.f32 %v836, 0.70710677
        %v1008 = vmul.f32 %v616, 0.70710677
        %v1009 = vmul.f32 %v690, 0.70710677
        %v1010 = vmul.f32 %v764, 0.70710677
        %v1011 = vmul.f32 %v838, 0.70710677
        %v1012 = vmul.f32 %v619, 0.70710677
        %v1013 = vmul.f32 %v693, 0.70710677
        %v1014 = vmul.f32 %v767, 0.70710677
        %v1015 = vmul.f32 %v841, 0.70710677
        %v1016 = vmul.f32 %v621, 0.70710677
        %v1017 = vmul.f32 %v695, 0.70710677
        %v1018 = vmul.f32 %v769, 0.70710677
        %v1019 = vmul.f32 %v843, 0.70710677
        %v1020 = vmul.f32 %v624, 0.70710677
        %v1021 = vmul.f32 %v698, 0.70710677
        %v1022 = vmul.f32 %v772, 0.70710677
        %v1023 = vmul.f32 %v846, 0.70710677
        %v1024 = vmul.f32 %v626, 0.70710677
        %v1025 = vmul.f32 %v700, 0.70710677
        %v1026 = vmul.f32 %v774, 0.70710677
        %v1027 = vmul.f32 %v848, 0.70710677
        %v1028 = vmul.f32 %v629, 0.70710677
        %v1029 = vmul.f32 %v703, 0.70710677
        %v1030 = vmul.f32 %v777, 0.70710677
        %v1031 = vmul.f32 %v851, 0.70710677
        %v1032 = vmul.f32 %v631, 0.70710677
        %v1033 = vmul.f32 %v705, 0.70710677
        %v1034 = vmul.f32 %v779, 0.70710677
        %v1035 = vmul.f32 %v853, 0.70710677
        %v1036 = vmul.f32 %v634, 0.70710677
        %v1037 = vmul.f32 %v708, 0.70710677
        %v1038 = vmul.f32 %v782, 0.70710677
        %v1039 = vmul.f32 %v856, 0.70710677
        %v1040 = vmul.f32 %v636, 0.70710677
        %v1041 = vmul.f32 %v710, 0.70710677
        %v1042 = vmul.f32 %v784, 0.70710677
        %v1043 = vmul.f32 %v858, 0.70710677
        %v1044 = vmul.f32 %v639, 0.70710677
        %v1045 = vmul.f32 %v713, 0.70710677
        %v1046 = vmul.f32 %v787, 0.70710677
        %v1047 = vmul.f32 %v861, 0.70710677
        %v1048 = vmul.f32 %v641, 0.70710677
        %v1049 = vmul.f32 %v715, 0.70710677
        %v1050 = vmul.f32 %v789, 0.70710677
        %v1051 = vmul.f32 %v863, 0.70710677
        %v1052 = vmul.f32 %v644, 0.70710677
        %v1053 = vmul.f32 %v718, 0.70710677
        %v1054 = vmul.f32 %v792, 0.70710677
        %v1055 = vmul.f32 %v866, 0.70710677
        %v1056 = vmul.f32 %v646, 0.70710677
        %v1057 = vmul.f32 %v720, 0.70710677
        %v1058 = vmul.f32 %v794, 0.70710677
        %v1059 = vmul.f32 %v868, 0.70710677
        %v1060 = vmul.f32 %v649, 0.70710677
        %v1061 = vmul.f32 %v723, 0.70710677
        %v1062 = vmul.f32 %v797, 0.70710677
        %v1063 = vmul.f32 %v871, 0.70710677
        %v1064 = vmul.f32 %v651, 0.70710677
        %v1065 = vmul.f32 %v725, 0.70710677
        %v1066 = vmul.f32 %v799, 0.70710677
        %v1067 = vmul.f32 %v873, 0.70710677
        %v1068 = vmul.f32 %v654, 0.70710677
        %v1069 = vmul.f32 %v728, 0.70710677
        %v1070 = vmul.f32 %v802, 0.70710677
        %v1071 = vmul.f32 %v876, 0.70710677
        %v1072 = vmul.f32 %v656, 0.70710677
        %v1073 = vmul.f32 %v730, 0.70710677
        %v1074 = vmul.f32 %v804, 0.70710677
        %v1075 = vmul.f32 %v878, 0.70710677
        %v1076 = vmul.f32 %v659, 0.70710677
        %v1077 = vmul.f32 %v733, 0.70710677
        %v1078 = vmul.f32 %v807, 0.70710677
        %v1079 = vmul.f32 %v881, 0.70710677
        %v1080 = vmul.f32 %v661, 0.70710677
        %v1081 = vmul.f32 %v735, 0.70710677
        %v1082 = vmul.f32 %v809, 0.70710677
        %v1083 = vmul.f32 %v883, 0.70710677
        %v1084 = vmul.f32 %v664, 0.70710677
        %v1085 = vmul.f32 %v738, 0.70710677
        %v1086 = vmul.f32 %v812, 0.70710677
        %v1087 = vmul.f32 %v886, 0.70710677
        %v1088 = vmul.f32 %v666, 0.70710677
        %v1089 = vmul.f32 %v740, 0.70710677
        %v1090 = vmul.f32 %v814, 0.70710677
        %v1091 = vmul.f32 %v888, 0.70710677
        %v1092 = vmul.f32 %v669, 0.70710677
        %v1093 = vmul.f32 %v743, 0.70710677
        %v1094 = vmul.f32 %v817, 0.70710677
        %v1095 = vmul.f32 %v891, 0.70710677
        %v1096 = vmul.f32 %v671, 0.70710677
        %v1097 = vmul.f32 %v745, 0.70710677
        %v1098 = vmul.f32 %v819, 0.70710677
        %v1099 = vmul.f32 %v893, 0.70710677
        %v1100 = vmul.f32 %v674, 0.70710677
        %v1101 = vmul.f32 %v748, 0.70710677
        %v1102 = vmul.f32 %v822, 0.70710677
        %v1103 = vmul.f32 %v896, 0.70710677
        %v1104 = vmul.f32 %v676, 0.70710677
        %v1105 = vmul.f32 %v750, 0.70710677
        %v1106 = vmul.f32 %v824, 0.70710677
        %v1107 = vmul.f32 %v898, 0.70710677
        %v1108 = vmul.f32 %v1004, %v1004
        %v1109 = vmin.f32 16.0, %v1108
        %v1110 = vmul.f32 %v1109, 2.1237322e-06
        %v1111 = vadd.f32 %v1110, 0.00028619796
        %v1112 = vmul.f32 %v1109, %v1111
        %v1113 = vadd.f32 %v1112, 0.0036580483
        %v1114 = vmul.f32 %v1109, %v1113
        %v1115 = vadd.f32 %v1114, 0.05243302
        %v1116 = vmul.f32 %v1109, %v1115
        %v1117 = vadd.f32 %v1116, 0.18741608
        %v1118 = vmul.f32 %v1109, %v1117
        %v1119 = vadd.f32 %v1118, 1.1283791
        %v1120 = vmul.f32 %v1004, %v1119
        %v1121 = vmul.f32 %v1109, 3.8918573e-05
        %v1122 = vadd.f32 %v1121, 0.001143296
        %v1123 = vmul.f32 %v1109, %v1122
        %v1124 = vadd.f32 %v1123, 0.014752088
        %v1125 = vmul.f32 %v1109, %v1124
        %v1126 = vadd.f32 %v1125, 0.112945676
        %v1127 = vmul.f32 %v1109, %v1126
        %v1128 = vadd.f32 %v1127, 0.4994258
        %v1129 = vmul.f32 %v1109, %v1128
        %v1130 = vadd.f32 %v1129, 1.0
        %v1131 = vrcp.pop %v1130
        %v1132 = vmul.f32 %v1130, %v1131
        %v1133 = vsub.f32 1.0, %v1132
        %v1134 = vmul.f32 %v1131, %v1133
        %v1135 = vadd.f32 %v1131, %v1134
        %vm1136 = vweird.f32 %v1130
        %vm1137 = vweird.f32 %v1131
        %vm1138 = vmor %vm1136, %vm1137
        %v1139 = vsel %vm1138, %v1131, %v1135
        %v1140 = vand.u32 2147483647, %v1130
        %vm1141 = vcmp.eq.f32.partialorder %v1140, 8.507059e+37
        %v1142 = vand.u32 %v1130, 2147483648
        %v1143 = vor.u32 1.1754944e-38, %v1142
        %v1144 = vsel %vm1141, %v1143, %v1139
        %v1145 = vmul.f32 %v1120, %v1144
        %v1146 = vmin.f32 %v1145, 1.0
        %v1147 = vmax.f32 %v1146, -1.0
        %v1148 = vmul.f32 %v1005, %v1005
        %v1149 = vmin.f32 16.0, %v1148
        %v1150 = vmul.f32 %v1149, 2.1237322e-06
        %v1151 = vadd.f32 %v1150, 0.00028619796
        %v1152 = vmul.f32 %v1149, %v1151
        %v1153 = vadd.f32 %v1152, 0.0036580483
        %v1154 = vmul.f32 %v1149, %v1153
        %v1155 = vadd.f32 %v1154, 0.05243302
        %v1156 = vmul.f32 %v1149, %v1155
        %v1157 = vadd.f32 %v1156, 0.18741608
        %v1158 = vmul.f32 %v1149, %v1157
        %v1159 = vadd.f32 %v1158, 1.1283791
        %v1160 = vmul.f32 %v1005, %v1159
        %v1161 = vmul.f32 %v1149, 3.8918573e-05
        %v1162 = vadd.f32 %v1161, 0.001143296
        %v1163 = vmul.f32 %v1149, %v1162
        %v1164 = vadd.f32 %v1163, 0.014752088
        %v1165 = vmul.f32 %v1149, %v1164
        %v1166 = vadd.f32 %v1165, 0.112945676
        %v1167 = vmul.f32 %v1149, %v1166
        %v1168 = vadd.f32 %v1167, 0.4994258
        %v1169 = vmul.f32 %v1149, %v1168
        %v1170 = vadd.f32 %v1169, 1.0
        %v1171 = vrcp.pop %v1170
        %v1172 = vmul.f32 %v1170, %v1171
        %v1173 = vsub.f32 1.0, %v1172
        %v1174 = vmul.f32 %v1171, %v1173
        %v1175 = vadd.f32 %v1171, %v1174
        %vm1176 = vweird.f32 %v1170
        %vm1177 = vweird.f32 %v1171
        %vm1178 = vmor %vm1176, %vm1177
        %v1179 = vsel %vm1178, %v1171, %v1175
        %v1180 = vand.u32 2147483647, %v1170
        %vm1181 = vcmp.eq.f32.partialorder %v1180, 8.507059e+37
        %v1182 = vand.u32 %v1170, 2147483648
        %v1183 = vor.u32 1.1754944e-38, %v1182
        %v1184 = vsel %vm1181, %v1183, %v1179
        %v1185 = vmul.f32 %v1160, %v1184
        %v1186 = vmin.f32 %v1185, 1.0
        %v1187 = vmax.f32 %v1186, -1.0
        %v1188 = vmul.f32 %v1006, %v1006
        %v1189 = vmin.f32 16.0, %v1188
        %v1190 = vmul.f32 %v1189, 2.1237322e-06
        %v1191 = vadd.f32 %v1190, 0.00028619796
        %v1192 = vmul.f32 %v1189, %v1191
        %v1193 = vadd.f32 %v1192, 0.0036580483
        %v1194 = vmul.f32 %v1189, %v1193
        %v1195 = vadd.f32 %v1194, 0.05243302
        %v1196 = vmul.f32 %v1189, %v1195
        %v1197 = vadd.f32 %v1196, 0.18741608
        %v1198 = vmul.f32 %v1189, %v1197
        %v1199 = vadd.f32 %v1198, 1.1283791
        %v1200 = vmul.f32 %v1006, %v1199
        %v1201 = vmul.f32 %v1189, 3.8918573e-05
        %v1202 = vadd.f32 %v1201, 0.001143296
        %v1203 = vmul.f32 %v1189, %v1202
        %v1204 = vadd.f32 %v1203, 0.014752088
        %v1205 = vmul.f32 %v1189, %v1204
        %v1206 = vadd.f32 %v1205, 0.112945676
        %v1207 = vmul.f32 %v1189, %v1206
        %v1208 = vadd.f32 %v1207, 0.4994258
        %v1209 = vmul.f32 %v1189, %v1208
        %v1210 = vadd.f32 %v1209, 1.0
        %v1211 = vrcp.pop %v1210
        %v1212 = vmul.f32 %v1210, %v1211
        %v1213 = vsub.f32 1.0, %v1212
        %v1214 = vmul.f32 %v1211, %v1213
        %v1215 = vadd.f32 %v1211, %v1214
        %vm1216 = vweird.f32 %v1210
        %vm1217 = vweird.f32 %v1211
        %vm1218 = vmor %vm1216, %vm1217
        %v1219 = vsel %vm1218, %v1211, %v1215
        %v1220 = vand.u32 2147483647, %v1210
        %vm1221 = vcmp.eq.f32.partialorder %v1220, 8.507059e+37
        %v1222 = vand.u32 %v1210, 2147483648
        %v1223 = vor.u32 1.1754944e-38, %v1222
        %v1224 = vsel %vm1221, %v1223, %v1219
        %v1225 = vmul.f32 %v1200, %v1224
        %v1226 = vmin.f32 %v1225, 1.0
        %v1227 = vmax.f32 %v1226, -1.0
        %v1228 = vmul.f32 %v1007, %v1007
        %v1229 = vmin.f32 16.0, %v1228
        %v1230 = vmul.f32 %v1229, 2.1237322e-06
        %v1231 = vadd.f32 %v1230, 0.00028619796
        %v1232 = vmul.f32 %v1229, %v1231
        %v1233 = vadd.f32 %v1232, 0.0036580483
        %v1234 = vmul.f32 %v1229, %v1233
        %v1235 = vadd.f32 %v1234, 0.05243302
        %v1236 = vmul.f32 %v1229, %v1235
        %v1237 = vadd.f32 %v1236, 0.18741608
        %v1238 = vmul.f32 %v1229, %v1237
        %v1239 = vadd.f32 %v1238, 1.1283791
        %v1240 = vmul.f32 %v1007, %v1239
        %v1241 = vmul.f32 %v1229, 3.8918573e-05
        %v1242 = vadd.f32 %v1241, 0.001143296
        %v1243 = vmul.f32 %v1229, %v1242
        %v1244 = vadd.f32 %v1243, 0.014752088
        %v1245 = vmul.f32 %v1229, %v1244
        %v1246 = vadd.f32 %v1245, 0.112945676
        %v1247 = vmul.f32 %v1229, %v1246
        %v1248 = vadd.f32 %v1247, 0.4994258
        %v1249 = vmul.f32 %v1229, %v1248
        %v1250 = vadd.f32 %v1249, 1.0
        %v1251 = vrcp.pop %v1250
        %v1252 = vmul.f32 %v1250, %v1251
        %v1253 = vsub.f32 1.0, %v1252
        %v1254 = vmul.f32 %v1251, %v1253
        %v1255 = vadd.f32 %v1251, %v1254
        %vm1256 = vweird.f32 %v1250
        %vm1257 = vweird.f32 %v1251
        %vm1258 = vmor %vm1256, %vm1257
        %v1259 = vsel %vm1258, %v1251, %v1255
        %v1260 = vand.u32 2147483647, %v1250
        %vm1261 = vcmp.eq.f32.partialorder %v1260, 8.507059e+37
        %v1262 = vand.u32 %v1250, 2147483648
        %v1263 = vor.u32 1.1754944e-38, %v1262
        %v1264 = vsel %vm1261, %v1263, %v1259
        %v1265 = vmul.f32 %v1240, %v1264
        %v1266 = vmin.f32 %v1265, 1.0
        %v1267 = vmax.f32 %v1266, -1.0
        %v1268 = vmul.f32 %v1008, %v1008
        %v1269 = vmin.f32 16.0, %v1268
        %v1270 = vmul.f32 %v1269, 2.1237322e-06
        %v1271 = vadd.f32 %v1270, 0.00028619796
        %v1272 = vmul.f32 %v1269, %v1271
        %v1273 = vadd.f32 %v1272, 0.0036580483
        %v1274 = vmul.f32 %v1269, %v1273
        %v1275 = vadd.f32 %v1274, 0.05243302
        %v1276 = vmul.f32 %v1269, %v1275
        %v1277 = vadd.f32 %v1276, 0.18741608
        %v1278 = vmul.f32 %v1269, %v1277
        %v1279 = vadd.f32 %v1278, 1.1283791
        %v1280 = vmul.f32 %v1008, %v1279
        %v1281 = vmul.f32 %v1269, 3.8918573e-05
        %v1282 = vadd.f32 %v1281, 0.001143296
        %v1283 = vmul.f32 %v1269, %v1282
        %v1284 = vadd.f32 %v1283, 0.014752088
        %v1285 = vmul.f32 %v1269, %v1284
        %v1286 = vadd.f32 %v1285, 0.112945676
        %v1287 = vmul.f32 %v1269, %v1286
        %v1288 = vadd.f32 %v1287, 0.4994258
        %v1289 = vmul.f32 %v1269, %v1288
        %v1290 = vadd.f32 %v1289, 1.0
        %v1291 = vrcp.pop %v1290
        %v1292 = vmul.f32 %v1290, %v1291
        %v1293 = vsub.f32 1.0, %v1292
        %v1294 = vmul.f32 %v1291, %v1293
        %v1295 = vadd.f32 %v1291, %v1294
        %vm1296 = vweird.f32 %v1290
        %vm1297 = vweird.f32 %v1291
        %vm1298 = vmor %vm1296, %vm1297
        %v1299 = vsel %vm1298, %v1291, %v1295
        %v1300 = vand.u32 2147483647, %v1290
        %vm1301 = vcmp.eq.f32.partialorder %v1300, 8.507059e+37
        %v1302 = vand.u32 %v1290, 2147483648
        %v1303 = vor.u32 1.1754944e-38, %v1302
        %v1304 = vsel %vm1301, %v1303, %v1299
        %v1305 = vmul.f32 %v1280, %v1304
        %v1306 = vmin.f32 %v1305, 1.0
        %v1307 = vmax.f32 %v1306, -1.0
        %v1308 = vmul.f32 %v1009, %v1009
        %v1309 = vmin.f32 16.0, %v1308
        %v1310 = vmul.f32 %v1309, 2.1237322e-06
        %v1311 = vadd.f32 %v1310, 0.00028619796
        %v1312 = vmul.f32 %v1309, %v1311
        %v1313 = vadd.f32 %v1312, 0.0036580483
        %v1314 = vmul.f32 %v1309, %v1313
        %v1315 = vadd.f32 %v1314, 0.05243302
        %v1316 = vmul.f32 %v1309, %v1315
        %v1317 = vadd.f32 %v1316, 0.18741608
        %v1318 = vmul.f32 %v1309, %v1317
        %v1319 = vadd.f32 %v1318, 1.1283791
        %v1320 = vmul.f32 %v1009, %v1319
        %v1321 = vmul.f32 %v1309, 3.8918573e-05
        %v1322 = vadd.f32 %v1321, 0.001143296
        %v1323 = vmul.f32 %v1309, %v1322
        %v1324 = vadd.f32 %v1323, 0.014752088
        %v1325 = vmul.f32 %v1309, %v1324
        %v1326 = vadd.f32 %v1325, 0.112945676
        %v1327 = vmul.f32 %v1309, %v1326
        %v1328 = vadd.f32 %v1327, 0.4994258
        %v1329 = vmul.f32 %v1309, %v1328
        %v1330 = vadd.f32 %v1329, 1.0
        %v1331 = vrcp.pop %v1330
        %v1332 = vmul.f32 %v1330, %v1331
        %v1333 = vsub.f32 1.0, %v1332
        %v1334 = vmul.f32 %v1331, %v1333
        %v1335 = vadd.f32 %v1331, %v1334
        %vm1336 = vweird.f32 %v1330
        %vm1337 = vweird.f32 %v1331
        %vm1338 = vmor %vm1336, %vm1337
        %v1339 = vsel %vm1338, %v1331, %v1335
        %v1340 = vand.u32 2147483647, %v1330
        %vm1341 = vcmp.eq.f32.partialorder %v1340, 8.507059e+37
        %v1342 = vand.u32 %v1330, 2147483648
        %v1343 = vor.u32 1.1754944e-38, %v1342
        %v1344 = vsel %vm1341, %v1343, %v1339
        %v1345 = vmul.f32 %v1320, %v1344
        %v1346 = vmin.f32 %v1345, 1.0
        %v1347 = vmax.f32 %v1346, -1.0
        %v1348 = vmul.f32 %v1010, %v1010
        %v1349 = vmin.f32 16.0, %v1348
        %v1350 = vmul.f32 %v1349, 2.1237322e-06
        %v1351 = vadd.f32 %v1350, 0.00028619796
        %v1352 = vmul.f32 %v1349, %v1351
        %v1353 = vadd.f32 %v1352, 0.0036580483
        %v1354 = vmul.f32 %v1349, %v1353
        %v1355 = vadd.f32 %v1354, 0.05243302
        %v1356 = vmul.f32 %v1349, %v1355
        %v1357 = vadd.f32 %v1356, 0.18741608
        %v1358 = vmul.f32 %v1349, %v1357
        %v1359 = vadd.f32 %v1358, 1.1283791
        %v1360 = vmul.f32 %v1010, %v1359
        %v1361 = vmul.f32 %v1349, 3.8918573e-05
        %v1362 = vadd.f32 %v1361, 0.001143296
        %v1363 = vmul.f32 %v1349, %v1362
        %v1364 = vadd.f32 %v1363, 0.014752088
        %v1365 = vmul.f32 %v1349, %v1364
        %v1366 = vadd.f32 %v1365, 0.112945676
        %v1367 = vmul.f32 %v1349, %v1366
        %v1368 = vadd.f32 %v1367, 0.4994258
        %v1369 = vmul.f32 %v1349, %v1368
        %v1370 = vadd.f32 %v1369, 1.0
        %v1371 = vrcp.pop %v1370
        %v1372 = vmul.f32 %v1370, %v1371
        %v1373 = vsub.f32 1.0, %v1372
        %v1374 = vmul.f32 %v1371, %v1373
        %v1375 = vadd.f32 %v1371, %v1374
        %vm1376 = vweird.f32 %v1370
        %vm1377 = vweird.f32 %v1371
        %vm1378 = vmor %vm1376, %vm1377
        %v1379 = vsel %vm1378, %v1371, %v1375
        %v1380 = vand.u32 2147483647, %v1370
        %vm1381 = vcmp.eq.f32.partialorder %v1380, 8.507059e+37
        %v1382 = vand.u32 %v1370, 2147483648
        %v1383 = vor.u32 1.1754944e-38, %v1382
        %v1384 = vsel %vm1381, %v1383, %v1379
        %v1385 = vmul.f32 %v1360, %v1384
        %v1386 = vmin.f32 %v1385, 1.0
        %v1387 = vmax.f32 %v1386, -1.0
        %v1388 = vmul.f32 %v1011, %v1011
        %v1389 = vmin.f32 16.0, %v1388
        %v1390 = vmul.f32 %v1389, 2.1237322e-06
        %v1391 = vadd.f32 %v1390, 0.00028619796
        %v1392 = vmul.f32 %v1389, %v1391
        %v1393 = vadd.f32 %v1392, 0.0036580483
        %v1394 = vmul.f32 %v1389, %v1393
        %v1395 = vadd.f32 %v1394, 0.05243302
        %v1396 = vmul.f32 %v1389, %v1395
        %v1397 = vadd.f32 %v1396, 0.18741608
        %v1398 = vmul.f32 %v1389, %v1397
        %v1399 = vadd.f32 %v1398, 1.1283791
        %v1400 = vmul.f32 %v1011, %v1399
        %v1401 = vmul.f32 %v1389, 3.8918573e-05
        %v1402 = vadd.f32 %v1401, 0.001143296
        %v1403 = vmul.f32 %v1389, %v1402
        %v1404 = vadd.f32 %v1403, 0.014752088
        %v1405 = vmul.f32 %v1389, %v1404
        %v1406 = vadd.f32 %v1405, 0.112945676
        %v1407 = vmul.f32 %v1389, %v1406
        %v1408 = vadd.f32 %v1407, 0.4994258
        %v1409 = vmul.f32 %v1389, %v1408
        %v1410 = vadd.f32 %v1409, 1.0
        %v1411 = vrcp.pop %v1410
        %v1412 = vmul.f32 %v1410, %v1411
        %v1413 = vsub.f32 1.0, %v1412
        %v1414 = vmul.f32 %v1411, %v1413
        %v1415 = vadd.f32 %v1411, %v1414
        %vm1416 = vweird.f32 %v1410
        %vm1417 = vweird.f32 %v1411
        %vm1418 = vmor %vm1416, %vm1417
        %v1419 = vsel %vm1418, %v1411, %v1415
        %v1420 = vand.u32 2147483647, %v1410
        %vm1421 = vcmp.eq.f32.partialorder %v1420, 8.507059e+37
        %v1422 = vand.u32 %v1410, 2147483648
        %v1423 = vor.u32 1.1754944e-38, %v1422
        %v1424 = vsel %vm1421, %v1423, %v1419
        %v1425 = vmul.f32 %v1400, %v1424
        %v1426 = vmin.f32 %v1425, 1.0
        %v1427 = vmax.f32 %v1426, -1.0
        %v1428 = vmul.f32 %v1012, %v1012
        %v1429 = vmin.f32 16.0, %v1428
        %v1430 = vmul.f32 %v1429, 2.1237322e-06
        %v1431 = vadd.f32 %v1430, 0.00028619796
        %v1432 = vmul.f32 %v1429, %v1431
        %v1433 = vadd.f32 %v1432, 0.0036580483
        %v1434 = vmul.f32 %v1429, %v1433
        %v1435 = vadd.f32 %v1434, 0.05243302
        %v1436 = vmul.f32 %v1429, %v1435
        %v1437 = vadd.f32 %v1436, 0.18741608
        %v1438 = vmul.f32 %v1429, %v1437
        %v1439 = vadd.f32 %v1438, 1.1283791
        %v1440 = vmul.f32 %v1012, %v1439
        %v1441 = vmul.f32 %v1429, 3.8918573e-05
        %v1442 = vadd.f32 %v1441, 0.001143296
        %v1443 = vmul.f32 %v1429, %v1442
        %v1444 = vadd.f32 %v1443, 0.014752088
        %v1445 = vmul.f32 %v1429, %v1444
        %v1446 = vadd.f32 %v1445, 0.112945676
        %v1447 = vmul.f32 %v1429, %v1446
        %v1448 = vadd.f32 %v1447, 0.4994258
        %v1449 = vmul.f32 %v1429, %v1448
        %v1450 = vadd.f32 %v1449, 1.0
        %v1451 = vrcp.pop %v1450
        %v1452 = vmul.f32 %v1450, %v1451
        %v1453 = vsub.f32 1.0, %v1452
        %v1454 = vmul.f32 %v1451, %v1453
        %v1455 = vadd.f32 %v1451, %v1454
        %vm1456 = vweird.f32 %v1450
        %vm1457 = vweird.f32 %v1451
        %vm1458 = vmor %vm1456, %vm1457
        %v1459 = vsel %vm1458, %v1451, %v1455
        %v1460 = vand.u32 2147483647, %v1450
        %vm1461 = vcmp.eq.f32.partialorder %v1460, 8.507059e+37
        %v1462 = vand.u32 %v1450, 2147483648
        %v1463 = vor.u32 1.1754944e-38, %v1462
        %v1464 = vsel %vm1461, %v1463, %v1459
        %v1465 = vmul.f32 %v1440, %v1464
        %v1466 = vmin.f32 %v1465, 1.0
        %v1467 = vmax.f32 %v1466, -1.0
        %v1468 = vmul.f32 %v1013, %v1013
        %v1469 = vmin.f32 16.0, %v1468
        %v1470 = vmul.f32 %v1469, 2.1237322e-06
        %v1471 = vadd.f32 %v1470, 0.00028619796
        %v1472 = vmul.f32 %v1469, %v1471
        %v1473 = vadd.f32 %v1472, 0.0036580483
        %v1474 = vmul.f32 %v1469, %v1473
        %v1475 = vadd.f32 %v1474, 0.05243302
        %v1476 = vmul.f32 %v1469, %v1475
        %v1477 = vadd.f32 %v1476, 0.18741608
        %v1478 = vmul.f32 %v1469, %v1477
        %v1479 = vadd.f32 %v1478, 1.1283791
        %v1480 = vmul.f32 %v1013, %v1479
        %v1481 = vmul.f32 %v1469, 3.8918573e-05
        %v1482 = vadd.f32 %v1481, 0.001143296
        %v1483 = vmul.f32 %v1469, %v1482
        %v1484 = vadd.f32 %v1483, 0.014752088
        %v1485 = vmul.f32 %v1469, %v1484
        %v1486 = vadd.f32 %v1485, 0.112945676
        %v1487 = vmul.f32 %v1469, %v1486
        %v1488 = vadd.f32 %v1487, 0.4994258
        %v1489 = vmul.f32 %v1469, %v1488
        %v1490 = vadd.f32 %v1489, 1.0
        %v1491 = vrcp.pop %v1490
        %v1492 = vmul.f32 %v1490, %v1491
        %v1493 = vsub.f32 1.0, %v1492
        %v1494 = vmul.f32 %v1491, %v1493
        %v1495 = vadd.f32 %v1491, %v1494
        %vm1496 = vweird.f32 %v1490
        %vm1497 = vweird.f32 %v1491
        %vm1498 = vmor %vm1496, %vm1497
        %v1499 = vsel %vm1498, %v1491, %v1495
        %v1500 = vand.u32 2147483647, %v1490
        %vm1501 = vcmp.eq.f32.partialorder %v1500, 8.507059e+37
        %v1502 = vand.u32 %v1490, 2147483648
        %v1503 = vor.u32 1.1754944e-38, %v1502
        %v1504 = vsel %vm1501, %v1503, %v1499
        %v1505 = vmul.f32 %v1480, %v1504
        %v1506 = vmin.f32 %v1505, 1.0
        %v1507 = vmax.f32 %v1506, -1.0
        %v1508 = vmul.f32 %v1014, %v1014
        %v1509 = vmin.f32 16.0, %v1508
        %v1510 = vmul.f32 %v1509, 2.1237322e-06
        %v1511 = vadd.f32 %v1510, 0.00028619796
        %v1512 = vmul.f32 %v1509, %v1511
        %v1513 = vadd.f32 %v1512, 0.0036580483
        %v1514 = vmul.f32 %v1509, %v1513
        %v1515 = vadd.f32 %v1514, 0.05243302
        %v1516 = vmul.f32 %v1509, %v1515
        %v1517 = vadd.f32 %v1516, 0.18741608
        %v1518 = vmul.f32 %v1509, %v1517
        %v1519 = vadd.f32 %v1518, 1.1283791
        %v1520 = vmul.f32 %v1014, %v1519
        %v1521 = vmul.f32 %v1509, 3.8918573e-05
        %v1522 = vadd.f32 %v1521, 0.001143296
        %v1523 = vmul.f32 %v1509, %v1522
        %v1524 = vadd.f32 %v1523, 0.014752088
        %v1525 = vmul.f32 %v1509, %v1524
        %v1526 = vadd.f32 %v1525, 0.112945676
        %v1527 = vmul.f32 %v1509, %v1526
        %v1528 = vadd.f32 %v1527, 0.4994258
        %v1529 = vmul.f32 %v1509, %v1528
        %v1530 = vadd.f32 %v1529, 1.0
        %v1531 = vrcp.pop %v1530
        %v1532 = vmul.f32 %v1530, %v1531
        %v1533 = vsub.f32 1.0, %v1532
        %v1534 = vmul.f32 %v1531, %v1533
        %v1535 = vadd.f32 %v1531, %v1534
        %vm1536 = vweird.f32 %v1530
        %vm1537 = vweird.f32 %v1531
        %vm1538 = vmor %vm1536, %vm1537
        %v1539 = vsel %vm1538, %v1531, %v1535
        %v1540 = vand.u32 2147483647, %v1530
        %vm1541 = vcmp.eq.f32.partialorder %v1540, 8.507059e+37
        %v1542 = vand.u32 %v1530, 2147483648
        %v1543 = vor.u32 1.1754944e-38, %v1542
        %v1544 = vsel %vm1541, %v1543, %v1539
        %v1545 = vmul.f32 %v1520, %v1544
        %v1546 = vmin.f32 %v1545, 1.0
        %v1547 = vmax.f32 %v1546, -1.0
        %v1548 = vmul.f32 %v1015, %v1015
        %v1549 = vmin.f32 16.0, %v1548
        %v1550 = vmul.f32 %v1549, 2.1237322e-06
        %v1551 = vadd.f32 %v1550, 0.00028619796
        %v1552 = vmul.f32 %v1549, %v1551
        %v1553 = vadd.f32 %v1552, 0.0036580483
        %v1554 = vmul.f32 %v1549, %v1553
        %v1555 = vadd.f32 %v1554, 0.05243302
        %v1556 = vmul.f32 %v1549, %v1555
        %v1557 = vadd.f32 %v1556, 0.18741608
        %v1558 = vmul.f32 %v1549, %v1557
        %v1559 = vadd.f32 %v1558, 1.1283791
        %v1560 = vmul.f32 %v1015, %v1559
        %v1561 = vmul.f32 %v1549, 3.8918573e-05
        %v1562 = vadd.f32 %v1561, 0.001143296
        %v1563 = vmul.f32 %v1549, %v1562
        %v1564 = vadd.f32 %v1563, 0.014752088
        %v1565 = vmul.f32 %v1549, %v1564
        %v1566 = vadd.f32 %v1565, 0.112945676
        %v1567 = vmul.f32 %v1549, %v1566
        %v1568 = vadd.f32 %v1567, 0.4994258
        %v1569 = vmul.f32 %v1549, %v1568
        %v1570 = vadd.f32 %v1569, 1.0
        %v1571 = vrcp.pop %v1570
        %v1572 = vmul.f32 %v1570, %v1571
        %v1573 = vsub.f32 1.0, %v1572
        %v1574 = vmul.f32 %v1571, %v1573
        %v1575 = vadd.f32 %v1571, %v1574
        %vm1576 = vweird.f32 %v1570
        %vm1577 = vweird.f32 %v1571
        %vm1578 = vmor %vm1576, %vm1577
        %v1579 = vsel %vm1578, %v1571, %v1575
        %v1580 = vand.u32 2147483647, %v1570
        %vm1581 = vcmp.eq.f32.partialorder %v1580, 8.507059e+37
        %v1582 = vand.u32 %v1570, 2147483648
        %v1583 = vor.u32 1.1754944e-38, %v1582
        %v1584 = vsel %vm1581, %v1583, %v1579
        %v1585 = vmul.f32 %v1560, %v1584
        %v1586 = vmin.f32 %v1585, 1.0
        %v1587 = vmax.f32 %v1586, -1.0
        %v1588 = vmul.f32 %v1016, %v1016
        %v1589 = vmin.f32 16.0, %v1588
        %v1590 = vmul.f32 %v1589, 2.1237322e-06
        %v1591 = vadd.f32 %v1590, 0.00028619796
        %v1592 = vmul.f32 %v1589, %v1591
        %v1593 = vadd.f32 %v1592, 0.0036580483
        %v1594 = vmul.f32 %v1589, %v1593
        %v1595 = vadd.f32 %v1594, 0.05243302
        %v1596 = vmul.f32 %v1589, %v1595
        %v1597 = vadd.f32 %v1596, 0.18741608
        %v1598 = vmul.f32 %v1589, %v1597
        %v1599 = vadd.f32 %v1598, 1.1283791
        %v1600 = vmul.f32 %v1016, %v1599
        %v1601 = vmul.f32 %v1589, 3.8918573e-05
        %v1602 = vadd.f32 %v1601, 0.001143296
        %v1603 = vmul.f32 %v1589, %v1602
        %v1604 = vadd.f32 %v1603, 0.014752088
        %v1605 = vmul.f32 %v1589, %v1604
        %v1606 = vadd.f32 %v1605, 0.112945676
        %v1607 = vmul.f32 %v1589, %v1606
        %v1608 = vadd.f32 %v1607, 0.4994258
        %v1609 = vmul.f32 %v1589, %v1608
        %v1610 = vadd.f32 %v1609, 1.0
        %v1611 = vrcp.pop %v1610
        %v1612 = vmul.f32 %v1610, %v1611
        %v1613 = vsub.f32 1.0, %v1612
        %v1614 = vmul.f32 %v1611, %v1613
        %v1615 = vadd.f32 %v1611, %v1614
        %vm1616 = vweird.f32 %v1610
        %vm1617 = vweird.f32 %v1611
        %vm1618 = vmor %vm1616, %vm1617
        %v1619 = vsel %vm1618, %v1611, %v1615
        %v1620 = vand.u32 2147483647, %v1610
        %vm1621 = vcmp.eq.f32.partialorder %v1620, 8.507059e+37
        %v1622 = vand.u32 %v1610, 2147483648
        %v1623 = vor.u32 1.1754944e-38, %v1622
        %v1624 = vsel %vm1621, %v1623, %v1619
        %v1625 = vmul.f32 %v1600, %v1624
        %v1626 = vmin.f32 %v1625, 1.0
        %v1627 = vmax.f32 %v1626, -1.0
        %v1628 = vmul.f32 %v1017, %v1017
        %v1629 = vmin.f32 16.0, %v1628
        %v1630 = vmul.f32 %v1629, 2.1237322e-06
        %v1631 = vadd.f32 %v1630, 0.00028619796
        %v1632 = vmul.f32 %v1629, %v1631
        %v1633 = vadd.f32 %v1632, 0.0036580483
        %v1634 = vmul.f32 %v1629, %v1633
        %v1635 = vadd.f32 %v1634, 0.05243302
        %v1636 = vmul.f32 %v1629, %v1635
        %v1637 = vadd.f32 %v1636, 0.18741608
        %v1638 = vmul.f32 %v1629, %v1637
        %v1639 = vadd.f32 %v1638, 1.1283791
        %v1640 = vmul.f32 %v1017, %v1639
        %v1641 = vmul.f32 %v1629, 3.8918573e-05
        %v1642 = vadd.f32 %v1641, 0.001143296
        %v1643 = vmul.f32 %v1629, %v1642
        %v1644 = vadd.f32 %v1643, 0.014752088
        %v1645 = vmul.f32 %v1629, %v1644
        %v1646 = vadd.f32 %v1645, 0.112945676
        %v1647 = vmul.f32 %v1629, %v1646
        %v1648 = vadd.f32 %v1647, 0.4994258
        %v1649 = vmul.f32 %v1629, %v1648
        %v1650 = vadd.f32 %v1649, 1.0
        %v1651 = vrcp.pop %v1650
        %v1652 = vmul.f32 %v1650, %v1651
        %v1653 = vsub.f32 1.0, %v1652
        %v1654 = vmul.f32 %v1651, %v1653
        %v1655 = vadd.f32 %v1651, %v1654
        %vm1656 = vweird.f32 %v1650
        %vm1657 = vweird.f32 %v1651
        %vm1658 = vmor %vm1656, %vm1657
        %v1659 = vsel %vm1658, %v1651, %v1655
        %v1660 = vand.u32 2147483647, %v1650
        %vm1661 = vcmp.eq.f32.partialorder %v1660, 8.507059e+37
        %v1662 = vand.u32 %v1650, 2147483648
        %v1663 = vor.u32 1.1754944e-38, %v1662
        %v1664 = vsel %vm1661, %v1663, %v1659
        %v1665 = vmul.f32 %v1640, %v1664
        %v1666 = vmin.f32 %v1665, 1.0
        %v1667 = vmax.f32 %v1666, -1.0
        %v1668 = vmul.f32 %v1018, %v1018
        %v1669 = vmin.f32 16.0, %v1668
        %v1670 = vmul.f32 %v1669, 2.1237322e-06
        %v1671 = vadd.f32 %v1670, 0.00028619796
        %v1672 = vmul.f32 %v1669, %v1671
        %v1673 = vadd.f32 %v1672, 0.0036580483
        %v1674 = vmul.f32 %v1669, %v1673
        %v1675 = vadd.f32 %v1674, 0.05243302
        %v1676 = vmul.f32 %v1669, %v1675
        %v1677 = vadd.f32 %v1676, 0.18741608
        %v1678 = vmul.f32 %v1669, %v1677
        %v1679 = vadd.f32 %v1678, 1.1283791
        %v1680 = vmul.f32 %v1018, %v1679
        %v1681 = vmul.f32 %v1669, 3.8918573e-05
        %v1682 = vadd.f32 %v1681, 0.001143296
        %v1683 = vmul.f32 %v1669, %v1682
        %v1684 = vadd.f32 %v1683, 0.014752088
        %v1685 = vmul.f32 %v1669, %v1684
        %v1686 = vadd.f32 %v1685, 0.112945676
        %v1687 = vmul.f32 %v1669, %v1686
        %v1688 = vadd.f32 %v1687, 0.4994258
        %v1689 = vmul.f32 %v1669, %v1688
        %v1690 = vadd.f32 %v1689, 1.0
        %v1691 = vrcp.pop %v1690
        %v1692 = vmul.f32 %v1690, %v1691
        %v1693 = vsub.f32 1.0, %v1692
        %v1694 = vmul.f32 %v1691, %v1693
        %v1695 = vadd.f32 %v1691, %v1694
        %vm1696 = vweird.f32 %v1690
        %vm1697 = vweird.f32 %v1691
        %vm1698 = vmor %vm1696, %vm1697
        %v1699 = vsel %vm1698, %v1691, %v1695
        %v1700 = vand.u32 2147483647, %v1690
        %vm1701 = vcmp.eq.f32.partialorder %v1700, 8.507059e+37
        %v1702 = vand.u32 %v1690, 2147483648
        %v1703 = vor.u32 1.1754944e-38, %v1702
        %v1704 = vsel %vm1701, %v1703, %v1699
        %v1705 = vmul.f32 %v1680, %v1704
        %v1706 = vmin.f32 %v1705, 1.0
        %v1707 = vmax.f32 %v1706, -1.0
        %v1708 = vmul.f32 %v1019, %v1019
        %v1709 = vmin.f32 16.0, %v1708
        %v1710 = vmul.f32 %v1709, 2.1237322e-06
        %v1711 = vadd.f32 %v1710, 0.00028619796
        %v1712 = vmul.f32 %v1709, %v1711
        %v1713 = vadd.f32 %v1712, 0.0036580483
        %v1714 = vmul.f32 %v1709, %v1713
        %v1715 = vadd.f32 %v1714, 0.05243302
        %v1716 = vmul.f32 %v1709, %v1715
        %v1717 = vadd.f32 %v1716, 0.18741608
        %v1718 = vmul.f32 %v1709, %v1717
        %v1719 = vadd.f32 %v1718, 1.1283791
        %v1720 = vmul.f32 %v1019, %v1719
        %v1721 = vmul.f32 %v1709, 3.8918573e-05
        %v1722 = vadd.f32 %v1721, 0.001143296
        %v1723 = vmul.f32 %v1709, %v1722
        %v1724 = vadd.f32 %v1723, 0.014752088
        %v1725 = vmul.f32 %v1709, %v1724
        %v1726 = vadd.f32 %v1725, 0.112945676
        %v1727 = vmul.f32 %v1709, %v1726
        %v1728 = vadd.f32 %v1727, 0.4994258
        %v1729 = vmul.f32 %v1709, %v1728
        %v1730 = vadd.f32 %v1729, 1.0
        %v1731 = vrcp.pop %v1730
        %v1732 = vmul.f32 %v1730, %v1731
        %v1733 = vsub.f32 1.0, %v1732
        %v1734 = vmul.f32 %v1731, %v1733
        %v1735 = vadd.f32 %v1731, %v1734
        %vm1736 = vweird.f32 %v1730
        %vm1737 = vweird.f32 %v1731
        %vm1738 = vmor %vm1736, %vm1737
        %v1739 = vsel %vm1738, %v1731, %v1735
        %v1740 = vand.u32 2147483647, %v1730
        %vm1741 = vcmp.eq.f32.partialorder %v1740, 8.507059e+37
        %v1742 = vand.u32 %v1730, 2147483648
        %v1743 = vor.u32 1.1754944e-38, %v1742
        %v1744 = vsel %vm1741, %v1743, %v1739
        %v1745 = vmul.f32 %v1720, %v1744
        %v1746 = vmin.f32 %v1745, 1.0
        %v1747 = vmax.f32 %v1746, -1.0
        %v1748 = vmul.f32 %v1020, %v1020
        %v1749 = vmin.f32 16.0, %v1748
        %v1750 = vmul.f32 %v1749, 2.1237322e-06
        %v1751 = vadd.f32 %v1750, 0.00028619796
        %v1752 = vmul.f32 %v1749, %v1751
        %v1753 = vadd.f32 %v1752, 0.0036580483
        %v1754 = vmul.f32 %v1749, %v1753
        %v1755 = vadd.f32 %v1754, 0.05243302
        %v1756 = vmul.f32 %v1749, %v1755
        %v1757 = vadd.f32 %v1756, 0.18741608
        %v1758 = vmul.f32 %v1749, %v1757
        %v1759 = vadd.f32 %v1758, 1.1283791
        %v1760 = vmul.f32 %v1020, %v1759
        %v1761 = vmul.f32 %v1749, 3.8918573e-05
        %v1762 = vadd.f32 %v1761, 0.001143296
        %v1763 = vmul.f32 %v1749, %v1762
        %v1764 = vadd.f32 %v1763, 0.014752088
        %v1765 = vmul.f32 %v1749, %v1764
        %v1766 = vadd.f32 %v1765, 0.112945676
        %v1767 = vmul.f32 %v1749, %v1766
        %v1768 = vadd.f32 %v1767, 0.4994258
        %v1769 = vmul.f32 %v1749, %v1768
        %v1770 = vadd.f32 %v1769, 1.0
        %v1771 = vrcp.pop %v1770
        %v1772 = vmul.f32 %v1770, %v1771
        %v1773 = vsub.f32 1.0, %v1772
        %v1774 = vmul.f32 %v1771, %v1773
        %v1775 = vadd.f32 %v1771, %v1774
        %vm1776 = vweird.f32 %v1770
        %vm1777 = vweird.f32 %v1771
        %vm1778 = vmor %vm1776, %vm1777
        %v1779 = vsel %vm1778, %v1771, %v1775
        %v1780 = vand.u32 2147483647, %v1770
        %vm1781 = vcmp.eq.f32.partialorder %v1780, 8.507059e+37
        %v1782 = vand.u32 %v1770, 2147483648
        %v1783 = vor.u32 1.1754944e-38, %v1782
        %v1784 = vsel %vm1781, %v1783, %v1779
        %v1785 = vmul.f32 %v1760, %v1784
        %v1786 = vmin.f32 %v1785, 1.0
        %v1787 = vmax.f32 %v1786, -1.0
        %v1788 = vmul.f32 %v1021, %v1021
        %v1789 = vmin.f32 16.0, %v1788
        %v1790 = vmul.f32 %v1789, 2.1237322e-06
        %v1791 = vadd.f32 %v1790, 0.00028619796
        %v1792 = vmul.f32 %v1789, %v1791
        %v1793 = vadd.f32 %v1792, 0.0036580483
        %v1794 = vmul.f32 %v1789, %v1793
        %v1795 = vadd.f32 %v1794, 0.05243302
        %v1796 = vmul.f32 %v1789, %v1795
        %v1797 = vadd.f32 %v1796, 0.18741608
        %v1798 = vmul.f32 %v1789, %v1797
        %v1799 = vadd.f32 %v1798, 1.1283791
        %v1800 = vmul.f32 %v1021, %v1799
        %v1801 = vmul.f32 %v1789, 3.8918573e-05
        %v1802 = vadd.f32 %v1801, 0.001143296
        %v1803 = vmul.f32 %v1789, %v1802
        %v1804 = vadd.f32 %v1803, 0.014752088
        %v1805 = vmul.f32 %v1789, %v1804
        %v1806 = vadd.f32 %v1805, 0.112945676
        %v1807 = vmul.f32 %v1789, %v1806
        %v1808 = vadd.f32 %v1807, 0.4994258
        %v1809 = vmul.f32 %v1789, %v1808
        %v1810 = vadd.f32 %v1809, 1.0
        %v1811 = vrcp.pop %v1810
        %v1812 = vmul.f32 %v1810, %v1811
        %v1813 = vsub.f32 1.0, %v1812
        %v1814 = vmul.f32 %v1811, %v1813
        %v1815 = vadd.f32 %v1811, %v1814
        %vm1816 = vweird.f32 %v1810
        %vm1817 = vweird.f32 %v1811
        %vm1818 = vmor %vm1816, %vm1817
        %v1819 = vsel %vm1818, %v1811, %v1815
        %v1820 = vand.u32 2147483647, %v1810
        %vm1821 = vcmp.eq.f32.partialorder %v1820, 8.507059e+37
        %v1822 = vand.u32 %v1810, 2147483648
        %v1823 = vor.u32 1.1754944e-38, %v1822
        %v1824 = vsel %vm1821, %v1823, %v1819
        %v1825 = vmul.f32 %v1800, %v1824
        %v1826 = vmin.f32 %v1825, 1.0
        %v1827 = vmax.f32 %v1826, -1.0
        %v1828 = vmul.f32 %v1022, %v1022
        %v1829 = vmin.f32 16.0, %v1828
        %v1830 = vmul.f32 %v1829, 2.1237322e-06
        %v1831 = vadd.f32 %v1830, 0.00028619796
        %v1832 = vmul.f32 %v1829, %v1831
        %v1833 = vadd.f32 %v1832, 0.0036580483
        %v1834 = vmul.f32 %v1829, %v1833
        %v1835 = vadd.f32 %v1834, 0.05243302
        %v1836 = vmul.f32 %v1829, %v1835
        %v1837 = vadd.f32 %v1836, 0.18741608
        %v1838 = vmul.f32 %v1829, %v1837
        %v1839 = vadd.f32 %v1838, 1.1283791
        %v1840 = vmul.f32 %v1022, %v1839
        %v1841 = vmul.f32 %v1829, 3.8918573e-05
        %v1842 = vadd.f32 %v1841, 0.001143296
        %v1843 = vmul.f32 %v1829, %v1842
        %v1844 = vadd.f32 %v1843, 0.014752088
        %v1845 = vmul.f32 %v1829, %v1844
        %v1846 = vadd.f32 %v1845, 0.112945676
        %v1847 = vmul.f32 %v1829, %v1846
        %v1848 = vadd.f32 %v1847, 0.4994258
        %v1849 = vmul.f32 %v1829, %v1848
        %v1850 = vadd.f32 %v1849, 1.0
        %v1851 = vrcp.pop %v1850
        %v1852 = vmul.f32 %v1850, %v1851
        %v1853 = vsub.f32 1.0, %v1852
        %v1854 = vmul.f32 %v1851, %v1853
        %v1855 = vadd.f32 %v1851, %v1854
        %vm1856 = vweird.f32 %v1850
        %vm1857 = vweird.f32 %v1851
        %vm1858 = vmor %vm1856, %vm1857
        %v1859 = vsel %vm1858, %v1851, %v1855
        %v1860 = vand.u32 2147483647, %v1850
        %vm1861 = vcmp.eq.f32.partialorder %v1860, 8.507059e+37
        %v1862 = vand.u32 %v1850, 2147483648
        %v1863 = vor.u32 1.1754944e-38, %v1862
        %v1864 = vsel %vm1861, %v1863, %v1859
        %v1865 = vmul.f32 %v1840, %v1864
        %v1866 = vmin.f32 %v1865, 1.0
        %v1867 = vmax.f32 %v1866, -1.0
        %v1868 = vmul.f32 %v1023, %v1023
        %v1869 = vmin.f32 16.0, %v1868
        %v1870 = vmul.f32 %v1869, 2.1237322e-06
        %v1871 = vadd.f32 %v1870, 0.00028619796
        %v1872 = vmul.f32 %v1869, %v1871
        %v1873 = vadd.f32 %v1872, 0.0036580483
        %v1874 = vmul.f32 %v1869, %v1873
        %v1875 = vadd.f32 %v1874, 0.05243302
        %v1876 = vmul.f32 %v1869, %v1875
        %v1877 = vadd.f32 %v1876, 0.18741608
        %v1878 = vmul.f32 %v1869, %v1877
        %v1879 = vadd.f32 %v1878, 1.1283791
        %v1880 = vmul.f32 %v1023, %v1879
        %v1881 = vmul.f32 %v1869, 3.8918573e-05
        %v1882 = vadd.f32 %v1881, 0.001143296
        %v1883 = vmul.f32 %v1869, %v1882
        %v1884 = vadd.f32 %v1883, 0.014752088
        %v1885 = vmul.f32 %v1869, %v1884
        %v1886 = vadd.f32 %v1885, 0.112945676
        %v1887 = vmul.f32 %v1869, %v1886
        %v1888 = vadd.f32 %v1887, 0.4994258
        %v1889 = vmul.f32 %v1869, %v1888
        %v1890 = vadd.f32 %v1889, 1.0
        %v1891 = vrcp.pop %v1890
        %v1892 = vmul.f32 %v1890, %v1891
        %v1893 = vsub.f32 1.0, %v1892
        %v1894 = vmul.f32 %v1891, %v1893
        %v1895 = vadd.f32 %v1891, %v1894
        %vm1896 = vweird.f32 %v1890
        %vm1897 = vweird.f32 %v1891
        %vm1898 = vmor %vm1896, %vm1897
        %v1899 = vsel %vm1898, %v1891, %v1895
        %v1900 = vand.u32 2147483647, %v1890
        %vm1901 = vcmp.eq.f32.partialorder %v1900, 8.507059e+37
        %v1902 = vand.u32 %v1890, 2147483648
        %v1903 = vor.u32 1.1754944e-38, %v1902
        %v1904 = vsel %vm1901, %v1903, %v1899
        %v1905 = vmul.f32 %v1880, %v1904
        %v1906 = vmin.f32 %v1905, 1.0
        %v1907 = vmax.f32 %v1906, -1.0
        %v1908 = vmul.f32 %v1024, %v1024
        %v1909 = vmin.f32 16.0, %v1908
        %v1910 = vmul.f32 %v1909, 2.1237322e-06
        %v1911 = vadd.f32 %v1910, 0.00028619796
        %v1912 = vmul.f32 %v1909, %v1911
        %v1913 = vadd.f32 %v1912, 0.0036580483
        %v1914 = vmul.f32 %v1909, %v1913
        %v1915 = vadd.f32 %v1914, 0.05243302
        %v1916 = vmul.f32 %v1909, %v1915
        %v1917 = vadd.f32 %v1916, 0.18741608
        %v1918 = vmul.f32 %v1909, %v1917
        %v1919 = vadd.f32 %v1918, 1.1283791
        %v1920 = vmul.f32 %v1024, %v1919
        %v1921 = vmul.f32 %v1909, 3.8918573e-05
        %v1922 = vadd.f32 %v1921, 0.001143296
        %v1923 = vmul.f32 %v1909, %v1922
        %v1924 = vadd.f32 %v1923, 0.014752088
        %v1925 = vmul.f32 %v1909, %v1924
        %v1926 = vadd.f32 %v1925, 0.112945676
        %v1927 = vmul.f32 %v1909, %v1926
        %v1928 = vadd.f32 %v1927, 0.4994258
        %v1929 = vmul.f32 %v1909, %v1928
        %v1930 = vadd.f32 %v1929, 1.0
        %v1931 = vrcp.pop %v1930
        %v1932 = vmul.f32 %v1930, %v1931
        %v1933 = vsub.f32 1.0, %v1932
        %v1934 = vmul.f32 %v1931, %v1933
        %v1935 = vadd.f32 %v1931, %v1934
        %vm1936 = vweird.f32 %v1930
        %vm1937 = vweird.f32 %v1931
        %vm1938 = vmor %vm1936, %vm1937
        %v1939 = vsel %vm1938, %v1931, %v1935
        %v1940 = vand.u32 2147483647, %v1930
        %vm1941 = vcmp.eq.f32.partialorder %v1940, 8.507059e+37
        %v1942 = vand.u32 %v1930, 2147483648
        %v1943 = vor.u32 1.1754944e-38, %v1942
        %v1944 = vsel %vm1941, %v1943, %v1939
        %v1945 = vmul.f32 %v1920, %v1944
        %v1946 = vmin.f32 %v1945, 1.0
        %v1947 = vmax.f32 %v1946, -1.0
        %v1948 = vmul.f32 %v1025, %v1025
        %v1949 = vmin.f32 16.0, %v1948
        %v1950 = vmul.f32 %v1949, 2.1237322e-06
        %v1951 = vadd.f32 %v1950, 0.00028619796
        %v1952 = vmul.f32 %v1949, %v1951
        %v1953 = vadd.f32 %v1952, 0.0036580483
        %v1954 = vmul.f32 %v1949, %v1953
        %v1955 = vadd.f32 %v1954, 0.05243302
        %v1956 = vmul.f32 %v1949, %v1955
        %v1957 = vadd.f32 %v1956, 0.18741608
        %v1958 = vmul.f32 %v1949, %v1957
        %v1959 = vadd.f32 %v1958, 1.1283791
        %v1960 = vmul.f32 %v1025, %v1959
        %v1961 = vmul.f32 %v1949, 3.8918573e-05
        %v1962 = vadd.f32 %v1961, 0.001143296
        %v1963 = vmul.f32 %v1949, %v1962
        %v1964 = vadd.f32 %v1963, 0.014752088
        %v1965 = vmul.f32 %v1949, %v1964
        %v1966 = vadd.f32 %v1965, 0.112945676
        %v1967 = vmul.f32 %v1949, %v1966
        %v1968 = vadd.f32 %v1967, 0.4994258
        %v1969 = vmul.f32 %v1949, %v1968
        %v1970 = vadd.f32 %v1969, 1.0
        %v1971 = vrcp.pop %v1970
        %v1972 = vmul.f32 %v1970, %v1971
        %v1973 = vsub.f32 1.0, %v1972
        %v1974 = vmul.f32 %v1971, %v1973
        %v1975 = vadd.f32 %v1971, %v1974
        %vm1976 = vweird.f32 %v1970
        %vm1977 = vweird.f32 %v1971
        %vm1978 = vmor %vm1976, %vm1977
        %v1979 = vsel %vm1978, %v1971, %v1975
        %v1980 = vand.u32 2147483647, %v1970
        %vm1981 = vcmp.eq.f32.partialorder %v1980, 8.507059e+37
        %v1982 = vand.u32 %v1970, 2147483648
        %v1983 = vor.u32 1.1754944e-38, %v1982
        %v1984 = vsel %vm1981, %v1983, %v1979
        %v1985 = vmul.f32 %v1960, %v1984
        %v1986 = vmin.f32 %v1985, 1.0
        %v1987 = vmax.f32 %v1986, -1.0
        %v1988 = vmul.f32 %v1026, %v1026
        %v1989 = vmin.f32 16.0, %v1988
        %v1990 = vmul.f32 %v1989, 2.1237322e-06
        %v1991 = vadd.f32 %v1990, 0.00028619796
        %v1992 = vmul.f32 %v1989, %v1991
        %v1993 = vadd.f32 %v1992, 0.0036580483
        %v1994 = vmul.f32 %v1989, %v1993
        %v1995 = vadd.f32 %v1994, 0.05243302
        %v1996 = vmul.f32 %v1989, %v1995
        %v1997 = vadd.f32 %v1996, 0.18741608
        %v1998 = vmul.f32 %v1989, %v1997
        %v1999 = vadd.f32 %v1998, 1.1283791
        %v2000 = vmul.f32 %v1026, %v1999
        %v2001 = vmul.f32 %v1989, 3.8918573e-05
        %v2002 = vadd.f32 %v2001, 0.001143296
        %v2003 = vmul.f32 %v1989, %v2002
        %v2004 = vadd.f32 %v2003, 0.014752088
        %v2005 = vmul.f32 %v1989, %v2004
        %v2006 = vadd.f32 %v2005, 0.112945676
        %v2007 = vmul.f32 %v1989, %v2006
        %v2008 = vadd.f32 %v2007, 0.4994258
        %v2009 = vmul.f32 %v1989, %v2008
        %v2010 = vadd.f32 %v2009, 1.0
        %v2011 = vrcp.pop %v2010
        %v2012 = vmul.f32 %v2010, %v2011
        %v2013 = vsub.f32 1.0, %v2012
        %v2014 = vmul.f32 %v2011, %v2013
        %v2015 = vadd.f32 %v2011, %v2014
        %vm2016 = vweird.f32 %v2010
        %vm2017 = vweird.f32 %v2011
        %vm2018 = vmor %vm2016, %vm2017
        %v2019 = vsel %vm2018, %v2011, %v2015
        %v2020 = vand.u32 2147483647, %v2010
        %vm2021 = vcmp.eq.f32.partialorder %v2020, 8.507059e+37
        %v2022 = vand.u32 %v2010, 2147483648
        %v2023 = vor.u32 1.1754944e-38, %v2022
        %v2024 = vsel %vm2021, %v2023, %v2019
        %v2025 = vmul.f32 %v2000, %v2024
        %v2026 = vmin.f32 %v2025, 1.0
        %v2027 = vmax.f32 %v2026, -1.0
        %v2028 = vmul.f32 %v1027, %v1027
        %v2029 = vmin.f32 16.0, %v2028
        %v2030 = vmul.f32 %v2029, 2.1237322e-06
        %v2031 = vadd.f32 %v2030, 0.00028619796
        %v2032 = vmul.f32 %v2029, %v2031
        %v2033 = vadd.f32 %v2032, 0.0036580483
        %v2034 = vmul.f32 %v2029, %v2033
        %v2035 = vadd.f32 %v2034, 0.05243302
        %v2036 = vmul.f32 %v2029, %v2035
        %v2037 = vadd.f32 %v2036, 0.18741608
        %v2038 = vmul.f32 %v2029, %v2037
        %v2039 = vadd.f32 %v2038, 1.1283791
        %v2040 = vmul.f32 %v1027, %v2039
        %v2041 = vmul.f32 %v2029, 3.8918573e-05
        %v2042 = vadd.f32 %v2041, 0.001143296
        %v2043 = vmul.f32 %v2029, %v2042
        %v2044 = vadd.f32 %v2043, 0.014752088
        %v2045 = vmul.f32 %v2029, %v2044
        %v2046 = vadd.f32 %v2045, 0.112945676
        %v2047 = vmul.f32 %v2029, %v2046
        %v2048 = vadd.f32 %v2047, 0.4994258
        %v2049 = vmul.f32 %v2029, %v2048
        %v2050 = vadd.f32 %v2049, 1.0
        %v2051 = vrcp.pop %v2050
        %v2052 = vmul.f32 %v2050, %v2051
        %v2053 = vsub.f32 1.0, %v2052
        %v2054 = vmul.f32 %v2051, %v2053
        %v2055 = vadd.f32 %v2051, %v2054
        %vm2056 = vweird.f32 %v2050
        %vm2057 = vweird.f32 %v2051
        %vm2058 = vmor %vm2056, %vm2057
        %v2059 = vsel %vm2058, %v2051, %v2055
        %v2060 = vand.u32 2147483647, %v2050
        %vm2061 = vcmp.eq.f32.partialorder %v2060, 8.507059e+37
        %v2062 = vand.u32 %v2050, 2147483648
        %v2063 = vor.u32 1.1754944e-38, %v2062
        %v2064 = vsel %vm2061, %v2063, %v2059
        %v2065 = vmul.f32 %v2040, %v2064
        %v2066 = vmin.f32 %v2065, 1.0
        %v2067 = vmax.f32 %v2066, -1.0
        %v2068 = vmul.f32 %v1028, %v1028
        %v2069 = vmin.f32 16.0, %v2068
        %v2070 = vmul.f32 %v2069, 2.1237322e-06
        %v2071 = vadd.f32 %v2070, 0.00028619796
        %v2072 = vmul.f32 %v2069, %v2071
        %v2073 = vadd.f32 %v2072, 0.0036580483
        %v2074 = vmul.f32 %v2069, %v2073
        %v2075 = vadd.f32 %v2074, 0.05243302
        %v2076 = vmul.f32 %v2069, %v2075
        %v2077 = vadd.f32 %v2076, 0.18741608
        %v2078 = vmul.f32 %v2069, %v2077
        %v2079 = vadd.f32 %v2078, 1.1283791
        %v2080 = vmul.f32 %v1028, %v2079
        %v2081 = vmul.f32 %v2069, 3.8918573e-05
        %v2082 = vadd.f32 %v2081, 0.001143296
        %v2083 = vmul.f32 %v2069, %v2082
        %v2084 = vadd.f32 %v2083, 0.014752088
        %v2085 = vmul.f32 %v2069, %v2084
        %v2086 = vadd.f32 %v2085, 0.112945676
        %v2087 = vmul.f32 %v2069, %v2086
        %v2088 = vadd.f32 %v2087, 0.4994258
        %v2089 = vmul.f32 %v2069, %v2088
        %v2090 = vadd.f32 %v2089, 1.0
        %v2091 = vrcp.pop %v2090
        %v2092 = vmul.f32 %v2090, %v2091
        %v2093 = vsub.f32 1.0, %v2092
        %v2094 = vmul.f32 %v2091, %v2093
        %v2095 = vadd.f32 %v2091, %v2094
        %vm2096 = vweird.f32 %v2090
        %vm2097 = vweird.f32 %v2091
        %vm2098 = vmor %vm2096, %vm2097
        %v2099 = vsel %vm2098, %v2091, %v2095
        %v2100 = vand.u32 2147483647, %v2090
        %vm2101 = vcmp.eq.f32.partialorder %v2100, 8.507059e+37
        %v2102 = vand.u32 %v2090, 2147483648
        %v2103 = vor.u32 1.1754944e-38, %v2102
        %v2104 = vsel %vm2101, %v2103, %v2099
        %v2105 = vmul.f32 %v2080, %v2104
        %v2106 = vmin.f32 %v2105, 1.0
        %v2107 = vmax.f32 %v2106, -1.0
        %v2108 = vmul.f32 %v1029, %v1029
        %v2109 = vmin.f32 16.0, %v2108
        %v2110 = vmul.f32 %v2109, 2.1237322e-06
        %v2111 = vadd.f32 %v2110, 0.00028619796
        %v2112 = vmul.f32 %v2109, %v2111
        %v2113 = vadd.f32 %v2112, 0.0036580483
        %v2114 = vmul.f32 %v2109, %v2113
        %v2115 = vadd.f32 %v2114, 0.05243302
        %v2116 = vmul.f32 %v2109, %v2115
        %v2117 = vadd.f32 %v2116, 0.18741608
        %v2118 = vmul.f32 %v2109, %v2117
        %v2119 = vadd.f32 %v2118, 1.1283791
        %v2120 = vmul.f32 %v1029, %v2119
        %v2121 = vmul.f32 %v2109, 3.8918573e-05
        %v2122 = vadd.f32 %v2121, 0.001143296
        %v2123 = vmul.f32 %v2109, %v2122
        %v2124 = vadd.f32 %v2123, 0.014752088
        %v2125 = vmul.f32 %v2109, %v2124
        %v2126 = vadd.f32 %v2125, 0.112945676
        %v2127 = vmul.f32 %v2109, %v2126
        %v2128 = vadd.f32 %v2127, 0.4994258
        %v2129 = vmul.f32 %v2109, %v2128
        %v2130 = vadd.f32 %v2129, 1.0
        %v2131 = vrcp.pop %v2130
        %v2132 = vmul.f32 %v2130, %v2131
        %v2133 = vsub.f32 1.0, %v2132
        %v2134 = vmul.f32 %v2131, %v2133
        %v2135 = vadd.f32 %v2131, %v2134
        %vm2136 = vweird.f32 %v2130
        %vm2137 = vweird.f32 %v2131
        %vm2138 = vmor %vm2136, %vm2137
        %v2139 = vsel %vm2138, %v2131, %v2135
        %v2140 = vand.u32 2147483647, %v2130
        %vm2141 = vcmp.eq.f32.partialorder %v2140, 8.507059e+37
        %v2142 = vand.u32 %v2130, 2147483648
        %v2143 = vor.u32 1.1754944e-38, %v2142
        %v2144 = vsel %vm2141, %v2143, %v2139
        %v2145 = vmul.f32 %v2120, %v2144
        %v2146 = vmin.f32 %v2145, 1.0
        %v2147 = vmax.f32 %v2146, -1.0
        %v2148 = vmul.f32 %v1030, %v1030
        %v2149 = vmin.f32 16.0, %v2148
        %v2150 = vmul.f32 %v2149, 2.1237322e-06
        %v2151 = vadd.f32 %v2150, 0.00028619796
        %v2152 = vmul.f32 %v2149, %v2151
        %v2153 = vadd.f32 %v2152, 0.0036580483
        %v2154 = vmul.f32 %v2149, %v2153
        %v2155 = vadd.f32 %v2154, 0.05243302
        %v2156 = vmul.f32 %v2149, %v2155
        %v2157 = vadd.f32 %v2156, 0.18741608
        %v2158 = vmul.f32 %v2149, %v2157
        %v2159 = vadd.f32 %v2158, 1.1283791
        %v2160 = vmul.f32 %v1030, %v2159
        %v2161 = vmul.f32 %v2149, 3.8918573e-05
        %v2162 = vadd.f32 %v2161, 0.001143296
        %v2163 = vmul.f32 %v2149, %v2162
        %v2164 = vadd.f32 %v2163, 0.014752088
        %v2165 = vmul.f32 %v2149, %v2164
        %v2166 = vadd.f32 %v2165, 0.112945676
        %v2167 = vmul.f32 %v2149, %v2166
        %v2168 = vadd.f32 %v2167, 0.4994258
        %v2169 = vmul.f32 %v2149, %v2168
        %v2170 = vadd.f32 %v2169, 1.0
        %v2171 = vrcp.pop %v2170
        %v2172 = vmul.f32 %v2170, %v2171
        %v2173 = vsub.f32 1.0, %v2172
        %v2174 = vmul.f32 %v2171, %v2173
        %v2175 = vadd.f32 %v2171, %v2174
        %vm2176 = vweird.f32 %v2170
        %vm2177 = vweird.f32 %v2171
        %vm2178 = vmor %vm2176, %vm2177
        %v2179 = vsel %vm2178, %v2171, %v2175
        %v2180 = vand.u32 2147483647, %v2170
        %vm2181 = vcmp.eq.f32.partialorder %v2180, 8.507059e+37
        %v2182 = vand.u32 %v2170, 2147483648
        %v2183 = vor.u32 1.1754944e-38, %v2182
        %v2184 = vsel %vm2181, %v2183, %v2179
        %v2185 = vmul.f32 %v2160, %v2184
        %v2186 = vmin.f32 %v2185, 1.0
        %v2187 = vmax.f32 %v2186, -1.0
        %v2188 = vmul.f32 %v1031, %v1031
        %v2189 = vmin.f32 16.0, %v2188
        %v2190 = vmul.f32 %v2189, 2.1237322e-06
        %v2191 = vadd.f32 %v2190, 0.00028619796
        %v2192 = vmul.f32 %v2189, %v2191
        %v2193 = vadd.f32 %v2192, 0.0036580483
        %v2194 = vmul.f32 %v2189, %v2193
        %v2195 = vadd.f32 %v2194, 0.05243302
        %v2196 = vmul.f32 %v2189, %v2195
        %v2197 = vadd.f32 %v2196, 0.18741608
        %v2198 = vmul.f32 %v2189, %v2197
        %v2199 = vadd.f32 %v2198, 1.1283791
        %v2200 = vmul.f32 %v1031, %v2199
        %v2201 = vmul.f32 %v2189, 3.8918573e-05
        %v2202 = vadd.f32 %v2201, 0.001143296
        %v2203 = vmul.f32 %v2189, %v2202
        %v2204 = vadd.f32 %v2203, 0.014752088
        %v2205 = vmul.f32 %v2189, %v2204
        %v2206 = vadd.f32 %v2205, 0.112945676
        %v2207 = vmul.f32 %v2189, %v2206
        %v2208 = vadd.f32 %v2207, 0.4994258
        %v2209 = vmul.f32 %v2189, %v2208
        %v2210 = vadd.f32 %v2209, 1.0
        %v2211 = vrcp.pop %v2210
        %v2212 = vmul.f32 %v2210, %v2211
        %v2213 = vsub.f32 1.0, %v2212
        %v2214 = vmul.f32 %v2211, %v2213
        %v2215 = vadd.f32 %v2211, %v2214
        %vm2216 = vweird.f32 %v2210
        %vm2217 = vweird.f32 %v2211
        %vm2218 = vmor %vm2216, %vm2217
        %v2219 = vsel %vm2218, %v2211, %v2215
        %v2220 = vand.u32 2147483647, %v2210
        %vm2221 = vcmp.eq.f32.partialorder %v2220, 8.507059e+37
        %v2222 = vand.u32 %v2210, 2147483648
        %v2223 = vor.u32 1.1754944e-38, %v2222
        %v2224 = vsel %vm2221, %v2223, %v2219
        %v2225 = vmul.f32 %v2200, %v2224
        %v2226 = vmin.f32 %v2225, 1.0
        %v2227 = vmax.f32 %v2226, -1.0
        %v2228 = vmul.f32 %v1032, %v1032
        %v2229 = vmin.f32 16.0, %v2228
        %v2230 = vmul.f32 %v2229, 2.1237322e-06
        %v2231 = vadd.f32 %v2230, 0.00028619796
        %v2232 = vmul.f32 %v2229, %v2231
        %v2233 = vadd.f32 %v2232, 0.0036580483
        %v2234 = vmul.f32 %v2229, %v2233
        %v2235 = vadd.f32 %v2234, 0.05243302
        %v2236 = vmul.f32 %v2229, %v2235
        %v2237 = vadd.f32 %v2236, 0.18741608
        %v2238 = vmul.f32 %v2229, %v2237
        %v2239 = vadd.f32 %v2238, 1.1283791
        %v2240 = vmul.f32 %v1032, %v2239
        %v2241 = vmul.f32 %v2229, 3.8918573e-05
        %v2242 = vadd.f32 %v2241, 0.001143296
        %v2243 = vmul.f32 %v2229, %v2242
        %v2244 = vadd.f32 %v2243, 0.014752088
        %v2245 = vmul.f32 %v2229, %v2244
        %v2246 = vadd.f32 %v2245, 0.112945676
        %v2247 = vmul.f32 %v2229, %v2246
        %v2248 = vadd.f32 %v2247, 0.4994258
        %v2249 = vmul.f32 %v2229, %v2248
        %v2250 = vadd.f32 %v2249, 1.0
        %v2251 = vrcp.pop %v2250
        %v2252 = vmul.f32 %v2250, %v2251
        %v2253 = vsub.f32 1.0, %v2252
        %v2254 = vmul.f32 %v2251, %v2253
        %v2255 = vadd.f32 %v2251, %v2254
        %vm2256 = vweird.f32 %v2250
        %vm2257 = vweird.f32 %v2251
        %vm2258 = vmor %vm2256, %vm2257
        %v2259 = vsel %vm2258, %v2251, %v2255
        %v2260 = vand.u32 2147483647, %v2250
        %vm2261 = vcmp.eq.f32.partialorder %v2260, 8.507059e+37
        %v2262 = vand.u32 %v2250, 2147483648
        %v2263 = vor.u32 1.1754944e-38, %v2262
        %v2264 = vsel %vm2261, %v2263, %v2259
        %v2265 = vmul.f32 %v2240, %v2264
        %v2266 = vmin.f32 %v2265, 1.0
        %v2267 = vmax.f32 %v2266, -1.0
        %v2268 = vmul.f32 %v1033, %v1033
        %v2269 = vmin.f32 16.0, %v2268
        %v2270 = vmul.f32 %v2269, 2.1237322e-06
        %v2271 = vadd.f32 %v2270, 0.00028619796
        %v2272 = vmul.f32 %v2269, %v2271
        %v2273 = vadd.f32 %v2272, 0.0036580483
        %v2274 = vmul.f32 %v2269, %v2273
        %v2275 = vadd.f32 %v2274, 0.05243302
        %v2276 = vmul.f32 %v2269, %v2275
        %v2277 = vadd.f32 %v2276, 0.18741608
        %v2278 = vmul.f32 %v2269, %v2277
        %v2279 = vadd.f32 %v2278, 1.1283791
        %v2280 = vmul.f32 %v1033, %v2279
        %v2281 = vmul.f32 %v2269, 3.8918573e-05
        %v2282 = vadd.f32 %v2281, 0.001143296
        %v2283 = vmul.f32 %v2269, %v2282
        %v2284 = vadd.f32 %v2283, 0.014752088
        %v2285 = vmul.f32 %v2269, %v2284
        %v2286 = vadd.f32 %v2285, 0.112945676
        %v2287 = vmul.f32 %v2269, %v2286
        %v2288 = vadd.f32 %v2287, 0.4994258
        %v2289 = vmul.f32 %v2269, %v2288
        %v2290 = vadd.f32 %v2289, 1.0
        %v2291 = vrcp.pop %v2290
        %v2292 = vmul.f32 %v2290, %v2291
        %v2293 = vsub.f32 1.0, %v2292
        %v2294 = vmul.f32 %v2291, %v2293
        %v2295 = vadd.f32 %v2291, %v2294
        %vm2296 = vweird.f32 %v2290
        %vm2297 = vweird.f32 %v2291
        %vm2298 = vmor %vm2296, %vm2297
        %v2299 = vsel %vm2298, %v2291, %v2295
        %v2300 = vand.u32 2147483647, %v2290
        %vm2301 = vcmp.eq.f32.partialorder %v2300, 8.507059e+37
        %v2302 = vand.u32 %v2290, 2147483648
        %v2303 = vor.u32 1.1754944e-38, %v2302
        %v2304 = vsel %vm2301, %v2303, %v2299
        %v2305 = vmul.f32 %v2280, %v2304
        %v2306 = vmin.f32 %v2305, 1.0
        %v2307 = vmax.f32 %v2306, -1.0
        %v2308 = vmul.f32 %v1034, %v1034
        %v2309 = vmin.f32 16.0, %v2308
        %v2310 = vmul.f32 %v2309, 2.1237322e-06
        %v2311 = vadd.f32 %v2310, 0.00028619796
        %v2312 = vmul.f32 %v2309, %v2311
        %v2313 = vadd.f32 %v2312, 0.0036580483
        %v2314 = vmul.f32 %v2309, %v2313
        %v2315 = vadd.f32 %v2314, 0.05243302
        %v2316 = vmul.f32 %v2309, %v2315
        %v2317 = vadd.f32 %v2316, 0.18741608
        %v2318 = vmul.f32 %v2309, %v2317
        %v2319 = vadd.f32 %v2318, 1.1283791
        %v2320 = vmul.f32 %v1034, %v2319
        %v2321 = vmul.f32 %v2309, 3.8918573e-05
        %v2322 = vadd.f32 %v2321, 0.001143296
        %v2323 = vmul.f32 %v2309, %v2322
        %v2324 = vadd.f32 %v2323, 0.014752088
        %v2325 = vmul.f32 %v2309, %v2324
        %v2326 = vadd.f32 %v2325, 0.112945676
        %v2327 = vmul.f32 %v2309, %v2326
        %v2328 = vadd.f32 %v2327, 0.4994258
        %v2329 = vmul.f32 %v2309, %v2328
        %v2330 = vadd.f32 %v2329, 1.0
        %v2331 = vrcp.pop %v2330
        %v2332 = vmul.f32 %v2330, %v2331
        %v2333 = vsub.f32 1.0, %v2332
        %v2334 = vmul.f32 %v2331, %v2333
        %v2335 = vadd.f32 %v2331, %v2334
        %vm2336 = vweird.f32 %v2330
        %vm2337 = vweird.f32 %v2331
        %vm2338 = vmor %vm2336, %vm2337
        %v2339 = vsel %vm2338, %v2331, %v2335
        %v2340 = vand.u32 2147483647, %v2330
        %vm2341 = vcmp.eq.f32.partialorder %v2340, 8.507059e+37
        %v2342 = vand.u32 %v2330, 2147483648
        %v2343 = vor.u32 1.1754944e-38, %v2342
        %v2344 = vsel %vm2341, %v2343, %v2339
        %v2345 = vmul.f32 %v2320, %v2344
        %v2346 = vmin.f32 %v2345, 1.0
        %v2347 = vmax.f32 %v2346, -1.0
        %v2348 = vmul.f32 %v1035, %v1035
        %v2349 = vmin.f32 16.0, %v2348
        %v2350 = vmul.f32 %v2349, 2.1237322e-06
        %v2351 = vadd.f32 %v2350, 0.00028619796
        %v2352 = vmul.f32 %v2349, %v2351
        %v2353 = vadd.f32 %v2352, 0.0036580483
        %v2354 = vmul.f32 %v2349, %v2353
        %v2355 = vadd.f32 %v2354, 0.05243302
        %v2356 = vmul.f32 %v2349, %v2355
        %v2357 = vadd.f32 %v2356, 0.18741608
        %v2358 = vmul.f32 %v2349, %v2357
        %v2359 = vadd.f32 %v2358, 1.1283791
        %v2360 = vmul.f32 %v1035, %v2359
        %v2361 = vmul.f32 %v2349, 3.8918573e-05
        %v2362 = vadd.f32 %v2361, 0.001143296
        %v2363 = vmul.f32 %v2349, %v2362
        %v2364 = vadd.f32 %v2363, 0.014752088
        %v2365 = vmul.f32 %v2349, %v2364
        %v2366 = vadd.f32 %v2365, 0.112945676
        %v2367 = vmul.f32 %v2349, %v2366
        %v2368 = vadd.f32 %v2367, 0.4994258
        %v2369 = vmul.f32 %v2349, %v2368
        %v2370 = vadd.f32 %v2369, 1.0
        %v2371 = vrcp.pop %v2370
        %v2372 = vmul.f32 %v2370, %v2371
        %v2373 = vsub.f32 1.0, %v2372
        %v2374 = vmul.f32 %v2371, %v2373
        %v2375 = vadd.f32 %v2371, %v2374
        %vm2376 = vweird.f32 %v2370
        %vm2377 = vweird.f32 %v2371
        %vm2378 = vmor %vm2376, %vm2377
        %v2379 = vsel %vm2378, %v2371, %v2375
        %v2380 = vand.u32 2147483647, %v2370
        %vm2381 = vcmp.eq.f32.partialorder %v2380, 8.507059e+37
        %v2382 = vand.u32 %v2370, 2147483648
        %v2383 = vor.u32 1.1754944e-38, %v2382
        %v2384 = vsel %vm2381, %v2383, %v2379
        %v2385 = vmul.f32 %v2360, %v2384
        %v2386 = vmin.f32 %v2385, 1.0
        %v2387 = vmax.f32 %v2386, -1.0
        %v2388 = vmul.f32 %v1036, %v1036
        %v2389 = vmin.f32 16.0, %v2388
        %v2390 = vmul.f32 %v2389, 2.1237322e-06
        %v2391 = vadd.f32 %v2390, 0.00028619796
        %v2392 = vmul.f32 %v2389, %v2391
        %v2393 = vadd.f32 %v2392, 0.0036580483
        %v2394 = vmul.f32 %v2389, %v2393
        %v2395 = vadd.f32 %v2394, 0.05243302
        %v2396 = vmul.f32 %v2389, %v2395
        %v2397 = vadd.f32 %v2396, 0.18741608
        %v2398 = vmul.f32 %v2389, %v2397
        %v2399 = vadd.f32 %v2398, 1.1283791
        %v2400 = vmul.f32 %v1036, %v2399
        %v2401 = vmul.f32 %v2389, 3.8918573e-05
        %v2402 = vadd.f32 %v2401, 0.001143296
        %v2403 = vmul.f32 %v2389, %v2402
        %v2404 = vadd.f32 %v2403, 0.014752088
        %v2405 = vmul.f32 %v2389, %v2404
        %v2406 = vadd.f32 %v2405, 0.112945676
        %v2407 = vmul.f32 %v2389, %v2406
        %v2408 = vadd.f32 %v2407, 0.4994258
        %v2409 = vmul.f32 %v2389, %v2408
        %v2410 = vadd.f32 %v2409, 1.0
        %v2411 = vrcp.pop %v2410
        %v2412 = vmul.f32 %v2410, %v2411
        %v2413 = vsub.f32 1.0, %v2412
        %v2414 = vmul.f32 %v2411, %v2413
        %v2415 = vadd.f32 %v2411, %v2414
        %vm2416 = vweird.f32 %v2410
        %vm2417 = vweird.f32 %v2411
        %vm2418 = vmor %vm2416, %vm2417
        %v2419 = vsel %vm2418, %v2411, %v2415
        %v2420 = vand.u32 2147483647, %v2410
        %vm2421 = vcmp.eq.f32.partialorder %v2420, 8.507059e+37
        %v2422 = vand.u32 %v2410, 2147483648
        %v2423 = vor.u32 1.1754944e-38, %v2422
        %v2424 = vsel %vm2421, %v2423, %v2419
        %v2425 = vmul.f32 %v2400, %v2424
        %v2426 = vmin.f32 %v2425, 1.0
        %v2427 = vmax.f32 %v2426, -1.0
        %v2428 = vmul.f32 %v1037, %v1037
        %v2429 = vmin.f32 16.0, %v2428
        %v2430 = vmul.f32 %v2429, 2.1237322e-06
        %v2431 = vadd.f32 %v2430, 0.00028619796
        %v2432 = vmul.f32 %v2429, %v2431
        %v2433 = vadd.f32 %v2432, 0.0036580483
        %v2434 = vmul.f32 %v2429, %v2433
        %v2435 = vadd.f32 %v2434, 0.05243302
        %v2436 = vmul.f32 %v2429, %v2435
        %v2437 = vadd.f32 %v2436, 0.18741608
        %v2438 = vmul.f32 %v2429, %v2437
        %v2439 = vadd.f32 %v2438, 1.1283791
        %v2440 = vmul.f32 %v1037, %v2439
        %v2441 = vmul.f32 %v2429, 3.8918573e-05
        %v2442 = vadd.f32 %v2441, 0.001143296
        %v2443 = vmul.f32 %v2429, %v2442
        %v2444 = vadd.f32 %v2443, 0.014752088
        %v2445 = vmul.f32 %v2429, %v2444
        %v2446 = vadd.f32 %v2445, 0.112945676
        %v2447 = vmul.f32 %v2429, %v2446
        %v2448 = vadd.f32 %v2447, 0.4994258
        %v2449 = vmul.f32 %v2429, %v2448
        %v2450 = vadd.f32 %v2449, 1.0
        %v2451 = vrcp.pop %v2450
        %v2452 = vmul.f32 %v2450, %v2451
        %v2453 = vsub.f32 1.0, %v2452
        %v2454 = vmul.f32 %v2451, %v2453
        %v2455 = vadd.f32 %v2451, %v2454
        %vm2456 = vweird.f32 %v2450
        %vm2457 = vweird.f32 %v2451
        %vm2458 = vmor %vm2456, %vm2457
        %v2459 = vsel %vm2458, %v2451, %v2455
        %v2460 = vand.u32 2147483647, %v2450
        %vm2461 = vcmp.eq.f32.partialorder %v2460, 8.507059e+37
        %v2462 = vand.u32 %v2450, 2147483648
        %v2463 = vor.u32 1.1754944e-38, %v2462
        %v2464 = vsel %vm2461, %v2463, %v2459
        %v2465 = vmul.f32 %v2440, %v2464
        %v2466 = vmin.f32 %v2465, 1.0
        %v2467 = vmax.f32 %v2466, -1.0
        %v2468 = vmul.f32 %v1038, %v1038
        %v2469 = vmin.f32 16.0, %v2468
        %v2470 = vmul.f32 %v2469, 2.1237322e-06
        %v2471 = vadd.f32 %v2470, 0.00028619796
        %v2472 = vmul.f32 %v2469, %v2471
        %v2473 = vadd.f32 %v2472, 0.0036580483
        %v2474 = vmul.f32 %v2469, %v2473
        %v2475 = vadd.f32 %v2474, 0.05243302
        %v2476 = vmul.f32 %v2469, %v2475
        %v2477 = vadd.f32 %v2476, 0.18741608
        %v2478 = vmul.f32 %v2469, %v2477
        %v2479 = vadd.f32 %v2478, 1.1283791
        %v2480 = vmul.f32 %v1038, %v2479
        %v2481 = vmul.f32 %v2469, 3.8918573e-05
        %v2482 = vadd.f32 %v2481, 0.001143296
        %v2483 = vmul.f32 %v2469, %v2482
        %v2484 = vadd.f32 %v2483, 0.014752088
        %v2485 = vmul.f32 %v2469, %v2484
        %v2486 = vadd.f32 %v2485, 0.112945676
        %v2487 = vmul.f32 %v2469, %v2486
        %v2488 = vadd.f32 %v2487, 0.4994258
        %v2489 = vmul.f32 %v2469, %v2488
        %v2490 = vadd.f32 %v2489, 1.0
        %v2491 = vrcp.pop %v2490
        %v2492 = vmul.f32 %v2490, %v2491
        %v2493 = vsub.f32 1.0, %v2492
        %v2494 = vmul.f32 %v2491, %v2493
        %v2495 = vadd.f32 %v2491, %v2494
        %vm2496 = vweird.f32 %v2490
        %vm2497 = vweird.f32 %v2491
        %vm2498 = vmor %vm2496, %vm2497
        %v2499 = vsel %vm2498, %v2491, %v2495
        %v2500 = vand.u32 2147483647, %v2490
        %vm2501 = vcmp.eq.f32.partialorder %v2500, 8.507059e+37
        %v2502 = vand.u32 %v2490, 2147483648
        %v2503 = vor.u32 1.1754944e-38, %v2502
        %v2504 = vsel %vm2501, %v2503, %v2499
        %v2505 = vmul.f32 %v2480, %v2504
        %v2506 = vmin.f32 %v2505, 1.0
        %v2507 = vmax.f32 %v2506, -1.0
        %v2508 = vmul.f32 %v1039, %v1039
        %v2509 = vmin.f32 16.0, %v2508
        %v2510 = vmul.f32 %v2509, 2.1237322e-06
        %v2511 = vadd.f32 %v2510, 0.00028619796
        %v2512 = vmul.f32 %v2509, %v2511
        %v2513 = vadd.f32 %v2512, 0.0036580483
        %v2514 = vmul.f32 %v2509, %v2513
        %v2515 = vadd.f32 %v2514, 0.05243302
        %v2516 = vmul.f32 %v2509, %v2515
        %v2517 = vadd.f32 %v2516, 0.18741608
        %v2518 = vmul.f32 %v2509, %v2517
        %v2519 = vadd.f32 %v2518, 1.1283791
        %v2520 = vmul.f32 %v1039, %v2519
        %v2521 = vmul.f32 %v2509, 3.8918573e-05
        %v2522 = vadd.f32 %v2521, 0.001143296
        %v2523 = vmul.f32 %v2509, %v2522
        %v2524 = vadd.f32 %v2523, 0.014752088
        %v2525 = vmul.f32 %v2509, %v2524
        %v2526 = vadd.f32 %v2525, 0.112945676
        %v2527 = vmul.f32 %v2509, %v2526
        %v2528 = vadd.f32 %v2527, 0.4994258
        %v2529 = vmul.f32 %v2509, %v2528
        %v2530 = vadd.f32 %v2529, 1.0
        %v2531 = vrcp.pop %v2530
        %v2532 = vmul.f32 %v2530, %v2531
        %v2533 = vsub.f32 1.0, %v2532
        %v2534 = vmul.f32 %v2531, %v2533
        %v2535 = vadd.f32 %v2531, %v2534
        %vm2536 = vweird.f32 %v2530
        %vm2537 = vweird.f32 %v2531
        %vm2538 = vmor %vm2536, %vm2537
        %v2539 = vsel %vm2538, %v2531, %v2535
        %v2540 = vand.u32 2147483647, %v2530
        %vm2541 = vcmp.eq.f32.partialorder %v2540, 8.507059e+37
        %v2542 = vand.u32 %v2530, 2147483648
        %v2543 = vor.u32 1.1754944e-38, %v2542
        %v2544 = vsel %vm2541, %v2543, %v2539
        %v2545 = vmul.f32 %v2520, %v2544
        %v2546 = vmin.f32 %v2545, 1.0
        %v2547 = vmax.f32 %v2546, -1.0
        %v2548 = vmul.f32 %v1040, %v1040
        %v2549 = vmin.f32 16.0, %v2548
        %v2550 = vmul.f32 %v2549, 2.1237322e-06
        %v2551 = vadd.f32 %v2550, 0.00028619796
        %v2552 = vmul.f32 %v2549, %v2551
        %v2553 = vadd.f32 %v2552, 0.0036580483
        %v2554 = vmul.f32 %v2549, %v2553
        %v2555 = vadd.f32 %v2554, 0.05243302
        %v2556 = vmul.f32 %v2549, %v2555
        %v2557 = vadd.f32 %v2556, 0.18741608
        %v2558 = vmul.f32 %v2549, %v2557
        %v2559 = vadd.f32 %v2558, 1.1283791
        %v2560 = vmul.f32 %v1040, %v2559
        %v2561 = vmul.f32 %v2549, 3.8918573e-05
        %v2562 = vadd.f32 %v2561, 0.001143296
        %v2563 = vmul.f32 %v2549, %v2562
        %v2564 = vadd.f32 %v2563, 0.014752088
        %v2565 = vmul.f32 %v2549, %v2564
        %v2566 = vadd.f32 %v2565, 0.112945676
        %v2567 = vmul.f32 %v2549, %v2566
        %v2568 = vadd.f32 %v2567, 0.4994258
        %v2569 = vmul.f32 %v2549, %v2568
        %v2570 = vadd.f32 %v2569, 1.0
        %v2571 = vrcp.pop %v2570
        %v2572 = vmul.f32 %v2570, %v2571
        %v2573 = vsub.f32 1.0, %v2572
        %v2574 = vmul.f32 %v2571, %v2573
        %v2575 = vadd.f32 %v2571, %v2574
        %vm2576 = vweird.f32 %v2570
        %vm2577 = vweird.f32 %v2571
        %vm2578 = vmor %vm2576, %vm2577
        %v2579 = vsel %vm2578, %v2571, %v2575
        %v2580 = vand.u32 2147483647, %v2570
        %vm2581 = vcmp.eq.f32.partialorder %v2580, 8.507059e+37
        %v2582 = vand.u32 %v2570, 2147483648
        %v2583 = vor.u32 1.1754944e-38, %v2582
        %v2584 = vsel %vm2581, %v2583, %v2579
        %v2585 = vmul.f32 %v2560, %v2584
        %v2586 = vmin.f32 %v2585, 1.0
        %v2587 = vmax.f32 %v2586, -1.0
        %v2588 = vmul.f32 %v1041, %v1041
        %v2589 = vmin.f32 16.0, %v2588
        %v2590 = vmul.f32 %v2589, 2.1237322e-06
        %v2591 = vadd.f32 %v2590, 0.00028619796
        %v2592 = vmul.f32 %v2589, %v2591
        %v2593 = vadd.f32 %v2592, 0.0036580483
        %v2594 = vmul.f32 %v2589, %v2593
        %v2595 = vadd.f32 %v2594, 0.05243302
        %v2596 = vmul.f32 %v2589, %v2595
        %v2597 = vadd.f32 %v2596, 0.18741608
        %v2598 = vmul.f32 %v2589, %v2597
        %v2599 = vadd.f32 %v2598, 1.1283791
        %v2600 = vmul.f32 %v1041, %v2599
        %v2601 = vmul.f32 %v2589, 3.8918573e-05
        %v2602 = vadd.f32 %v2601, 0.001143296
        %v2603 = vmul.f32 %v2589, %v2602
        %v2604 = vadd.f32 %v2603, 0.014752088
        %v2605 = vmul.f32 %v2589, %v2604
        %v2606 = vadd.f32 %v2605, 0.112945676
        %v2607 = vmul.f32 %v2589, %v2606
        %v2608 = vadd.f32 %v2607, 0.4994258
        %v2609 = vmul.f32 %v2589, %v2608
        %v2610 = vadd.f32 %v2609, 1.0
        %v2611 = vrcp.pop %v2610
        %v2612 = vmul.f32 %v2610, %v2611
        %v2613 = vsub.f32 1.0, %v2612
        %v2614 = vmul.f32 %v2611, %v2613
        %v2615 = vadd.f32 %v2611, %v2614
        %vm2616 = vweird.f32 %v2610
        %vm2617 = vweird.f32 %v2611
        %vm2618 = vmor %vm2616, %vm2617
        %v2619 = vsel %vm2618, %v2611, %v2615
        %v2620 = vand.u32 2147483647, %v2610
        %vm2621 = vcmp.eq.f32.partialorder %v2620, 8.507059e+37
        %v2622 = vand.u32 %v2610, 2147483648
        %v2623 = vor.u32 1.1754944e-38, %v2622
        %v2624 = vsel %vm2621, %v2623, %v2619
        %v2625 = vmul.f32 %v2600, %v2624
        %v2626 = vmin.f32 %v2625, 1.0
        %v2627 = vmax.f32 %v2626, -1.0
        %v2628 = vmul.f32 %v1042, %v1042
        %v2629 = vmin.f32 16.0, %v2628
        %v2630 = vmul.f32 %v2629, 2.1237322e-06
        %v2631 = vadd.f32 %v2630, 0.00028619796
        %v2632 = vmul.f32 %v2629, %v2631
        %v2633 = vadd.f32 %v2632, 0.0036580483
        %v2634 = vmul.f32 %v2629, %v2633
        %v2635 = vadd.f32 %v2634, 0.05243302
        %v2636 = vmul.f32 %v2629, %v2635
        %v2637 = vadd.f32 %v2636, 0.18741608
        %v2638 = vmul.f32 %v2629, %v2637
        %v2639 = vadd.f32 %v2638, 1.1283791
        %v2640 = vmul.f32 %v1042, %v2639
        %v2641 = vmul.f32 %v2629, 3.8918573e-05
        %v2642 = vadd.f32 %v2641, 0.001143296
        %v2643 = vmul.f32 %v2629, %v2642
        %v2644 = vadd.f32 %v2643, 0.014752088
        %v2645 = vmul.f32 %v2629, %v2644
        %v2646 = vadd.f32 %v2645, 0.112945676
        %v2647 = vmul.f32 %v2629, %v2646
        %v2648 = vadd.f32 %v2647, 0.4994258
        %v2649 = vmul.f32 %v2629, %v2648
        %v2650 = vadd.f32 %v2649, 1.0
        %v2651 = vrcp.pop %v2650
        %v2652 = vmul.f32 %v2650, %v2651
        %v2653 = vsub.f32 1.0, %v2652
        %v2654 = vmul.f32 %v2651, %v2653
        %v2655 = vadd.f32 %v2651, %v2654
        %vm2656 = vweird.f32 %v2650
        %vm2657 = vweird.f32 %v2651
        %vm2658 = vmor %vm2656, %vm2657
        %v2659 = vsel %vm2658, %v2651, %v2655
        %v2660 = vand.u32 2147483647, %v2650
        %vm2661 = vcmp.eq.f32.partialorder %v2660, 8.507059e+37
        %v2662 = vand.u32 %v2650, 2147483648
        %v2663 = vor.u32 1.1754944e-38, %v2662
        %v2664 = vsel %vm2661, %v2663, %v2659
        %v2665 = vmul.f32 %v2640, %v2664
        %v2666 = vmin.f32 %v2665, 1.0
        %v2667 = vmax.f32 %v2666, -1.0
        %v2668 = vmul.f32 %v1043, %v1043
        %v2669 = vmin.f32 16.0, %v2668
        %v2670 = vmul.f32 %v2669, 2.1237322e-06
        %v2671 = vadd.f32 %v2670, 0.00028619796
        %v2672 = vmul.f32 %v2669, %v2671
        %v2673 = vadd.f32 %v2672, 0.0036580483
        %v2674 = vmul.f32 %v2669, %v2673
        %v2675 = vadd.f32 %v2674, 0.05243302
        %v2676 = vmul.f32 %v2669, %v2675
        %v2677 = vadd.f32 %v2676, 0.18741608
        %v2678 = vmul.f32 %v2669, %v2677
        %v2679 = vadd.f32 %v2678, 1.1283791
        %v2680 = vmul.f32 %v1043, %v2679
        %v2681 = vmul.f32 %v2669, 3.8918573e-05
        %v2682 = vadd.f32 %v2681, 0.001143296
        %v2683 = vmul.f32 %v2669, %v2682
        %v2684 = vadd.f32 %v2683, 0.014752088
        %v2685 = vmul.f32 %v2669, %v2684
        %v2686 = vadd.f32 %v2685, 0.112945676
        %v2687 = vmul.f32 %v2669, %v2686
        %v2688 = vadd.f32 %v2687, 0.4994258
        %v2689 = vmul.f32 %v2669, %v2688
        %v2690 = vadd.f32 %v2689, 1.0
        %v2691 = vrcp.pop %v2690
        %v2692 = vmul.f32 %v2690, %v2691
        %v2693 = vsub.f32 1.0, %v2692
        %v2694 = vmul.f32 %v2691, %v2693
        %v2695 = vadd.f32 %v2691, %v2694
        %vm2696 = vweird.f32 %v2690
        %vm2697 = vweird.f32 %v2691
        %vm2698 = vmor %vm2696, %vm2697
        %v2699 = vsel %vm2698, %v2691, %v2695
        %v2700 = vand.u32 2147483647, %v2690
        %vm2701 = vcmp.eq.f32.partialorder %v2700, 8.507059e+37
        %v2702 = vand.u32 %v2690, 2147483648
        %v2703 = vor.u32 1.1754944e-38, %v2702
        %v2704 = vsel %vm2701, %v2703, %v2699
        %v2705 = vmul.f32 %v2680, %v2704
        %v2706 = vmin.f32 %v2705, 1.0
        %v2707 = vmax.f32 %v2706, -1.0
        %v2708 = vmul.f32 %v1044, %v1044
        %v2709 = vmin.f32 16.0, %v2708
        %v2710 = vmul.f32 %v2709, 2.1237322e-06
        %v2711 = vadd.f32 %v2710, 0.00028619796
        %v2712 = vmul.f32 %v2709, %v2711
        %v2713 = vadd.f32 %v2712, 0.0036580483
        %v2714 = vmul.f32 %v2709, %v2713
        %v2715 = vadd.f32 %v2714, 0.05243302
        %v2716 = vmul.f32 %v2709, %v2715
        %v2717 = vadd.f32 %v2716, 0.18741608
        %v2718 = vmul.f32 %v2709, %v2717
        %v2719 = vadd.f32 %v2718, 1.1283791
        %v2720 = vmul.f32 %v1044, %v2719
        %v2721 = vmul.f32 %v2709, 3.8918573e-05
        %v2722 = vadd.f32 %v2721, 0.001143296
        %v2723 = vmul.f32 %v2709, %v2722
        %v2724 = vadd.f32 %v2723, 0.014752088
        %v2725 = vmul.f32 %v2709, %v2724
        %v2726 = vadd.f32 %v2725, 0.112945676
        %v2727 = vmul.f32 %v2709, %v2726
        %v2728 = vadd.f32 %v2727, 0.4994258
        %v2729 = vmul.f32 %v2709, %v2728
        %v2730 = vadd.f32 %v2729, 1.0
        %v2731 = vrcp.pop %v2730
        %v2732 = vmul.f32 %v2730, %v2731
        %v2733 = vsub.f32 1.0, %v2732
        %v2734 = vmul.f32 %v2731, %v2733
        %v2735 = vadd.f32 %v2731, %v2734
        %vm2736 = vweird.f32 %v2730
        %vm2737 = vweird.f32 %v2731
        %vm2738 = vmor %vm2736, %vm2737
        %v2739 = vsel %vm2738, %v2731, %v2735
        %v2740 = vand.u32 2147483647, %v2730
        %vm2741 = vcmp.eq.f32.partialorder %v2740, 8.507059e+37
        %v2742 = vand.u32 %v2730, 2147483648
        %v2743 = vor.u32 1.1754944e-38, %v2742
        %v2744 = vsel %vm2741, %v2743, %v2739
        %v2745 = vmul.f32 %v2720, %v2744
        %v2746 = vmin.f32 %v2745, 1.0
        %v2747 = vmax.f32 %v2746, -1.0
        %v2748 = vmul.f32 %v1045, %v1045
        %v2749 = vmin.f32 16.0, %v2748
        %v2750 = vmul.f32 %v2749, 2.1237322e-06
        %v2751 = vadd.f32 %v2750, 0.00028619796
        %v2752 = vmul.f32 %v2749, %v2751
        %v2753 = vadd.f32 %v2752, 0.0036580483
        %v2754 = vmul.f32 %v2749, %v2753
        %v2755 = vadd.f32 %v2754, 0.05243302
        %v2756 = vmul.f32 %v2749, %v2755
        %v2757 = vadd.f32 %v2756, 0.18741608
        %v2758 = vmul.f32 %v2749, %v2757
        %v2759 = vadd.f32 %v2758, 1.1283791
        %v2760 = vmul.f32 %v1045, %v2759
        %v2761 = vmul.f32 %v2749, 3.8918573e-05
        %v2762 = vadd.f32 %v2761, 0.001143296
        %v2763 = vmul.f32 %v2749, %v2762
        %v2764 = vadd.f32 %v2763, 0.014752088
        %v2765 = vmul.f32 %v2749, %v2764
        %v2766 = vadd.f32 %v2765, 0.112945676
        %v2767 = vmul.f32 %v2749, %v2766
        %v2768 = vadd.f32 %v2767, 0.4994258
        %v2769 = vmul.f32 %v2749, %v2768
        %v2770 = vadd.f32 %v2769, 1.0
        %v2771 = vrcp.pop %v2770
        %v2772 = vmul.f32 %v2770, %v2771
        %v2773 = vsub.f32 1.0, %v2772
        %v2774 = vmul.f32 %v2771, %v2773
        %v2775 = vadd.f32 %v2771, %v2774
        %vm2776 = vweird.f32 %v2770
        %vm2777 = vweird.f32 %v2771
        %vm2778 = vmor %vm2776, %vm2777
        %v2779 = vsel %vm2778, %v2771, %v2775
        %v2780 = vand.u32 2147483647, %v2770
        %vm2781 = vcmp.eq.f32.partialorder %v2780, 8.507059e+37
        %v2782 = vand.u32 %v2770, 2147483648
        %v2783 = vor.u32 1.1754944e-38, %v2782
        %v2784 = vsel %vm2781, %v2783, %v2779
        %v2785 = vmul.f32 %v2760, %v2784
        %v2786 = vmin.f32 %v2785, 1.0
        %v2787 = vmax.f32 %v2786, -1.0
        %v2788 = vmul.f32 %v1046, %v1046
        %v2789 = vmin.f32 16.0, %v2788
        %v2790 = vmul.f32 %v2789, 2.1237322e-06
        %v2791 = vadd.f32 %v2790, 0.00028619796
        %v2792 = vmul.f32 %v2789, %v2791
        %v2793 = vadd.f32 %v2792, 0.0036580483
        %v2794 = vmul.f32 %v2789, %v2793
        %v2795 = vadd.f32 %v2794, 0.05243302
        %v2796 = vmul.f32 %v2789, %v2795
        %v2797 = vadd.f32 %v2796, 0.18741608
        %v2798 = vmul.f32 %v2789, %v2797
        %v2799 = vadd.f32 %v2798, 1.1283791
        %v2800 = vmul.f32 %v1046, %v2799
        %v2801 = vmul.f32 %v2789, 3.8918573e-05
        %v2802 = vadd.f32 %v2801, 0.001143296
        %v2803 = vmul.f32 %v2789, %v2802
        %v2804 = vadd.f32 %v2803, 0.014752088
        %v2805 = vmul.f32 %v2789, %v2804
        %v2806 = vadd.f32 %v2805, 0.112945676
        %v2807 = vmul.f32 %v2789, %v2806
        %v2808 = vadd.f32 %v2807, 0.4994258
        %v2809 = vmul.f32 %v2789, %v2808
        %v2810 = vadd.f32 %v2809, 1.0
        %v2811 = vrcp.pop %v2810
        %v2812 = vmul.f32 %v2810, %v2811
        %v2813 = vsub.f32 1.0, %v2812
        %v2814 = vmul.f32 %v2811, %v2813
        %v2815 = vadd.f32 %v2811, %v2814
        %vm2816 = vweird.f32 %v2810
        %vm2817 = vweird.f32 %v2811
        %vm2818 = vmor %vm2816, %vm2817
        %v2819 = vsel %vm2818, %v2811, %v2815
        %v2820 = vand.u32 2147483647, %v2810
        %vm2821 = vcmp.eq.f32.partialorder %v2820, 8.507059e+37
        %v2822 = vand.u32 %v2810, 2147483648
        %v2823 = vor.u32 1.1754944e-38, %v2822
        %v2824 = vsel %vm2821, %v2823, %v2819
        %v2825 = vmul.f32 %v2800, %v2824
        %v2826 = vmin.f32 %v2825, 1.0
        %v2827 = vmax.f32 %v2826, -1.0
        %v2828 = vmul.f32 %v1047, %v1047
        %v2829 = vmin.f32 16.0, %v2828
        %v2830 = vmul.f32 %v2829, 2.1237322e-06
        %v2831 = vadd.f32 %v2830, 0.00028619796
        %v2832 = vmul.f32 %v2829, %v2831
        %v2833 = vadd.f32 %v2832, 0.0036580483
        %v2834 = vmul.f32 %v2829, %v2833
        %v2835 = vadd.f32 %v2834, 0.05243302
        %v2836 = vmul.f32 %v2829, %v2835
        %v2837 = vadd.f32 %v2836, 0.18741608
        %v2838 = vmul.f32 %v2829, %v2837
        %v2839 = vadd.f32 %v2838, 1.1283791
        %v2840 = vmul.f32 %v1047, %v2839
        %v2841 = vmul.f32 %v2829, 3.8918573e-05
        %v2842 = vadd.f32 %v2841, 0.001143296
        %v2843 = vmul.f32 %v2829, %v2842
        %v2844 = vadd.f32 %v2843, 0.014752088
        %v2845 = vmul.f32 %v2829, %v2844
        %v2846 = vadd.f32 %v2845, 0.112945676
        %v2847 = vmul.f32 %v2829, %v2846
        %v2848 = vadd.f32 %v2847, 0.4994258
        %v2849 = vmul.f32 %v2829, %v2848
        %v2850 = vadd.f32 %v2849, 1.0
        %v2851 = vrcp.pop %v2850
        %v2852 = vmul.f32 %v2850, %v2851
        %v2853 = vsub.f32 1.0, %v2852
        %v2854 = vmul.f32 %v2851, %v2853
        %v2855 = vadd.f32 %v2851, %v2854
        %vm2856 = vweird.f32 %v2850
        %vm2857 = vweird.f32 %v2851
        %vm2858 = vmor %vm2856, %vm2857
        %v2859 = vsel %vm2858, %v2851, %v2855
        %v2860 = vand.u32 2147483647, %v2850
        %vm2861 = vcmp.eq.f32.partialorder %v2860, 8.507059e+37
        %v2862 = vand.u32 %v2850, 2147483648
        %v2863 = vor.u32 1.1754944e-38, %v2862
        %v2864 = vsel %vm2861, %v2863, %v2859
        %v2865 = vmul.f32 %v2840, %v2864
        %v2866 = vmin.f32 %v2865, 1.0
        %v2867 = vmax.f32 %v2866, -1.0
        %v2868 = vmul.f32 %v1048, %v1048
        %v2869 = vmin.f32 16.0, %v2868
        %v2870 = vmul.f32 %v2869, 2.1237322e-06
        %v2871 = vadd.f32 %v2870, 0.00028619796
        %v2872 = vmul.f32 %v2869, %v2871
        %v2873 = vadd.f32 %v2872, 0.0036580483
        %v2874 = vmul.f32 %v2869, %v2873
        %v2875 = vadd.f32 %v2874, 0.05243302
        %v2876 = vmul.f32 %v2869, %v2875
        %v2877 = vadd.f32 %v2876, 0.18741608
        %v2878 = vmul.f32 %v2869, %v2877
        %v2879 = vadd.f32 %v2878, 1.1283791
        %v2880 = vmul.f32 %v1048, %v2879
        %v2881 = vmul.f32 %v2869, 3.8918573e-05
        %v2882 = vadd.f32 %v2881, 0.001143296
        %v2883 = vmul.f32 %v2869, %v2882
        %v2884 = vadd.f32 %v2883, 0.014752088
        %v2885 = vmul.f32 %v2869, %v2884
        %v2886 = vadd.f32 %v2885, 0.112945676
        %v2887 = vmul.f32 %v2869, %v2886
        %v2888 = vadd.f32 %v2887, 0.4994258
        %v2889 = vmul.f32 %v2869, %v2888
        %v2890 = vadd.f32 %v2889, 1.0
        %v2891 = vrcp.pop %v2890
        %v2892 = vmul.f32 %v2890, %v2891
        %v2893 = vsub.f32 1.0, %v2892
        %v2894 = vmul.f32 %v2891, %v2893
        %v2895 = vadd.f32 %v2891, %v2894
        %vm2896 = vweird.f32 %v2890
        %vm2897 = vweird.f32 %v2891
        %vm2898 = vmor %vm2896, %vm2897
        %v2899 = vsel %vm2898, %v2891, %v2895
        %v2900 = vand.u32 2147483647, %v2890
        %vm2901 = vcmp.eq.f32.partialorder %v2900, 8.507059e+37
        %v2902 = vand.u32 %v2890, 2147483648
        %v2903 = vor.u32 1.1754944e-38, %v2902
        %v2904 = vsel %vm2901, %v2903, %v2899
        %v2905 = vmul.f32 %v2880, %v2904
        %v2906 = vmin.f32 %v2905, 1.0
        %v2907 = vmax.f32 %v2906, -1.0
        %v2908 = vmul.f32 %v1049, %v1049
        %v2909 = vmin.f32 16.0, %v2908
        %v2910 = vmul.f32 %v2909, 2.1237322e-06
        %v2911 = vadd.f32 %v2910, 0.00028619796
        %v2912 = vmul.f32 %v2909, %v2911
        %v2913 = vadd.f32 %v2912, 0.0036580483
        %v2914 = vmul.f32 %v2909, %v2913
        %v2915 = vadd.f32 %v2914, 0.05243302
        %v2916 = vmul.f32 %v2909, %v2915
        %v2917 = vadd.f32 %v2916, 0.18741608
        %v2918 = vmul.f32 %v2909, %v2917
        %v2919 = vadd.f32 %v2918, 1.1283791
        %v2920 = vmul.f32 %v1049, %v2919
        %v2921 = vmul.f32 %v2909, 3.8918573e-05
        %v2922 = vadd.f32 %v2921, 0.001143296
        %v2923 = vmul.f32 %v2909, %v2922
        %v2924 = vadd.f32 %v2923, 0.014752088
        %v2925 = vmul.f32 %v2909, %v2924
        %v2926 = vadd.f32 %v2925, 0.112945676
        %v2927 = vmul.f32 %v2909, %v2926
        %v2928 = vadd.f32 %v2927, 0.4994258
        %v2929 = vmul.f32 %v2909, %v2928
        %v2930 = vadd.f32 %v2929, 1.0
        %v2931 = vrcp.pop %v2930
        %v2932 = vmul.f32 %v2930, %v2931
        %v2933 = vsub.f32 1.0, %v2932
        %v2934 = vmul.f32 %v2931, %v2933
        %v2935 = vadd.f32 %v2931, %v2934
        %vm2936 = vweird.f32 %v2930
        %vm2937 = vweird.f32 %v2931
        %vm2938 = vmor %vm2936, %vm2937
        %v2939 = vsel %vm2938, %v2931, %v2935
        %v2940 = vand.u32 2147483647, %v2930
        %vm2941 = vcmp.eq.f32.partialorder %v2940, 8.507059e+37
        %v2942 = vand.u32 %v2930, 2147483648
        %v2943 = vor.u32 1.1754944e-38, %v2942
        %v2944 = vsel %vm2941, %v2943, %v2939
        %v2945 = vmul.f32 %v2920, %v2944
        %v2946 = vmin.f32 %v2945, 1.0
        %v2947 = vmax.f32 %v2946, -1.0
        %v2948 = vmul.f32 %v1050, %v1050
        %v2949 = vmin.f32 16.0, %v2948
        %v2950 = vmul.f32 %v2949, 2.1237322e-06
        %v2951 = vadd.f32 %v2950, 0.00028619796
        %v2952 = vmul.f32 %v2949, %v2951
        %v2953 = vadd.f32 %v2952, 0.0036580483
        %v2954 = vmul.f32 %v2949, %v2953
        %v2955 = vadd.f32 %v2954, 0.05243302
        %v2956 = vmul.f32 %v2949, %v2955
        %v2957 = vadd.f32 %v2956, 0.18741608
        %v2958 = vmul.f32 %v2949, %v2957
        %v2959 = vadd.f32 %v2958, 1.1283791
        %v2960 = vmul.f32 %v1050, %v2959
        %v2961 = vmul.f32 %v2949, 3.8918573e-05
        %v2962 = vadd.f32 %v2961, 0.001143296
        %v2963 = vmul.f32 %v2949, %v2962
        %v2964 = vadd.f32 %v2963, 0.014752088
        %v2965 = vmul.f32 %v2949, %v2964
        %v2966 = vadd.f32 %v2965, 0.112945676
        %v2967 = vmul.f32 %v2949, %v2966
        %v2968 = vadd.f32 %v2967, 0.4994258
        %v2969 = vmul.f32 %v2949, %v2968
        %v2970 = vadd.f32 %v2969, 1.0
        %v2971 = vrcp.pop %v2970
        %v2972 = vmul.f32 %v2970, %v2971
        %v2973 = vsub.f32 1.0, %v2972
        %v2974 = vmul.f32 %v2971, %v2973
        %v2975 = vadd.f32 %v2971, %v2974
        %vm2976 = vweird.f32 %v2970
        %vm2977 = vweird.f32 %v2971
        %vm2978 = vmor %vm2976, %vm2977
        %v2979 = vsel %vm2978, %v2971, %v2975
        %v2980 = vand.u32 2147483647, %v2970
        %vm2981 = vcmp.eq.f32.partialorder %v2980, 8.507059e+37
        %v2982 = vand.u32 %v2970, 2147483648
        %v2983 = vor.u32 1.1754944e-38, %v2982
        %v2984 = vsel %vm2981, %v2983, %v2979
        %v2985 = vmul.f32 %v2960, %v2984
        %v2986 = vmin.f32 %v2985, 1.0
        %v2987 = vmax.f32 %v2986, -1.0
        %v2988 = vmul.f32 %v1051, %v1051
        %v2989 = vmin.f32 16.0, %v2988
        %v2990 = vmul.f32 %v2989, 2.1237322e-06
        %v2991 = vadd.f32 %v2990, 0.00028619796
        %v2992 = vmul.f32 %v2989, %v2991
        %v2993 = vadd.f32 %v2992, 0.0036580483
        %v2994 = vmul.f32 %v2989, %v2993
        %v2995 = vadd.f32 %v2994, 0.05243302
        %v2996 = vmul.f32 %v2989, %v2995
        %v2997 = vadd.f32 %v2996, 0.18741608
        %v2998 = vmul.f32 %v2989, %v2997
        %v2999 = vadd.f32 %v2998, 1.1283791
        %v3000 = vmul.f32 %v1051, %v2999
        %v3001 = vmul.f32 %v2989, 3.8918573e-05
        %v3002 = vadd.f32 %v3001, 0.001143296
        %v3003 = vmul.f32 %v2989, %v3002
        %v3004 = vadd.f32 %v3003, 0.014752088
        %v3005 = vmul.f32 %v2989, %v3004
        %v3006 = vadd.f32 %v3005, 0.112945676
        %v3007 = vmul.f32 %v2989, %v3006
        %v3008 = vadd.f32 %v3007, 0.4994258
        %v3009 = vmul.f32 %v2989, %v3008
        %v3010 = vadd.f32 %v3009, 1.0
        %v3011 = vrcp.pop %v3010
        %v3012 = vmul.f32 %v3010, %v3011
        %v3013 = vsub.f32 1.0, %v3012
        %v3014 = vmul.f32 %v3011, %v3013
        %v3015 = vadd.f32 %v3011, %v3014
        %vm3016 = vweird.f32 %v3010
        %vm3017 = vweird.f32 %v3011
        %vm3018 = vmor %vm3016, %vm3017
        %v3019 = vsel %vm3018, %v3011, %v3015
        %v3020 = vand.u32 2147483647, %v3010
        %vm3021 = vcmp.eq.f32.partialorder %v3020, 8.507059e+37
        %v3022 = vand.u32 %v3010, 2147483648
        %v3023 = vor.u32 1.1754944e-38, %v3022
        %v3024 = vsel %vm3021, %v3023, %v3019
        %v3025 = vmul.f32 %v3000, %v3024
        %v3026 = vmin.f32 %v3025, 1.0
        %v3027 = vmax.f32 %v3026, -1.0
        %v3028 = vmul.f32 %v1052, %v1052
        %v3029 = vmin.f32 16.0, %v3028
        %v3030 = vmul.f32 %v3029, 2.1237322e-06
        %v3031 = vadd.f32 %v3030, 0.00028619796
        %v3032 = vmul.f32 %v3029, %v3031
        %v3033 = vadd.f32 %v3032, 0.0036580483
        %v3034 = vmul.f32 %v3029, %v3033
        %v3035 = vadd.f32 %v3034, 0.05243302
        %v3036 = vmul.f32 %v3029, %v3035
        %v3037 = vadd.f32 %v3036, 0.18741608
        %v3038 = vmul.f32 %v3029, %v3037
        %v3039 = vadd.f32 %v3038, 1.1283791
        %v3040 = vmul.f32 %v1052, %v3039
        %v3041 = vmul.f32 %v3029, 3.8918573e-05
        %v3042 = vadd.f32 %v3041, 0.001143296
        %v3043 = vmul.f32 %v3029, %v3042
        %v3044 = vadd.f32 %v3043, 0.014752088
        %v3045 = vmul.f32 %v3029, %v3044
        %v3046 = vadd.f32 %v3045, 0.112945676
        %v3047 = vmul.f32 %v3029, %v3046
        %v3048 = vadd.f32 %v3047, 0.4994258
        %v3049 = vmul.f32 %v3029, %v3048
        %v3050 = vadd.f32 %v3049, 1.0
        %v3051 = vrcp.pop %v3050
        %v3052 = vmul.f32 %v3050, %v3051
        %v3053 = vsub.f32 1.0, %v3052
        %v3054 = vmul.f32 %v3051, %v3053
        %v3055 = vadd.f32 %v3051, %v3054
        %vm3056 = vweird.f32 %v3050
        %vm3057 = vweird.f32 %v3051
        %vm3058 = vmor %vm3056, %vm3057
        %v3059 = vsel %vm3058, %v3051, %v3055
        %v3060 = vand.u32 2147483647, %v3050
        %vm3061 = vcmp.eq.f32.partialorder %v3060, 8.507059e+37
        %v3062 = vand.u32 %v3050, 2147483648
        %v3063 = vor.u32 1.1754944e-38, %v3062
        %v3064 = vsel %vm3061, %v3063, %v3059
        %v3065 = vmul.f32 %v3040, %v3064
        %v3066 = vmin.f32 %v3065, 1.0
        %v3067 = vmax.f32 %v3066, -1.0
        %v3068 = vmul.f32 %v1053, %v1053
        %v3069 = vmin.f32 16.0, %v3068
        %v3070 = vmul.f32 %v3069, 2.1237322e-06
        %v3071 = vadd.f32 %v3070, 0.00028619796
        %v3072 = vmul.f32 %v3069, %v3071
        %v3073 = vadd.f32 %v3072, 0.0036580483
        %v3074 = vmul.f32 %v3069, %v3073
        %v3075 = vadd.f32 %v3074, 0.05243302
        %v3076 = vmul.f32 %v3069, %v3075
        %v3077 = vadd.f32 %v3076, 0.18741608
        %v3078 = vmul.f32 %v3069, %v3077
        %v3079 = vadd.f32 %v3078, 1.1283791
        %v3080 = vmul.f32 %v1053, %v3079
        %v3081 = vmul.f32 %v3069, 3.8918573e-05
        %v3082 = vadd.f32 %v3081, 0.001143296
        %v3083 = vmul.f32 %v3069, %v3082
        %v3084 = vadd.f32 %v3083, 0.014752088
        %v3085 = vmul.f32 %v3069, %v3084
        %v3086 = vadd.f32 %v3085, 0.112945676
        %v3087 = vmul.f32 %v3069, %v3086
        %v3088 = vadd.f32 %v3087, 0.4994258
        %v3089 = vmul.f32 %v3069, %v3088
        %v3090 = vadd.f32 %v3089, 1.0
        %v3091 = vrcp.pop %v3090
        %v3092 = vmul.f32 %v3090, %v3091
        %v3093 = vsub.f32 1.0, %v3092
        %v3094 = vmul.f32 %v3091, %v3093
        %v3095 = vadd.f32 %v3091, %v3094
        %vm3096 = vweird.f32 %v3090
        %vm3097 = vweird.f32 %v3091
        %vm3098 = vmor %vm3096, %vm3097
        %v3099 = vsel %vm3098, %v3091, %v3095
        %v3100 = vand.u32 2147483647, %v3090
        %vm3101 = vcmp.eq.f32.partialorder %v3100, 8.507059e+37
        %v3102 = vand.u32 %v3090, 2147483648
        %v3103 = vor.u32 1.1754944e-38, %v3102
        %v3104 = vsel %vm3101, %v3103, %v3099
        %v3105 = vmul.f32 %v3080, %v3104
        %v3106 = vmin.f32 %v3105, 1.0
        %v3107 = vmax.f32 %v3106, -1.0
        %v3108 = vmul.f32 %v1054, %v1054
        %v3109 = vmin.f32 16.0, %v3108
        %v3110 = vmul.f32 %v3109, 2.1237322e-06
        %v3111 = vadd.f32 %v3110, 0.00028619796
        %v3112 = vmul.f32 %v3109, %v3111
        %v3113 = vadd.f32 %v3112, 0.0036580483
        %v3114 = vmul.f32 %v3109, %v3113
        %v3115 = vadd.f32 %v3114, 0.05243302
        %v3116 = vmul.f32 %v3109, %v3115
        %v3117 = vadd.f32 %v3116, 0.18741608
        %v3118 = vmul.f32 %v3109, %v3117
        %v3119 = vadd.f32 %v3118, 1.1283791
        %v3120 = vmul.f32 %v1054, %v3119
        %v3121 = vmul.f32 %v3109, 3.8918573e-05
        %v3122 = vadd.f32 %v3121, 0.001143296
        %v3123 = vmul.f32 %v3109, %v3122
        %v3124 = vadd.f32 %v3123, 0.014752088
        %v3125 = vmul.f32 %v3109, %v3124
        %v3126 = vadd.f32 %v3125, 0.112945676
        %v3127 = vmul.f32 %v3109, %v3126
        %v3128 = vadd.f32 %v3127, 0.4994258
        %v3129 = vmul.f32 %v3109, %v3128
        %v3130 = vadd.f32 %v3129, 1.0
        %v3131 = vrcp.pop %v3130
        %v3132 = vmul.f32 %v3130, %v3131
        %v3133 = vsub.f32 1.0, %v3132
        %v3134 = vmul.f32 %v3131, %v3133
        %v3135 = vadd.f32 %v3131, %v3134
        %vm3136 = vweird.f32 %v3130
        %vm3137 = vweird.f32 %v3131
        %vm3138 = vmor %vm3136, %vm3137
        %v3139 = vsel %vm3138, %v3131, %v3135
        %v3140 = vand.u32 2147483647, %v3130
        %vm3141 = vcmp.eq.f32.partialorder %v3140, 8.507059e+37
        %v3142 = vand.u32 %v3130, 2147483648
        %v3143 = vor.u32 1.1754944e-38, %v3142
        %v3144 = vsel %vm3141, %v3143, %v3139
        %v3145 = vmul.f32 %v3120, %v3144
        %v3146 = vmin.f32 %v3145, 1.0
        %v3147 = vmax.f32 %v3146, -1.0
        %v3148 = vmul.f32 %v1055, %v1055
        %v3149 = vmin.f32 16.0, %v3148
        %v3150 = vmul.f32 %v3149, 2.1237322e-06
        %v3151 = vadd.f32 %v3150, 0.00028619796
        %v3152 = vmul.f32 %v3149, %v3151
        %v3153 = vadd.f32 %v3152, 0.0036580483
        %v3154 = vmul.f32 %v3149, %v3153
        %v3155 = vadd.f32 %v3154, 0.05243302
        %v3156 = vmul.f32 %v3149, %v3155
        %v3157 = vadd.f32 %v3156, 0.18741608
        %v3158 = vmul.f32 %v3149, %v3157
        %v3159 = vadd.f32 %v3158, 1.1283791
        %v3160 = vmul.f32 %v1055, %v3159
        %v3161 = vmul.f32 %v3149, 3.8918573e-05
        %v3162 = vadd.f32 %v3161, 0.001143296
        %v3163 = vmul.f32 %v3149, %v3162
        %v3164 = vadd.f32 %v3163, 0.014752088
        %v3165 = vmul.f32 %v3149, %v3164
        %v3166 = vadd.f32 %v3165, 0.112945676
        %v3167 = vmul.f32 %v3149, %v3166
        %v3168 = vadd.f32 %v3167, 0.4994258
        %v3169 = vmul.f32 %v3149, %v3168
        %v3170 = vadd.f32 %v3169, 1.0
        %v3171 = vrcp.pop %v3170
        %v3172 = vmul.f32 %v3170, %v3171
        %v3173 = vsub.f32 1.0, %v3172
        %v3174 = vmul.f32 %v3171, %v3173
        %v3175 = vadd.f32 %v3171, %v3174
        %vm3176 = vweird.f32 %v3170
        %vm3177 = vweird.f32 %v3171
        %vm3178 = vmor %vm3176, %vm3177
        %v3179 = vsel %vm3178, %v3171, %v3175
        %v3180 = vand.u32 2147483647, %v3170
        %vm3181 = vcmp.eq.f32.partialorder %v3180, 8.507059e+37
        %v3182 = vand.u32 %v3170, 2147483648
        %v3183 = vor.u32 1.1754944e-38, %v3182
        %v3184 = vsel %vm3181, %v3183, %v3179
        %v3185 = vmul.f32 %v3160, %v3184
        %v3186 = vmin.f32 %v3185, 1.0
        %v3187 = vmax.f32 %v3186, -1.0
        %v3188 = vmul.f32 %v1056, %v1056
        %v3189 = vmin.f32 16.0, %v3188
        %v3190 = vmul.f32 %v3189, 2.1237322e-06
        %v3191 = vadd.f32 %v3190, 0.00028619796
        %v3192 = vmul.f32 %v3189, %v3191
        %v3193 = vadd.f32 %v3192, 0.0036580483
        %v3194 = vmul.f32 %v3189, %v3193
        %v3195 = vadd.f32 %v3194, 0.05243302
        %v3196 = vmul.f32 %v3189, %v3195
        %v3197 = vadd.f32 %v3196, 0.18741608
        %v3198 = vmul.f32 %v3189, %v3197
        %v3199 = vadd.f32 %v3198, 1.1283791
        %v3200 = vmul.f32 %v1056, %v3199
        %v3201 = vmul.f32 %v3189, 3.8918573e-05
        %v3202 = vadd.f32 %v3201, 0.001143296
        %v3203 = vmul.f32 %v3189, %v3202
        %v3204 = vadd.f32 %v3203, 0.014752088
        %v3205 = vmul.f32 %v3189, %v3204
        %v3206 = vadd.f32 %v3205, 0.112945676
        %v3207 = vmul.f32 %v3189, %v3206
        %v3208 = vadd.f32 %v3207, 0.4994258
        %v3209 = vmul.f32 %v3189, %v3208
        %v3210 = vadd.f32 %v3209, 1.0
        %v3211 = vrcp.pop %v3210
        %v3212 = vmul.f32 %v3210, %v3211
        %v3213 = vsub.f32 1.0, %v3212
        %v3214 = vmul.f32 %v3211, %v3213
        %v3215 = vadd.f32 %v3211, %v3214
        %vm3216 = vweird.f32 %v3210
        %vm3217 = vweird.f32 %v3211
        %vm3218 = vmor %vm3216, %vm3217
        %v3219 = vsel %vm3218, %v3211, %v3215
        %v3220 = vand.u32 2147483647, %v3210
        %vm3221 = vcmp.eq.f32.partialorder %v3220, 8.507059e+37
        %v3222 = vand.u32 %v3210, 2147483648
        %v3223 = vor.u32 1.1754944e-38, %v3222
        %v3224 = vsel %vm3221, %v3223, %v3219
        %v3225 = vmul.f32 %v3200, %v3224
        %v3226 = vmin.f32 %v3225, 1.0
        %v3227 = vmax.f32 %v3226, -1.0
        %v3228 = vmul.f32 %v1057, %v1057
        %v3229 = vmin.f32 16.0, %v3228
        %v3230 = vmul.f32 %v3229, 2.1237322e-06
        %v3231 = vadd.f32 %v3230, 0.00028619796
        %v3232 = vmul.f32 %v3229, %v3231
        %v3233 = vadd.f32 %v3232, 0.0036580483
        %v3234 = vmul.f32 %v3229, %v3233
        %v3235 = vadd.f32 %v3234, 0.05243302
        %v3236 = vmul.f32 %v3229, %v3235
        %v3237 = vadd.f32 %v3236, 0.18741608
        %v3238 = vmul.f32 %v3229, %v3237
        %v3239 = vadd.f32 %v3238, 1.1283791
        %v3240 = vmul.f32 %v1057, %v3239
        %v3241 = vmul.f32 %v3229, 3.8918573e-05
        %v3242 = vadd.f32 %v3241, 0.001143296
        %v3243 = vmul.f32 %v3229, %v3242
        %v3244 = vadd.f32 %v3243, 0.014752088
        %v3245 = vmul.f32 %v3229, %v3244
        %v3246 = vadd.f32 %v3245, 0.112945676
        %v3247 = vmul.f32 %v3229, %v3246
        %v3248 = vadd.f32 %v3247, 0.4994258
        %v3249 = vmul.f32 %v3229, %v3248
        %v3250 = vadd.f32 %v3249, 1.0
        %v3251 = vrcp.pop %v3250
        %v3252 = vmul.f32 %v3250, %v3251
        %v3253 = vsub.f32 1.0, %v3252
        %v3254 = vmul.f32 %v3251, %v3253
        %v3255 = vadd.f32 %v3251, %v3254
        %vm3256 = vweird.f32 %v3250
        %vm3257 = vweird.f32 %v3251
        %vm3258 = vmor %vm3256, %vm3257
        %v3259 = vsel %vm3258, %v3251, %v3255
        %v3260 = vand.u32 2147483647, %v3250
        %vm3261 = vcmp.eq.f32.partialorder %v3260, 8.507059e+37
        %v3262 = vand.u32 %v3250, 2147483648
        %v3263 = vor.u32 1.1754944e-38, %v3262
        %v3264 = vsel %vm3261, %v3263, %v3259
        %v3265 = vmul.f32 %v3240, %v3264
        %v3266 = vmin.f32 %v3265, 1.0
        %v3267 = vmax.f32 %v3266, -1.0
        %v3268 = vmul.f32 %v1058, %v1058
        %v3269 = vmin.f32 16.0, %v3268
        %v3270 = vmul.f32 %v3269, 2.1237322e-06
        %v3271 = vadd.f32 %v3270, 0.00028619796
        %v3272 = vmul.f32 %v3269, %v3271
        %v3273 = vadd.f32 %v3272, 0.0036580483
        %v3274 = vmul.f32 %v3269, %v3273
        %v3275 = vadd.f32 %v3274, 0.05243302
        %v3276 = vmul.f32 %v3269, %v3275
        %v3277 = vadd.f32 %v3276, 0.18741608
        %v3278 = vmul.f32 %v3269, %v3277
        %v3279 = vadd.f32 %v3278, 1.1283791
        %v3280 = vmul.f32 %v1058, %v3279
        %v3281 = vmul.f32 %v3269, 3.8918573e-05
        %v3282 = vadd.f32 %v3281, 0.001143296
        %v3283 = vmul.f32 %v3269, %v3282
        %v3284 = vadd.f32 %v3283, 0.014752088
        %v3285 = vmul.f32 %v3269, %v3284
        %v3286 = vadd.f32 %v3285, 0.112945676
        %v3287 = vmul.f32 %v3269, %v3286
        %v3288 = vadd.f32 %v3287, 0.4994258
        %v3289 = vmul.f32 %v3269, %v3288
        %v3290 = vadd.f32 %v3289, 1.0
        %v3291 = vrcp.pop %v3290
        %v3292 = vmul.f32 %v3290, %v3291
        %v3293 = vsub.f32 1.0, %v3292
        %v3294 = vmul.f32 %v3291, %v3293
        %v3295 = vadd.f32 %v3291, %v3294
        %vm3296 = vweird.f32 %v3290
        %vm3297 = vweird.f32 %v3291
        %vm3298 = vmor %vm3296, %vm3297
        %v3299 = vsel %vm3298, %v3291, %v3295
        %v3300 = vand.u32 2147483647, %v3290
        %vm3301 = vcmp.eq.f32.partialorder %v3300, 8.507059e+37
        %v3302 = vand.u32 %v3290, 2147483648
        %v3303 = vor.u32 1.1754944e-38, %v3302
        %v3304 = vsel %vm3301, %v3303, %v3299
        %v3305 = vmul.f32 %v3280, %v3304
        %v3306 = vmin.f32 %v3305, 1.0
        %v3307 = vmax.f32 %v3306, -1.0
        %v3308 = vmul.f32 %v1059, %v1059
        %v3309 = vmin.f32 16.0, %v3308
        %v3310 = vmul.f32 %v3309, 2.1237322e-06
        %v3311 = vadd.f32 %v3310, 0.00028619796
        %v3312 = vmul.f32 %v3309, %v3311
        %v3313 = vadd.f32 %v3312, 0.0036580483
        %v3314 = vmul.f32 %v3309, %v3313
        %v3315 = vadd.f32 %v3314, 0.05243302
        %v3316 = vmul.f32 %v3309, %v3315
        %v3317 = vadd.f32 %v3316, 0.18741608
        %v3318 = vmul.f32 %v3309, %v3317
        %v3319 = vadd.f32 %v3318, 1.1283791
        %v3320 = vmul.f32 %v1059, %v3319
        %v3321 = vmul.f32 %v3309, 3.8918573e-05
        %v3322 = vadd.f32 %v3321, 0.001143296
        %v3323 = vmul.f32 %v3309, %v3322
        %v3324 = vadd.f32 %v3323, 0.014752088
        %v3325 = vmul.f32 %v3309, %v3324
        %v3326 = vadd.f32 %v3325, 0.112945676
        %v3327 = vmul.f32 %v3309, %v3326
        %v3328 = vadd.f32 %v3327, 0.4994258
        %v3329 = vmul.f32 %v3309, %v3328
        %v3330 = vadd.f32 %v3329, 1.0
        %v3331 = vrcp.pop %v3330
        %v3332 = vmul.f32 %v3330, %v3331
        %v3333 = vsub.f32 1.0, %v3332
        %v3334 = vmul.f32 %v3331, %v3333
        %v3335 = vadd.f32 %v3331, %v3334
        %vm3336 = vweird.f32 %v3330
        %vm3337 = vweird.f32 %v3331
        %vm3338 = vmor %vm3336, %vm3337
        %v3339 = vsel %vm3338, %v3331, %v3335
        %v3340 = vand.u32 2147483647, %v3330
        %vm3341 = vcmp.eq.f32.partialorder %v3340, 8.507059e+37
        %v3342 = vand.u32 %v3330, 2147483648
        %v3343 = vor.u32 1.1754944e-38, %v3342
        %v3344 = vsel %vm3341, %v3343, %v3339
        %v3345 = vmul.f32 %v3320, %v3344
        %v3346 = vmin.f32 %v3345, 1.0
        %v3347 = vmax.f32 %v3346, -1.0
        %v3348 = vmul.f32 %v1060, %v1060
        %v3349 = vmin.f32 16.0, %v3348
        %v3350 = vmul.f32 %v3349, 2.1237322e-06
        %v3351 = vadd.f32 %v3350, 0.00028619796
        %v3352 = vmul.f32 %v3349, %v3351
        %v3353 = vadd.f32 %v3352, 0.0036580483
        %v3354 = vmul.f32 %v3349, %v3353
        %v3355 = vadd.f32 %v3354, 0.05243302
        %v3356 = vmul.f32 %v3349, %v3355
        %v3357 = vadd.f32 %v3356, 0.18741608
        %v3358 = vmul.f32 %v3349, %v3357
        %v3359 = vadd.f32 %v3358, 1.1283791
        %v3360 = vmul.f32 %v1060, %v3359
        %v3361 = vmul.f32 %v3349, 3.8918573e-05
        %v3362 = vadd.f32 %v3361, 0.001143296
        %v3363 = vmul.f32 %v3349, %v3362
        %v3364 = vadd.f32 %v3363, 0.014752088
        %v3365 = vmul.f32 %v3349, %v3364
        %v3366 = vadd.f32 %v3365, 0.112945676
        %v3367 = vmul.f32 %v3349, %v3366
        %v3368 = vadd.f32 %v3367, 0.4994258
        %v3369 = vmul.f32 %v3349, %v3368
        %v3370 = vadd.f32 %v3369, 1.0
        %v3371 = vrcp.pop %v3370
        %v3372 = vmul.f32 %v3370, %v3371
        %v3373 = vsub.f32 1.0, %v3372
        %v3374 = vmul.f32 %v3371, %v3373
        %v3375 = vadd.f32 %v3371, %v3374
        %vm3376 = vweird.f32 %v3370
        %vm3377 = vweird.f32 %v3371
        %vm3378 = vmor %vm3376, %vm3377
        %v3379 = vsel %vm3378, %v3371, %v3375
        %v3380 = vand.u32 2147483647, %v3370
        %vm3381 = vcmp.eq.f32.partialorder %v3380, 8.507059e+37
        %v3382 = vand.u32 %v3370, 2147483648
        %v3383 = vor.u32 1.1754944e-38, %v3382
        %v3384 = vsel %vm3381, %v3383, %v3379
        %v3385 = vmul.f32 %v3360, %v3384
        %v3386 = vmin.f32 %v3385, 1.0
        %v3387 = vmax.f32 %v3386, -1.0
        %v3388 = vmul.f32 %v1061, %v1061
        %v3389 = vmin.f32 16.0, %v3388
        %v3390 = vmul.f32 %v3389, 2.1237322e-06
        %v3391 = vadd.f32 %v3390, 0.00028619796
        %v3392 = vmul.f32 %v3389, %v3391
        %v3393 = vadd.f32 %v3392, 0.0036580483
        %v3394 = vmul.f32 %v3389, %v3393
        %v3395 = vadd.f32 %v3394, 0.05243302
        %v3396 = vmul.f32 %v3389, %v3395
        %v3397 = vadd.f32 %v3396, 0.18741608
        %v3398 = vmul.f32 %v3389, %v3397
        %v3399 = vadd.f32 %v3398, 1.1283791
        %v3400 = vmul.f32 %v1061, %v3399
        %v3401 = vmul.f32 %v3389, 3.8918573e-05
        %v3402 = vadd.f32 %v3401, 0.001143296
        %v3403 = vmul.f32 %v3389, %v3402
        %v3404 = vadd.f32 %v3403, 0.014752088
        %v3405 = vmul.f32 %v3389, %v3404
        %v3406 = vadd.f32 %v3405, 0.112945676
        %v3407 = vmul.f32 %v3389, %v3406
        %v3408 = vadd.f32 %v3407, 0.4994258
        %v3409 = vmul.f32 %v3389, %v3408
        %v3410 = vadd.f32 %v3409, 1.0
        %v3411 = vrcp.pop %v3410
        %v3412 = vmul.f32 %v3410, %v3411
        %v3413 = vsub.f32 1.0, %v3412
        %v3414 = vmul.f32 %v3411, %v3413
        %v3415 = vadd.f32 %v3411, %v3414
        %vm3416 = vweird.f32 %v3410
        %vm3417 = vweird.f32 %v3411
        %vm3418 = vmor %vm3416, %vm3417
        %v3419 = vsel %vm3418, %v3411, %v3415
        %v3420 = vand.u32 2147483647, %v3410
        %vm3421 = vcmp.eq.f32.partialorder %v3420, 8.507059e+37
        %v3422 = vand.u32 %v3410, 2147483648
        %v3423 = vor.u32 1.1754944e-38, %v3422
        %v3424 = vsel %vm3421, %v3423, %v3419
        %v3425 = vmul.f32 %v3400, %v3424
        %v3426 = vmin.f32 %v3425, 1.0
        %v3427 = vmax.f32 %v3426, -1.0
        %v3428 = vmul.f32 %v1062, %v1062
        %v3429 = vmin.f32 16.0, %v3428
        %v3430 = vmul.f32 %v3429, 2.1237322e-06
        %v3431 = vadd.f32 %v3430, 0.00028619796
        %v3432 = vmul.f32 %v3429, %v3431
        %v3433 = vadd.f32 %v3432, 0.0036580483
        %v3434 = vmul.f32 %v3429, %v3433
        %v3435 = vadd.f32 %v3434, 0.05243302
        %v3436 = vmul.f32 %v3429, %v3435
        %v3437 = vadd.f32 %v3436, 0.18741608
        %v3438 = vmul.f32 %v3429, %v3437
        %v3439 = vadd.f32 %v3438, 1.1283791
        %v3440 = vmul.f32 %v1062, %v3439
        %v3441 = vmul.f32 %v3429, 3.8918573e-05
        %v3442 = vadd.f32 %v3441, 0.001143296
        %v3443 = vmul.f32 %v3429, %v3442
        %v3444 = vadd.f32 %v3443, 0.014752088
        %v3445 = vmul.f32 %v3429, %v3444
        %v3446 = vadd.f32 %v3445, 0.112945676
        %v3447 = vmul.f32 %v3429, %v3446
        %v3448 = vadd.f32 %v3447, 0.4994258
        %v3449 = vmul.f32 %v3429, %v3448
        %v3450 = vadd.f32 %v3449, 1.0
        %v3451 = vrcp.pop %v3450
        %v3452 = vmul.f32 %v3450, %v3451
        %v3453 = vsub.f32 1.0, %v3452
        %v3454 = vmul.f32 %v3451, %v3453
        %v3455 = vadd.f32 %v3451, %v3454
        %vm3456 = vweird.f32 %v3450
        %vm3457 = vweird.f32 %v3451
        %vm3458 = vmor %vm3456, %vm3457
        %v3459 = vsel %vm3458, %v3451, %v3455
        %v3460 = vand.u32 2147483647, %v3450
        %vm3461 = vcmp.eq.f32.partialorder %v3460, 8.507059e+37
        %v3462 = vand.u32 %v3450, 2147483648
        %v3463 = vor.u32 1.1754944e-38, %v3462
        %v3464 = vsel %vm3461, %v3463, %v3459
        %v3465 = vmul.f32 %v3440, %v3464
        %v3466 = vmin.f32 %v3465, 1.0
        %v3467 = vmax.f32 %v3466, -1.0
        %v3468 = vmul.f32 %v1063, %v1063
        %v3469 = vmin.f32 16.0, %v3468
        %v3470 = vmul.f32 %v3469, 2.1237322e-06
        %v3471 = vadd.f32 %v3470, 0.00028619796
        %v3472 = vmul.f32 %v3469, %v3471
        %v3473 = vadd.f32 %v3472, 0.0036580483
        %v3474 = vmul.f32 %v3469, %v3473
        %v3475 = vadd.f32 %v3474, 0.05243302
        %v3476 = vmul.f32 %v3469, %v3475
        %v3477 = vadd.f32 %v3476, 0.18741608
        %v3478 = vmul.f32 %v3469, %v3477
        %v3479 = vadd.f32 %v3478, 1.1283791
        %v3480 = vmul.f32 %v1063, %v3479
        %v3481 = vmul.f32 %v3469, 3.8918573e-05
        %v3482 = vadd.f32 %v3481, 0.001143296
        %v3483 = vmul.f32 %v3469, %v3482
        %v3484 = vadd.f32 %v3483, 0.014752088
        %v3485 = vmul.f32 %v3469, %v3484
        %v3486 = vadd.f32 %v3485, 0.112945676
        %v3487 = vmul.f32 %v3469, %v3486
        %v3488 = vadd.f32 %v3487, 0.4994258
        %v3489 = vmul.f32 %v3469, %v3488
        %v3490 = vadd.f32 %v3489, 1.0
        %v3491 = vrcp.pop %v3490
        %v3492 = vmul.f32 %v3490, %v3491
        %v3493 = vsub.f32 1.0, %v3492
        %v3494 = vmul.f32 %v3491, %v3493
        %v3495 = vadd.f32 %v3491, %v3494
        %vm3496 = vweird.f32 %v3490
        %vm3497 = vweird.f32 %v3491
        %vm3498 = vmor %vm3496, %vm3497
        %v3499 = vsel %vm3498, %v3491, %v3495
        %v3500 = vand.u32 2147483647, %v3490
        %vm3501 = vcmp.eq.f32.partialorder %v3500, 8.507059e+37
        %v3502 = vand.u32 %v3490, 2147483648
        %v3503 = vor.u32 1.1754944e-38, %v3502
        %v3504 = vsel %vm3501, %v3503, %v3499
        %v3505 = vmul.f32 %v3480, %v3504
        %v3506 = vmin.f32 %v3505, 1.0
        %v3507 = vmax.f32 %v3506, -1.0
        %v3508 = vmul.f32 %v1064, %v1064
        %v3509 = vmin.f32 16.0, %v3508
        %v3510 = vmul.f32 %v3509, 2.1237322e-06
        %v3511 = vadd.f32 %v3510, 0.00028619796
        %v3512 = vmul.f32 %v3509, %v3511
        %v3513 = vadd.f32 %v3512, 0.0036580483
        %v3514 = vmul.f32 %v3509, %v3513
        %v3515 = vadd.f32 %v3514, 0.05243302
        %v3516 = vmul.f32 %v3509, %v3515
        %v3517 = vadd.f32 %v3516, 0.18741608
        %v3518 = vmul.f32 %v3509, %v3517
        %v3519 = vadd.f32 %v3518, 1.1283791
        %v3520 = vmul.f32 %v1064, %v3519
        %v3521 = vmul.f32 %v3509, 3.8918573e-05
        %v3522 = vadd.f32 %v3521, 0.001143296
        %v3523 = vmul.f32 %v3509, %v3522
        %v3524 = vadd.f32 %v3523, 0.014752088
        %v3525 = vmul.f32 %v3509, %v3524
        %v3526 = vadd.f32 %v3525, 0.112945676
        %v3527 = vmul.f32 %v3509, %v3526
        %v3528 = vadd.f32 %v3527, 0.4994258
        %v3529 = vmul.f32 %v3509, %v3528
        %v3530 = vadd.f32 %v3529, 1.0
        %v3531 = vrcp.pop %v3530
        %v3532 = vmul.f32 %v3530, %v3531
        %v3533 = vsub.f32 1.0, %v3532
        %v3534 = vmul.f32 %v3531, %v3533
        %v3535 = vadd.f32 %v3531, %v3534
        %vm3536 = vweird.f32 %v3530
        %vm3537 = vweird.f32 %v3531
        %vm3538 = vmor %vm3536, %vm3537
        %v3539 = vsel %vm3538, %v3531, %v3535
        %v3540 = vand.u32 2147483647, %v3530
        %vm3541 = vcmp.eq.f32.partialorder %v3540, 8.507059e+37
        %v3542 = vand.u32 %v3530, 2147483648
        %v3543 = vor.u32 1.1754944e-38, %v3542
        %v3544 = vsel %vm3541, %v3543, %v3539
        %v3545 = vmul.f32 %v3520, %v3544
        %v3546 = vmin.f32 %v3545, 1.0
        %v3547 = vmax.f32 %v3546, -1.0
        %v3548 = vmul.f32 %v1065, %v1065
        %v3549 = vmin.f32 16.0, %v3548
        %v3550 = vmul.f32 %v3549, 2.1237322e-06
        %v3551 = vadd.f32 %v3550, 0.00028619796
        %v3552 = vmul.f32 %v3549, %v3551
        %v3553 = vadd.f32 %v3552, 0.0036580483
        %v3554 = vmul.f32 %v3549, %v3553
        %v3555 = vadd.f32 %v3554, 0.05243302
        %v3556 = vmul.f32 %v3549, %v3555
        %v3557 = vadd.f32 %v3556, 0.18741608
        %v3558 = vmul.f32 %v3549, %v3557
        %v3559 = vadd.f32 %v3558, 1.1283791
        %v3560 = vmul.f32 %v1065, %v3559
        %v3561 = vmul.f32 %v3549, 3.8918573e-05
        %v3562 = vadd.f32 %v3561, 0.001143296
        %v3563 = vmul.f32 %v3549, %v3562
        %v3564 = vadd.f32 %v3563, 0.014752088
        %v3565 = vmul.f32 %v3549, %v3564
        %v3566 = vadd.f32 %v3565, 0.112945676
        %v3567 = vmul.f32 %v3549, %v3566
        %v3568 = vadd.f32 %v3567, 0.4994258
        %v3569 = vmul.f32 %v3549, %v3568
        %v3570 = vadd.f32 %v3569, 1.0
        %v3571 = vrcp.pop %v3570
        %v3572 = vmul.f32 %v3570, %v3571
        %v3573 = vsub.f32 1.0, %v3572
        %v3574 = vmul.f32 %v3571, %v3573
        %v3575 = vadd.f32 %v3571, %v3574
        %vm3576 = vweird.f32 %v3570
        %vm3577 = vweird.f32 %v3571
        %vm3578 = vmor %vm3576, %vm3577
        %v3579 = vsel %vm3578, %v3571, %v3575
        %v3580 = vand.u32 2147483647, %v3570
        %vm3581 = vcmp.eq.f32.partialorder %v3580, 8.507059e+37
        %v3582 = vand.u32 %v3570, 2147483648
        %v3583 = vor.u32 1.1754944e-38, %v3582
        %v3584 = vsel %vm3581, %v3583, %v3579
        %v3585 = vmul.f32 %v3560, %v3584
        %v3586 = vmin.f32 %v3585, 1.0
        %v3587 = vmax.f32 %v3586, -1.0
        %v3588 = vmul.f32 %v1066, %v1066
        %v3589 = vmin.f32 16.0, %v3588
        %v3590 = vmul.f32 %v3589, 2.1237322e-06
        %v3591 = vadd.f32 %v3590, 0.00028619796
        %v3592 = vmul.f32 %v3589, %v3591
        %v3593 = vadd.f32 %v3592, 0.0036580483
        %v3594 = vmul.f32 %v3589, %v3593
        %v3595 = vadd.f32 %v3594, 0.05243302
        %v3596 = vmul.f32 %v3589, %v3595
        %v3597 = vadd.f32 %v3596, 0.18741608
        %v3598 = vmul.f32 %v3589, %v3597
        %v3599 = vadd.f32 %v3598, 1.1283791
        %v3600 = vmul.f32 %v1066, %v3599
        %v3601 = vmul.f32 %v3589, 3.8918573e-05
        %v3602 = vadd.f32 %v3601, 0.001143296
        %v3603 = vmul.f32 %v3589, %v3602
        %v3604 = vadd.f32 %v3603, 0.014752088
        %v3605 = vmul.f32 %v3589, %v3604
        %v3606 = vadd.f32 %v3605, 0.112945676
        %v3607 = vmul.f32 %v3589, %v3606
        %v3608 = vadd.f32 %v3607, 0.4994258
        %v3609 = vmul.f32 %v3589, %v3608
        %v3610 = vadd.f32 %v3609, 1.0
        %v3611 = vrcp.pop %v3610
        %v3612 = vmul.f32 %v3610, %v3611
        %v3613 = vsub.f32 1.0, %v3612
        %v3614 = vmul.f32 %v3611, %v3613
        %v3615 = vadd.f32 %v3611, %v3614
        %vm3616 = vweird.f32 %v3610
        %vm3617 = vweird.f32 %v3611
        %vm3618 = vmor %vm3616, %vm3617
        %v3619 = vsel %vm3618, %v3611, %v3615
        %v3620 = vand.u32 2147483647, %v3610
        %vm3621 = vcmp.eq.f32.partialorder %v3620, 8.507059e+37
        %v3622 = vand.u32 %v3610, 2147483648
        %v3623 = vor.u32 1.1754944e-38, %v3622
        %v3624 = vsel %vm3621, %v3623, %v3619
        %v3625 = vmul.f32 %v3600, %v3624
        %v3626 = vmin.f32 %v3625, 1.0
        %v3627 = vmax.f32 %v3626, -1.0
        %v3628 = vmul.f32 %v1067, %v1067
        %v3629 = vmin.f32 16.0, %v3628
        %v3630 = vmul.f32 %v3629, 2.1237322e-06
        %v3631 = vadd.f32 %v3630, 0.00028619796
        %v3632 = vmul.f32 %v3629, %v3631
        %v3633 = vadd.f32 %v3632, 0.0036580483
        %v3634 = vmul.f32 %v3629, %v3633
        %v3635 = vadd.f32 %v3634, 0.05243302
        %v3636 = vmul.f32 %v3629, %v3635
        %v3637 = vadd.f32 %v3636, 0.18741608
        %v3638 = vmul.f32 %v3629, %v3637
        %v3639 = vadd.f32 %v3638, 1.1283791
        %v3640 = vmul.f32 %v1067, %v3639
        %v3641 = vmul.f32 %v3629, 3.8918573e-05
        %v3642 = vadd.f32 %v3641, 0.001143296
        %v3643 = vmul.f32 %v3629, %v3642
        %v3644 = vadd.f32 %v3643, 0.014752088
        %v3645 = vmul.f32 %v3629, %v3644
        %v3646 = vadd.f32 %v3645, 0.112945676
        %v3647 = vmul.f32 %v3629, %v3646
        %v3648 = vadd.f32 %v3647, 0.4994258
        %v3649 = vmul.f32 %v3629, %v3648
        %v3650 = vadd.f32 %v3649, 1.0
        %v3651 = vrcp.pop %v3650
        %v3652 = vmul.f32 %v3650, %v3651
        %v3653 = vsub.f32 1.0, %v3652
        %v3654 = vmul.f32 %v3651, %v3653
        %v3655 = vadd.f32 %v3651, %v3654
        %vm3656 = vweird.f32 %v3650
        %vm3657 = vweird.f32 %v3651
        %vm3658 = vmor %vm3656, %vm3657
        %v3659 = vsel %vm3658, %v3651, %v3655
        %v3660 = vand.u32 2147483647, %v3650
        %vm3661 = vcmp.eq.f32.partialorder %v3660, 8.507059e+37
        %v3662 = vand.u32 %v3650, 2147483648
        %v3663 = vor.u32 1.1754944e-38, %v3662
        %v3664 = vsel %vm3661, %v3663, %v3659
        %v3665 = vmul.f32 %v3640, %v3664
        %v3666 = vmin.f32 %v3665, 1.0
        %v3667 = vmax.f32 %v3666, -1.0
        %v3668 = vmul.f32 %v1068, %v1068
        %v3669 = vmin.f32 16.0, %v3668
        %v3670 = vmul.f32 %v3669, 2.1237322e-06
        %v3671 = vadd.f32 %v3670, 0.00028619796
        %v3672 = vmul.f32 %v3669, %v3671
        %v3673 = vadd.f32 %v3672, 0.0036580483
        %v3674 = vmul.f32 %v3669, %v3673
        %v3675 = vadd.f32 %v3674, 0.05243302
        %v3676 = vmul.f32 %v3669, %v3675
        %v3677 = vadd.f32 %v3676, 0.18741608
        %v3678 = vmul.f32 %v3669, %v3677
        %v3679 = vadd.f32 %v3678, 1.1283791
        %v3680 = vmul.f32 %v1068, %v3679
        %v3681 = vmul.f32 %v3669, 3.8918573e-05
        %v3682 = vadd.f32 %v3681, 0.001143296
        %v3683 = vmul.f32 %v3669, %v3682
        %v3684 = vadd.f32 %v3683, 0.014752088
        %v3685 = vmul.f32 %v3669, %v3684
        %v3686 = vadd.f32 %v3685, 0.112945676
        %v3687 = vmul.f32 %v3669, %v3686
        %v3688 = vadd.f32 %v3687, 0.4994258
        %v3689 = vmul.f32 %v3669, %v3688
        %v3690 = vadd.f32 %v3689, 1.0
        %v3691 = vrcp.pop %v3690
        %v3692 = vmul.f32 %v3690, %v3691
        %v3693 = vsub.f32 1.0, %v3692
        %v3694 = vmul.f32 %v3691, %v3693
        %v3695 = vadd.f32 %v3691, %v3694
        %vm3696 = vweird.f32 %v3690
        %vm3697 = vweird.f32 %v3691
        %vm3698 = vmor %vm3696, %vm3697
        %v3699 = vsel %vm3698, %v3691, %v3695
        %v3700 = vand.u32 2147483647, %v3690
        %vm3701 = vcmp.eq.f32.partialorder %v3700, 8.507059e+37
        %v3702 = vand.u32 %v3690, 2147483648
        %v3703 = vor.u32 1.1754944e-38, %v3702
        %v3704 = vsel %vm3701, %v3703, %v3699
        %v3705 = vmul.f32 %v3680, %v3704
        %v3706 = vmin.f32 %v3705, 1.0
        %v3707 = vmax.f32 %v3706, -1.0
        %v3708 = vmul.f32 %v1069, %v1069
        %v3709 = vmin.f32 16.0, %v3708
        %v3710 = vmul.f32 %v3709, 2.1237322e-06
        %v3711 = vadd.f32 %v3710, 0.00028619796
        %v3712 = vmul.f32 %v3709, %v3711
        %v3713 = vadd.f32 %v3712, 0.0036580483
        %v3714 = vmul.f32 %v3709, %v3713
        %v3715 = vadd.f32 %v3714, 0.05243302
        %v3716 = vmul.f32 %v3709, %v3715
        %v3717 = vadd.f32 %v3716, 0.18741608
        %v3718 = vmul.f32 %v3709, %v3717
        %v3719 = vadd.f32 %v3718, 1.1283791
        %v3720 = vmul.f32 %v1069, %v3719
        %v3721 = vmul.f32 %v3709, 3.8918573e-05
        %v3722 = vadd.f32 %v3721, 0.001143296
        %v3723 = vmul.f32 %v3709, %v3722
        %v3724 = vadd.f32 %v3723, 0.014752088
        %v3725 = vmul.f32 %v3709, %v3724
        %v3726 = vadd.f32 %v3725, 0.112945676
        %v3727 = vmul.f32 %v3709, %v3726
        %v3728 = vadd.f32 %v3727, 0.4994258
        %v3729 = vmul.f32 %v3709, %v3728
        %v3730 = vadd.f32 %v3729, 1.0
        %v3731 = vrcp.pop %v3730
        %v3732 = vmul.f32 %v3730, %v3731
        %v3733 = vsub.f32 1.0, %v3732
        %v3734 = vmul.f32 %v3731, %v3733
        %v3735 = vadd.f32 %v3731, %v3734
        %vm3736 = vweird.f32 %v3730
        %vm3737 = vweird.f32 %v3731
        %vm3738 = vmor %vm3736, %vm3737
        %v3739 = vsel %vm3738, %v3731, %v3735
        %v3740 = vand.u32 2147483647, %v3730
        %vm3741 = vcmp.eq.f32.partialorder %v3740, 8.507059e+37
        %v3742 = vand.u32 %v3730, 2147483648
        %v3743 = vor.u32 1.1754944e-38, %v3742
        %v3744 = vsel %vm3741, %v3743, %v3739
        %v3745 = vmul.f32 %v3720, %v3744
        %v3746 = vmin.f32 %v3745, 1.0
        %v3747 = vmax.f32 %v3746, -1.0
        %v3748 = vmul.f32 %v1070, %v1070
        %v3749 = vmin.f32 16.0, %v3748
        %v3750 = vmul.f32 %v3749, 2.1237322e-06
        %v3751 = vadd.f32 %v3750, 0.00028619796
        %v3752 = vmul.f32 %v3749, %v3751
        %v3753 = vadd.f32 %v3752, 0.0036580483
        %v3754 = vmul.f32 %v3749, %v3753
        %v3755 = vadd.f32 %v3754, 0.05243302
        %v3756 = vmul.f32 %v3749, %v3755
        %v3757 = vadd.f32 %v3756, 0.18741608
        %v3758 = vmul.f32 %v3749, %v3757
        %v3759 = vadd.f32 %v3758, 1.1283791
        %v3760 = vmul.f32 %v1070, %v3759
        %v3761 = vmul.f32 %v3749, 3.8918573e-05
        %v3762 = vadd.f32 %v3761, 0.001143296
        %v3763 = vmul.f32 %v3749, %v3762
        %v3764 = vadd.f32 %v3763, 0.014752088
        %v3765 = vmul.f32 %v3749, %v3764
        %v3766 = vadd.f32 %v3765, 0.112945676
        %v3767 = vmul.f32 %v3749, %v3766
        %v3768 = vadd.f32 %v3767, 0.4994258
        %v3769 = vmul.f32 %v3749, %v3768
        %v3770 = vadd.f32 %v3769, 1.0
        %v3771 = vrcp.pop %v3770
        %v3772 = vmul.f32 %v3770, %v3771
        %v3773 = vsub.f32 1.0, %v3772
        %v3774 = vmul.f32 %v3771, %v3773
        %v3775 = vadd.f32 %v3771, %v3774
        %vm3776 = vweird.f32 %v3770
        %vm3777 = vweird.f32 %v3771
        %vm3778 = vmor %vm3776, %vm3777
        %v3779 = vsel %vm3778, %v3771, %v3775
        %v3780 = vand.u32 2147483647, %v3770
        %vm3781 = vcmp.eq.f32.partialorder %v3780, 8.507059e+37
        %v3782 = vand.u32 %v3770, 2147483648
        %v3783 = vor.u32 1.1754944e-38, %v3782
        %v3784 = vsel %vm3781, %v3783, %v3779
        %v3785 = vmul.f32 %v3760, %v3784
        %v3786 = vmin.f32 %v3785, 1.0
        %v3787 = vmax.f32 %v3786, -1.0
        %v3788 = vmul.f32 %v1071, %v1071
        %v3789 = vmin.f32 16.0, %v3788
        %v3790 = vmul.f32 %v3789, 2.1237322e-06
        %v3791 = vadd.f32 %v3790, 0.00028619796
        %v3792 = vmul.f32 %v3789, %v3791
        %v3793 = vadd.f32 %v3792, 0.0036580483
        %v3794 = vmul.f32 %v3789, %v3793
        %v3795 = vadd.f32 %v3794, 0.05243302
        %v3796 = vmul.f32 %v3789, %v3795
        %v3797 = vadd.f32 %v3796, 0.18741608
        %v3798 = vmul.f32 %v3789, %v3797
        %v3799 = vadd.f32 %v3798, 1.1283791
        %v3800 = vmul.f32 %v1071, %v3799
        %v3801 = vmul.f32 %v3789, 3.8918573e-05
        %v3802 = vadd.f32 %v3801, 0.001143296
        %v3803 = vmul.f32 %v3789, %v3802
        %v3804 = vadd.f32 %v3803, 0.014752088
        %v3805 = vmul.f32 %v3789, %v3804
        %v3806 = vadd.f32 %v3805, 0.112945676
        %v3807 = vmul.f32 %v3789, %v3806
        %v3808 = vadd.f32 %v3807, 0.4994258
        %v3809 = vmul.f32 %v3789, %v3808
        %v3810 = vadd.f32 %v3809, 1.0
        %v3811 = vrcp.pop %v3810
        %v3812 = vmul.f32 %v3810, %v3811
        %v3813 = vsub.f32 1.0, %v3812
        %v3814 = vmul.f32 %v3811, %v3813
        %v3815 = vadd.f32 %v3811, %v3814
        %vm3816 = vweird.f32 %v3810
        %vm3817 = vweird.f32 %v3811
        %vm3818 = vmor %vm3816, %vm3817
        %v3819 = vsel %vm3818, %v3811, %v3815
        %v3820 = vand.u32 2147483647, %v3810
        %vm3821 = vcmp.eq.f32.partialorder %v3820, 8.507059e+37
        %v3822 = vand.u32 %v3810, 2147483648
        %v3823 = vor.u32 1.1754944e-38, %v3822
        %v3824 = vsel %vm3821, %v3823, %v3819
        %v3825 = vmul.f32 %v3800, %v3824
        %v3826 = vmin.f32 %v3825, 1.0
        %v3827 = vmax.f32 %v3826, -1.0
        %v3828 = vmul.f32 %v1072, %v1072
        %v3829 = vmin.f32 16.0, %v3828
        %v3830 = vmul.f32 %v3829, 2.1237322e-06
        %v3831 = vadd.f32 %v3830, 0.00028619796
        %v3832 = vmul.f32 %v3829, %v3831
        %v3833 = vadd.f32 %v3832, 0.0036580483
        %v3834 = vmul.f32 %v3829, %v3833
        %v3835 = vadd.f32 %v3834, 0.05243302
        %v3836 = vmul.f32 %v3829, %v3835
        %v3837 = vadd.f32 %v3836, 0.18741608
        %v3838 = vmul.f32 %v3829, %v3837
        %v3839 = vadd.f32 %v3838, 1.1283791
        %v3840 = vmul.f32 %v1072, %v3839
        %v3841 = vmul.f32 %v3829, 3.8918573e-05
        %v3842 = vadd.f32 %v3841, 0.001143296
        %v3843 = vmul.f32 %v3829, %v3842
        %v3844 = vadd.f32 %v3843, 0.014752088
        %v3845 = vmul.f32 %v3829, %v3844
        %v3846 = vadd.f32 %v3845, 0.112945676
        %v3847 = vmul.f32 %v3829, %v3846
        %v3848 = vadd.f32 %v3847, 0.4994258
        %v3849 = vmul.f32 %v3829, %v3848
        %v3850 = vadd.f32 %v3849, 1.0
        %v3851 = vrcp.pop %v3850
        %v3852 = vmul.f32 %v3850, %v3851
        %v3853 = vsub.f32 1.0, %v3852
        %v3854 = vmul.f32 %v3851, %v3853
        %v3855 = vadd.f32 %v3851, %v3854
        %vm3856 = vweird.f32 %v3850
        %vm3857 = vweird.f32 %v3851
        %vm3858 = vmor %vm3856, %vm3857
        %v3859 = vsel %vm3858, %v3851, %v3855
        %v3860 = vand.u32 2147483647, %v3850
        %vm3861 = vcmp.eq.f32.partialorder %v3860, 8.507059e+37
        %v3862 = vand.u32 %v3850, 2147483648
        %v3863 = vor.u32 1.1754944e-38, %v3862
        %v3864 = vsel %vm3861, %v3863, %v3859
        %v3865 = vmul.f32 %v3840, %v3864
        %v3866 = vmin.f32 %v3865, 1.0
        %v3867 = vmax.f32 %v3866, -1.0
        %v3868 = vmul.f32 %v1073, %v1073
        %v3869 = vmin.f32 16.0, %v3868
        %v3870 = vmul.f32 %v3869, 2.1237322e-06
        %v3871 = vadd.f32 %v3870, 0.00028619796
        %v3872 = vmul.f32 %v3869, %v3871
        %v3873 = vadd.f32 %v3872, 0.0036580483
        %v3874 = vmul.f32 %v3869, %v3873
        %v3875 = vadd.f32 %v3874, 0.05243302
        %v3876 = vmul.f32 %v3869, %v3875
        %v3877 = vadd.f32 %v3876, 0.18741608
        %v3878 = vmul.f32 %v3869, %v3877
        %v3879 = vadd.f32 %v3878, 1.1283791
        %v3880 = vmul.f32 %v1073, %v3879
        %v3881 = vmul.f32 %v3869, 3.8918573e-05
        %v3882 = vadd.f32 %v3881, 0.001143296
        %v3883 = vmul.f32 %v3869, %v3882
        %v3884 = vadd.f32 %v3883, 0.014752088
        %v3885 = vmul.f32 %v3869, %v3884
        %v3886 = vadd.f32 %v3885, 0.112945676
        %v3887 = vmul.f32 %v3869, %v3886
        %v3888 = vadd.f32 %v3887, 0.4994258
        %v3889 = vmul.f32 %v3869, %v3888
        %v3890 = vadd.f32 %v3889, 1.0
        %v3891 = vrcp.pop %v3890
        %v3892 = vmul.f32 %v3890, %v3891
        %v3893 = vsub.f32 1.0, %v3892
        %v3894 = vmul.f32 %v3891, %v3893
        %v3895 = vadd.f32 %v3891, %v3894
        %vm3896 = vweird.f32 %v3890
        %vm3897 = vweird.f32 %v3891
        %vm3898 = vmor %vm3896, %vm3897
        %v3899 = vsel %vm3898, %v3891, %v3895
        %v3900 = vand.u32 2147483647, %v3890
        %vm3901 = vcmp.eq.f32.partialorder %v3900, 8.507059e+37
        %v3902 = vand.u32 %v3890, 2147483648
        %v3903 = vor.u32 1.1754944e-38, %v3902
        %v3904 = vsel %vm3901, %v3903, %v3899
        %v3905 = vmul.f32 %v3880, %v3904
        %v3906 = vmin.f32 %v3905, 1.0
        %v3907 = vmax.f32 %v3906, -1.0
        %v3908 = vmul.f32 %v1074, %v1074
        %v3909 = vmin.f32 16.0, %v3908
        %v3910 = vmul.f32 %v3909, 2.1237322e-06
        %v3911 = vadd.f32 %v3910, 0.00028619796
        %v3912 = vmul.f32 %v3909, %v3911
        %v3913 = vadd.f32 %v3912, 0.0036580483
        %v3914 = vmul.f32 %v3909, %v3913
        %v3915 = vadd.f32 %v3914, 0.05243302
        %v3916 = vmul.f32 %v3909, %v3915
        %v3917 = vadd.f32 %v3916, 0.18741608
        %v3918 = vmul.f32 %v3909, %v3917
        %v3919 = vadd.f32 %v3918, 1.1283791
        %v3920 = vmul.f32 %v1074, %v3919
        %v3921 = vmul.f32 %v3909, 3.8918573e-05
        %v3922 = vadd.f32 %v3921, 0.001143296
        %v3923 = vmul.f32 %v3909, %v3922
        %v3924 = vadd.f32 %v3923, 0.014752088
        %v3925 = vmul.f32 %v3909, %v3924
        %v3926 = vadd.f32 %v3925, 0.112945676
        %v3927 = vmul.f32 %v3909, %v3926
        %v3928 = vadd.f32 %v3927, 0.4994258
        %v3929 = vmul.f32 %v3909, %v3928
        %v3930 = vadd.f32 %v3929, 1.0
        %v3931 = vrcp.pop %v3930
        %v3932 = vmul.f32 %v3930, %v3931
        %v3933 = vsub.f32 1.0, %v3932
        %v3934 = vmul.f32 %v3931, %v3933
        %v3935 = vadd.f32 %v3931, %v3934
        %vm3936 = vweird.f32 %v3930
        %vm3937 = vweird.f32 %v3931
        %vm3938 = vmor %vm3936, %vm3937
        %v3939 = vsel %vm3938, %v3931, %v3935
        %v3940 = vand.u32 2147483647, %v3930
        %vm3941 = vcmp.eq.f32.partialorder %v3940, 8.507059e+37
        %v3942 = vand.u32 %v3930, 2147483648
        %v3943 = vor.u32 1.1754944e-38, %v3942
        %v3944 = vsel %vm3941, %v3943, %v3939
        %v3945 = vmul.f32 %v3920, %v3944
        %v3946 = vmin.f32 %v3945, 1.0
        %v3947 = vmax.f32 %v3946, -1.0
        %v3948 = vmul.f32 %v1075, %v1075
        %v3949 = vmin.f32 16.0, %v3948
        %v3950 = vmul.f32 %v3949, 2.1237322e-06
        %v3951 = vadd.f32 %v3950, 0.00028619796
        %v3952 = vmul.f32 %v3949, %v3951
        %v3953 = vadd.f32 %v3952, 0.0036580483
        %v3954 = vmul.f32 %v3949, %v3953
        %v3955 = vadd.f32 %v3954, 0.05243302
        %v3956 = vmul.f32 %v3949, %v3955
        %v3957 = vadd.f32 %v3956, 0.18741608
        %v3958 = vmul.f32 %v3949, %v3957
        %v3959 = vadd.f32 %v3958, 1.1283791
        %v3960 = vmul.f32 %v1075, %v3959
        %v3961 = vmul.f32 %v3949, 3.8918573e-05
        %v3962 = vadd.f32 %v3961, 0.001143296
        %v3963 = vmul.f32 %v3949, %v3962
        %v3964 = vadd.f32 %v3963, 0.014752088
        %v3965 = vmul.f32 %v3949, %v3964
        %v3966 = vadd.f32 %v3965, 0.112945676
        %v3967 = vmul.f32 %v3949, %v3966
        %v3968 = vadd.f32 %v3967, 0.4994258
        %v3969 = vmul.f32 %v3949, %v3968
        %v3970 = vadd.f32 %v3969, 1.0
        %v3971 = vrcp.pop %v3970
        %v3972 = vmul.f32 %v3970, %v3971
        %v3973 = vsub.f32 1.0, %v3972
        %v3974 = vmul.f32 %v3971, %v3973
        %v3975 = vadd.f32 %v3971, %v3974
        %vm3976 = vweird.f32 %v3970
        %vm3977 = vweird.f32 %v3971
        %vm3978 = vmor %vm3976, %vm3977
        %v3979 = vsel %vm3978, %v3971, %v3975
        %v3980 = vand.u32 2147483647, %v3970
        %vm3981 = vcmp.eq.f32.partialorder %v3980, 8.507059e+37
        %v3982 = vand.u32 %v3970, 2147483648
        %v3983 = vor.u32 1.1754944e-38, %v3982
        %v3984 = vsel %vm3981, %v3983, %v3979
        %v3985 = vmul.f32 %v3960, %v3984
        %v3986 = vmin.f32 %v3985, 1.0
        %v3987 = vmax.f32 %v3986, -1.0
        %v3988 = vmul.f32 %v1076, %v1076
        %v3989 = vmin.f32 16.0, %v3988
        %v3990 = vmul.f32 %v3989, 2.1237322e-06
        %v3991 = vadd.f32 %v3990, 0.00028619796
        %v3992 = vmul.f32 %v3989, %v3991
        %v3993 = vadd.f32 %v3992, 0.0036580483
        %v3994 = vmul.f32 %v3989, %v3993
        %v3995 = vadd.f32 %v3994, 0.05243302
        %v3996 = vmul.f32 %v3989, %v3995
        %v3997 = vadd.f32 %v3996, 0.18741608
        %v3998 = vmul.f32 %v3989, %v3997
        %v3999 = vadd.f32 %v3998, 1.1283791
        %v4000 = vmul.f32 %v1076, %v3999
        %v4001 = vmul.f32 %v3989, 3.8918573e-05
        %v4002 = vadd.f32 %v4001, 0.001143296
        %v4003 = vmul.f32 %v3989, %v4002
        %v4004 = vadd.f32 %v4003, 0.014752088
        %v4005 = vmul.f32 %v3989, %v4004
        %v4006 = vadd.f32 %v4005, 0.112945676
        %v4007 = vmul.f32 %v3989, %v4006
        %v4008 = vadd.f32 %v4007, 0.4994258
        %v4009 = vmul.f32 %v3989, %v4008
        %v4010 = vadd.f32 %v4009, 1.0
        %v4011 = vrcp.pop %v4010
        %v4012 = vmul.f32 %v4010, %v4011
        %v4013 = vsub.f32 1.0, %v4012
        %v4014 = vmul.f32 %v4011, %v4013
        %v4015 = vadd.f32 %v4011, %v4014
        %vm4016 = vweird.f32 %v4010
        %vm4017 = vweird.f32 %v4011
        %vm4018 = vmor %vm4016, %vm4017
        %v4019 = vsel %vm4018, %v4011, %v4015
        %v4020 = vand.u32 2147483647, %v4010
        %vm4021 = vcmp.eq.f32.partialorder %v4020, 8.507059e+37
        %v4022 = vand.u32 %v4010, 2147483648
        %v4023 = vor.u32 1.1754944e-38, %v4022
        %v4024 = vsel %vm4021, %v4023, %v4019
        %v4025 = vmul.f32 %v4000, %v4024
        %v4026 = vmin.f32 %v4025, 1.0
        %v4027 = vmax.f32 %v4026, -1.0
        %v4028 = vmul.f32 %v1077, %v1077
        %v4029 = vmin.f32 16.0, %v4028
        %v4030 = vmul.f32 %v4029, 2.1237322e-06
        %v4031 = vadd.f32 %v4030, 0.00028619796
        %v4032 = vmul.f32 %v4029, %v4031
        %v4033 = vadd.f32 %v4032, 0.0036580483
        %v4034 = vmul.f32 %v4029, %v4033
        %v4035 = vadd.f32 %v4034, 0.05243302
        %v4036 = vmul.f32 %v4029, %v4035
        %v4037 = vadd.f32 %v4036, 0.18741608
        %v4038 = vmul.f32 %v4029, %v4037
        %v4039 = vadd.f32 %v4038, 1.1283791
        %v4040 = vmul.f32 %v1077, %v4039
        %v4041 = vmul.f32 %v4029, 3.8918573e-05
        %v4042 = vadd.f32 %v4041, 0.001143296
        %v4043 = vmul.f32 %v4029, %v4042
        %v4044 = vadd.f32 %v4043, 0.014752088
        %v4045 = vmul.f32 %v4029, %v4044
        %v4046 = vadd.f32 %v4045, 0.112945676
        %v4047 = vmul.f32 %v4029, %v4046
        %v4048 = vadd.f32 %v4047, 0.4994258
        %v4049 = vmul.f32 %v4029, %v4048
        %v4050 = vadd.f32 %v4049, 1.0
        %v4051 = vrcp.pop %v4050
        %v4052 = vmul.f32 %v4050, %v4051
        %v4053 = vsub.f32 1.0, %v4052
        %v4054 = vmul.f32 %v4051, %v4053
        %v4055 = vadd.f32 %v4051, %v4054
        %vm4056 = vweird.f32 %v4050
        %vm4057 = vweird.f32 %v4051
        %vm4058 = vmor %vm4056, %vm4057
        %v4059 = vsel %vm4058, %v4051, %v4055
        %v4060 = vand.u32 2147483647, %v4050
        %vm4061 = vcmp.eq.f32.partialorder %v4060, 8.507059e+37
        %v4062 = vand.u32 %v4050, 2147483648
        %v4063 = vor.u32 1.1754944e-38, %v4062
        %v4064 = vsel %vm4061, %v4063, %v4059
        %v4065 = vmul.f32 %v4040, %v4064
        %v4066 = vmin.f32 %v4065, 1.0
        %v4067 = vmax.f32 %v4066, -1.0
        %v4068 = vmul.f32 %v1078, %v1078
        %v4069 = vmin.f32 16.0, %v4068
        %v4070 = vmul.f32 %v4069, 2.1237322e-06
        %v4071 = vadd.f32 %v4070, 0.00028619796
        %v4072 = vmul.f32 %v4069, %v4071
        %v4073 = vadd.f32 %v4072, 0.0036580483
        %v4074 = vmul.f32 %v4069, %v4073
        %v4075 = vadd.f32 %v4074, 0.05243302
        %v4076 = vmul.f32 %v4069, %v4075
        %v4077 = vadd.f32 %v4076, 0.18741608
        %v4078 = vmul.f32 %v4069, %v4077
        %v4079 = vadd.f32 %v4078, 1.1283791
        %v4080 = vmul.f32 %v1078, %v4079
        %v4081 = vmul.f32 %v4069, 3.8918573e-05
        %v4082 = vadd.f32 %v4081, 0.001143296
        %v4083 = vmul.f32 %v4069, %v4082
        %v4084 = vadd.f32 %v4083, 0.014752088
        %v4085 = vmul.f32 %v4069, %v4084
        %v4086 = vadd.f32 %v4085, 0.112945676
        %v4087 = vmul.f32 %v4069, %v4086
        %v4088 = vadd.f32 %v4087, 0.4994258
        %v4089 = vmul.f32 %v4069, %v4088
        %v4090 = vadd.f32 %v4089, 1.0
        %v4091 = vrcp.pop %v4090
        %v4092 = vmul.f32 %v4090, %v4091
        %v4093 = vsub.f32 1.0, %v4092
        %v4094 = vmul.f32 %v4091, %v4093
        %v4095 = vadd.f32 %v4091, %v4094
        %vm4096 = vweird.f32 %v4090
        %vm4097 = vweird.f32 %v4091
        %vm4098 = vmor %vm4096, %vm4097
        %v4099 = vsel %vm4098, %v4091, %v4095
        %v4100 = vand.u32 2147483647, %v4090
        %vm4101 = vcmp.eq.f32.partialorder %v4100, 8.507059e+37
        %v4102 = vand.u32 %v4090, 2147483648
        %v4103 = vor.u32 1.1754944e-38, %v4102
        %v4104 = vsel %vm4101, %v4103, %v4099
        %v4105 = vmul.f32 %v4080, %v4104
        %v4106 = vmin.f32 %v4105, 1.0
        %v4107 = vmax.f32 %v4106, -1.0
        %v4108 = vmul.f32 %v1079, %v1079
        %v4109 = vmin.f32 16.0, %v4108
        %v4110 = vmul.f32 %v4109, 2.1237322e-06
        %v4111 = vadd.f32 %v4110, 0.00028619796
        %v4112 = vmul.f32 %v4109, %v4111
        %v4113 = vadd.f32 %v4112, 0.0036580483
        %v4114 = vmul.f32 %v4109, %v4113
        %v4115 = vadd.f32 %v4114, 0.05243302
        %v4116 = vmul.f32 %v4109, %v4115
        %v4117 = vadd.f32 %v4116, 0.18741608
        %v4118 = vmul.f32 %v4109, %v4117
        %v4119 = vadd.f32 %v4118, 1.1283791
        %v4120 = vmul.f32 %v1079, %v4119
        %v4121 = vmul.f32 %v4109, 3.8918573e-05
        %v4122 = vadd.f32 %v4121, 0.001143296
        %v4123 = vmul.f32 %v4109, %v4122
        %v4124 = vadd.f32 %v4123, 0.014752088
        %v4125 = vmul.f32 %v4109, %v4124
        %v4126 = vadd.f32 %v4125, 0.112945676
        %v4127 = vmul.f32 %v4109, %v4126
        %v4128 = vadd.f32 %v4127, 0.4994258
        %v4129 = vmul.f32 %v4109, %v4128
        %v4130 = vadd.f32 %v4129, 1.0
        %v4131 = vrcp.pop %v4130
        %v4132 = vmul.f32 %v4130, %v4131
        %v4133 = vsub.f32 1.0, %v4132
        %v4134 = vmul.f32 %v4131, %v4133
        %v4135 = vadd.f32 %v4131, %v4134
        %vm4136 = vweird.f32 %v4130
        %vm4137 = vweird.f32 %v4131
        %vm4138 = vmor %vm4136, %vm4137
        %v4139 = vsel %vm4138, %v4131, %v4135
        %v4140 = vand.u32 2147483647, %v4130
        %vm4141 = vcmp.eq.f32.partialorder %v4140, 8.507059e+37
        %v4142 = vand.u32 %v4130, 2147483648
        %v4143 = vor.u32 1.1754944e-38, %v4142
        %v4144 = vsel %vm4141, %v4143, %v4139
        %v4145 = vmul.f32 %v4120, %v4144
        %v4146 = vmin.f32 %v4145, 1.0
        %v4147 = vmax.f32 %v4146, -1.0
        %v4148 = vmul.f32 %v1080, %v1080
        %v4149 = vmin.f32 16.0, %v4148
        %v4150 = vmul.f32 %v4149, 2.1237322e-06
        %v4151 = vadd.f32 %v4150, 0.00028619796
        %v4152 = vmul.f32 %v4149, %v4151
        %v4153 = vadd.f32 %v4152, 0.0036580483
        %v4154 = vmul.f32 %v4149, %v4153
        %v4155 = vadd.f32 %v4154, 0.05243302
        %v4156 = vmul.f32 %v4149, %v4155
        %v4157 = vadd.f32 %v4156, 0.18741608
        %v4158 = vmul.f32 %v4149, %v4157
        %v4159 = vadd.f32 %v4158, 1.1283791
        %v4160 = vmul.f32 %v1080, %v4159
        %v4161 = vmul.f32 %v4149, 3.8918573e-05
        %v4162 = vadd.f32 %v4161, 0.001143296
        %v4163 = vmul.f32 %v4149, %v4162
        %v4164 = vadd.f32 %v4163, 0.014752088
        %v4165 = vmul.f32 %v4149, %v4164
        %v4166 = vadd.f32 %v4165, 0.112945676
        %v4167 = vmul.f32 %v4149, %v4166
        %v4168 = vadd.f32 %v4167, 0.4994258
        %v4169 = vmul.f32 %v4149, %v4168
        %v4170 = vadd.f32 %v4169, 1.0
        %v4171 = vrcp.pop %v4170
        %v4172 = vmul.f32 %v4170, %v4171
        %v4173 = vsub.f32 1.0, %v4172
        %v4174 = vmul.f32 %v4171, %v4173
        %v4175 = vadd.f32 %v4171, %v4174
        %vm4176 = vweird.f32 %v4170
        %vm4177 = vweird.f32 %v4171
        %vm4178 = vmor %vm4176, %vm4177
        %v4179 = vsel %vm4178, %v4171, %v4175
        %v4180 = vand.u32 2147483647, %v4170
        %vm4181 = vcmp.eq.f32.partialorder %v4180, 8.507059e+37
        %v4182 = vand.u32 %v4170, 2147483648
        %v4183 = vor.u32 1.1754944e-38, %v4182
        %v4184 = vsel %vm4181, %v4183, %v4179
        %v4185 = vmul.f32 %v4160, %v4184
        %v4186 = vmin.f32 %v4185, 1.0
        %v4187 = vmax.f32 %v4186, -1.0
        %v4188 = vmul.f32 %v1081, %v1081
        %v4189 = vmin.f32 16.0, %v4188
        %v4190 = vmul.f32 %v4189, 2.1237322e-06
        %v4191 = vadd.f32 %v4190, 0.00028619796
        %v4192 = vmul.f32 %v4189, %v4191
        %v4193 = vadd.f32 %v4192, 0.0036580483
        %v4194 = vmul.f32 %v4189, %v4193
        %v4195 = vadd.f32 %v4194, 0.05243302
        %v4196 = vmul.f32 %v4189, %v4195
        %v4197 = vadd.f32 %v4196, 0.18741608
        %v4198 = vmul.f32 %v4189, %v4197
        %v4199 = vadd.f32 %v4198, 1.1283791
        %v4200 = vmul.f32 %v1081, %v4199
        %v4201 = vmul.f32 %v4189, 3.8918573e-05
        %v4202 = vadd.f32 %v4201, 0.001143296
        %v4203 = vmul.f32 %v4189, %v4202
        %v4204 = vadd.f32 %v4203, 0.014752088
        %v4205 = vmul.f32 %v4189, %v4204
        %v4206 = vadd.f32 %v4205, 0.112945676
        %v4207 = vmul.f32 %v4189, %v4206
        %v4208 = vadd.f32 %v4207, 0.4994258
        %v4209 = vmul.f32 %v4189, %v4208
        %v4210 = vadd.f32 %v4209, 1.0
        %v4211 = vrcp.pop %v4210
        %v4212 = vmul.f32 %v4210, %v4211
        %v4213 = vsub.f32 1.0, %v4212
        %v4214 = vmul.f32 %v4211, %v4213
        %v4215 = vadd.f32 %v4211, %v4214
        %vm4216 = vweird.f32 %v4210
        %vm4217 = vweird.f32 %v4211
        %vm4218 = vmor %vm4216, %vm4217
        %v4219 = vsel %vm4218, %v4211, %v4215
        %v4220 = vand.u32 2147483647, %v4210
        %vm4221 = vcmp.eq.f32.partialorder %v4220, 8.507059e+37
        %v4222 = vand.u32 %v4210, 2147483648
        %v4223 = vor.u32 1.1754944e-38, %v4222
        %v4224 = vsel %vm4221, %v4223, %v4219
        %v4225 = vmul.f32 %v4200, %v4224
        %v4226 = vmin.f32 %v4225, 1.0
        %v4227 = vmax.f32 %v4226, -1.0
        %v4228 = vmul.f32 %v1082, %v1082
        %v4229 = vmin.f32 16.0, %v4228
        %v4230 = vmul.f32 %v4229, 2.1237322e-06
        %v4231 = vadd.f32 %v4230, 0.00028619796
        %v4232 = vmul.f32 %v4229, %v4231
        %v4233 = vadd.f32 %v4232, 0.0036580483
        %v4234 = vmul.f32 %v4229, %v4233
        %v4235 = vadd.f32 %v4234, 0.05243302
        %v4236 = vmul.f32 %v4229, %v4235
        %v4237 = vadd.f32 %v4236, 0.18741608
        %v4238 = vmul.f32 %v4229, %v4237
        %v4239 = vadd.f32 %v4238, 1.1283791
        %v4240 = vmul.f32 %v1082, %v4239
        %v4241 = vmul.f32 %v4229, 3.8918573e-05
        %v4242 = vadd.f32 %v4241, 0.001143296
        %v4243 = vmul.f32 %v4229, %v4242
        %v4244 = vadd.f32 %v4243, 0.014752088
        %v4245 = vmul.f32 %v4229, %v4244
        %v4246 = vadd.f32 %v4245, 0.112945676
        %v4247 = vmul.f32 %v4229, %v4246
        %v4248 = vadd.f32 %v4247, 0.4994258
        %v4249 = vmul.f32 %v4229, %v4248
        %v4250 = vadd.f32 %v4249, 1.0
        %v4251 = vrcp.pop %v4250
        %v4252 = vmul.f32 %v4250, %v4251
        %v4253 = vsub.f32 1.0, %v4252
        %v4254 = vmul.f32 %v4251, %v4253
        %v4255 = vadd.f32 %v4251, %v4254
        %vm4256 = vweird.f32 %v4250
        %vm4257 = vweird.f32 %v4251
        %vm4258 = vmor %vm4256, %vm4257
        %v4259 = vsel %vm4258, %v4251, %v4255
        %v4260 = vand.u32 2147483647, %v4250
        %vm4261 = vcmp.eq.f32.partialorder %v4260, 8.507059e+37
        %v4262 = vand.u32 %v4250, 2147483648
        %v4263 = vor.u32 1.1754944e-38, %v4262
        %v4264 = vsel %vm4261, %v4263, %v4259
        %v4265 = vmul.f32 %v4240, %v4264
        %v4266 = vmin.f32 %v4265, 1.0
        %v4267 = vmax.f32 %v4266, -1.0
        %v4268 = vmul.f32 %v1083, %v1083
        %v4269 = vmin.f32 16.0, %v4268
        %v4270 = vmul.f32 %v4269, 2.1237322e-06
        %v4271 = vadd.f32 %v4270, 0.00028619796
        %v4272 = vmul.f32 %v4269, %v4271
        %v4273 = vadd.f32 %v4272, 0.0036580483
        %v4274 = vmul.f32 %v4269, %v4273
        %v4275 = vadd.f32 %v4274, 0.05243302
        %v4276 = vmul.f32 %v4269, %v4275
        %v4277 = vadd.f32 %v4276, 0.18741608
        %v4278 = vmul.f32 %v4269, %v4277
        %v4279 = vadd.f32 %v4278, 1.1283791
        %v4280 = vmul.f32 %v1083, %v4279
        %v4281 = vmul.f32 %v4269, 3.8918573e-05
        %v4282 = vadd.f32 %v4281, 0.001143296
        %v4283 = vmul.f32 %v4269, %v4282
        %v4284 = vadd.f32 %v4283, 0.014752088
        %v4285 = vmul.f32 %v4269, %v4284
        %v4286 = vadd.f32 %v4285, 0.112945676
        %v4287 = vmul.f32 %v4269, %v4286
        %v4288 = vadd.f32 %v4287, 0.4994258
        %v4289 = vmul.f32 %v4269, %v4288
        %v4290 = vadd.f32 %v4289, 1.0
        %v4291 = vrcp.pop %v4290
        %v4292 = vmul.f32 %v4290, %v4291
        %v4293 = vsub.f32 1.0, %v4292
        %v4294 = vmul.f32 %v4291, %v4293
        %v4295 = vadd.f32 %v4291, %v4294
        %vm4296 = vweird.f32 %v4290
        %vm4297 = vweird.f32 %v4291
        %vm4298 = vmor %vm4296, %vm4297
        %v4299 = vsel %vm4298, %v4291, %v4295
        %v4300 = vand.u32 2147483647, %v4290
        %vm4301 = vcmp.eq.f32.partialorder %v4300, 8.507059e+37
        %v4302 = vand.u32 %v4290, 2147483648
        %v4303 = vor.u32 1.1754944e-38, %v4302
        %v4304 = vsel %vm4301, %v4303, %v4299
        %v4305 = vmul.f32 %v4280, %v4304
        %v4306 = vmin.f32 %v4305, 1.0
        %v4307 = vmax.f32 %v4306, -1.0
        %v4308 = vmul.f32 %v1084, %v1084
        %v4309 = vmin.f32 16.0, %v4308
        %v4310 = vmul.f32 %v4309, 2.1237322e-06
        %v4311 = vadd.f32 %v4310, 0.00028619796
        %v4312 = vmul.f32 %v4309, %v4311
        %v4313 = vadd.f32 %v4312, 0.0036580483
        %v4314 = vmul.f32 %v4309, %v4313
        %v4315 = vadd.f32 %v4314, 0.05243302
        %v4316 = vmul.f32 %v4309, %v4315
        %v4317 = vadd.f32 %v4316, 0.18741608
        %v4318 = vmul.f32 %v4309, %v4317
        %v4319 = vadd.f32 %v4318, 1.1283791
        %v4320 = vmul.f32 %v1084, %v4319
        %v4321 = vmul.f32 %v4309, 3.8918573e-05
        %v4322 = vadd.f32 %v4321, 0.001143296
        %v4323 = vmul.f32 %v4309, %v4322
        %v4324 = vadd.f32 %v4323, 0.014752088
        %v4325 = vmul.f32 %v4309, %v4324
        %v4326 = vadd.f32 %v4325, 0.112945676
        %v4327 = vmul.f32 %v4309, %v4326
        %v4328 = vadd.f32 %v4327, 0.4994258
        %v4329 = vmul.f32 %v4309, %v4328
        %v4330 = vadd.f32 %v4329, 1.0
        %v4331 = vrcp.pop %v4330
        %v4332 = vmul.f32 %v4330, %v4331
        %v4333 = vsub.f32 1.0, %v4332
        %v4334 = vmul.f32 %v4331, %v4333
        %v4335 = vadd.f32 %v4331, %v4334
        %vm4336 = vweird.f32 %v4330
        %vm4337 = vweird.f32 %v4331
        %vm4338 = vmor %vm4336, %vm4337
        %v4339 = vsel %vm4338, %v4331, %v4335
        %v4340 = vand.u32 2147483647, %v4330
        %vm4341 = vcmp.eq.f32.partialorder %v4340, 8.507059e+37
        %v4342 = vand.u32 %v4330, 2147483648
        %v4343 = vor.u32 1.1754944e-38, %v4342
        %v4344 = vsel %vm4341, %v4343, %v4339
        %v4345 = vmul.f32 %v4320, %v4344
        %v4346 = vmin.f32 %v4345, 1.0
        %v4347 = vmax.f32 %v4346, -1.0
        %v4348 = vmul.f32 %v1085, %v1085
        %v4349 = vmin.f32 16.0, %v4348
        %v4350 = vmul.f32 %v4349, 2.1237322e-06
        %v4351 = vadd.f32 %v4350, 0.00028619796
        %v4352 = vmul.f32 %v4349, %v4351
        %v4353 = vadd.f32 %v4352, 0.0036580483
        %v4354 = vmul.f32 %v4349, %v4353
        %v4355 = vadd.f32 %v4354, 0.05243302
        %v4356 = vmul.f32 %v4349, %v4355
        %v4357 = vadd.f32 %v4356, 0.18741608
        %v4358 = vmul.f32 %v4349, %v4357
        %v4359 = vadd.f32 %v4358, 1.1283791
        %v4360 = vmul.f32 %v1085, %v4359
        %v4361 = vmul.f32 %v4349, 3.8918573e-05
        %v4362 = vadd.f32 %v4361, 0.001143296
        %v4363 = vmul.f32 %v4349, %v4362
        %v4364 = vadd.f32 %v4363, 0.014752088
        %v4365 = vmul.f32 %v4349, %v4364
        %v4366 = vadd.f32 %v4365, 0.112945676
        %v4367 = vmul.f32 %v4349, %v4366
        %v4368 = vadd.f32 %v4367, 0.4994258
        %v4369 = vmul.f32 %v4349, %v4368
        %v4370 = vadd.f32 %v4369, 1.0
        %v4371 = vrcp.pop %v4370
        %v4372 = vmul.f32 %v4370, %v4371
        %v4373 = vsub.f32 1.0, %v4372
        %v4374 = vmul.f32 %v4371, %v4373
        %v4375 = vadd.f32 %v4371, %v4374
        %vm4376 = vweird.f32 %v4370
        %vm4377 = vweird.f32 %v4371
        %vm4378 = vmor %vm4376, %vm4377
        %v4379 = vsel %vm4378, %v4371, %v4375
        %v4380 = vand.u32 2147483647, %v4370
        %vm4381 = vcmp.eq.f32.partialorder %v4380, 8.507059e+37
        %v4382 = vand.u32 %v4370, 2147483648
        %v4383 = vor.u32 1.1754944e-38, %v4382
        %v4384 = vsel %vm4381, %v4383, %v4379
        %v4385 = vmul.f32 %v4360, %v4384
        %v4386 = vmin.f32 %v4385, 1.0
        %v4387 = vmax.f32 %v4386, -1.0
        %v4388 = vmul.f32 %v1086, %v1086
        %v4389 = vmin.f32 16.0, %v4388
        %v4390 = vmul.f32 %v4389, 2.1237322e-06
        %v4391 = vadd.f32 %v4390, 0.00028619796
        %v4392 = vmul.f32 %v4389, %v4391
        %v4393 = vadd.f32 %v4392, 0.0036580483
        %v4394 = vmul.f32 %v4389, %v4393
        %v4395 = vadd.f32 %v4394, 0.05243302
        %v4396 = vmul.f32 %v4389, %v4395
        %v4397 = vadd.f32 %v4396, 0.18741608
        %v4398 = vmul.f32 %v4389, %v4397
        %v4399 = vadd.f32 %v4398, 1.1283791
        %v4400 = vmul.f32 %v1086, %v4399
        %v4401 = vmul.f32 %v4389, 3.8918573e-05
        %v4402 = vadd.f32 %v4401, 0.001143296
        %v4403 = vmul.f32 %v4389, %v4402
        %v4404 = vadd.f32 %v4403, 0.014752088
        %v4405 = vmul.f32 %v4389, %v4404
        %v4406 = vadd.f32 %v4405, 0.112945676
        %v4407 = vmul.f32 %v4389, %v4406
        %v4408 = vadd.f32 %v4407, 0.4994258
        %v4409 = vmul.f32 %v4389, %v4408
        %v4410 = vadd.f32 %v4409, 1.0
        %v4411 = vrcp.pop %v4410
        %v4412 = vmul.f32 %v4410, %v4411
        %v4413 = vsub.f32 1.0, %v4412
        %v4414 = vmul.f32 %v4411, %v4413
        %v4415 = vadd.f32 %v4411, %v4414
        %vm4416 = vweird.f32 %v4410
        %vm4417 = vweird.f32 %v4411
        %vm4418 = vmor %vm4416, %vm4417
        %v4419 = vsel %vm4418, %v4411, %v4415
        %v4420 = vand.u32 2147483647, %v4410
        %vm4421 = vcmp.eq.f32.partialorder %v4420, 8.507059e+37
        %v4422 = vand.u32 %v4410, 2147483648
        %v4423 = vor.u32 1.1754944e-38, %v4422
        %v4424 = vsel %vm4421, %v4423, %v4419
        %v4425 = vmul.f32 %v4400, %v4424
        %v4426 = vmin.f32 %v4425, 1.0
        %v4427 = vmax.f32 %v4426, -1.0
        %v4428 = vmul.f32 %v1087, %v1087
        %v4429 = vmin.f32 16.0, %v4428
        %v4430 = vmul.f32 %v4429, 2.1237322e-06
        %v4431 = vadd.f32 %v4430, 0.00028619796
        %v4432 = vmul.f32 %v4429, %v4431
        %v4433 = vadd.f32 %v4432, 0.0036580483
        %v4434 = vmul.f32 %v4429, %v4433
        %v4435 = vadd.f32 %v4434, 0.05243302
        %v4436 = vmul.f32 %v4429, %v4435
        %v4437 = vadd.f32 %v4436, 0.18741608
        %v4438 = vmul.f32 %v4429, %v4437
        %v4439 = vadd.f32 %v4438, 1.1283791
        %v4440 = vmul.f32 %v1087, %v4439
        %v4441 = vmul.f32 %v4429, 3.8918573e-05
        %v4442 = vadd.f32 %v4441, 0.001143296
        %v4443 = vmul.f32 %v4429, %v4442
        %v4444 = vadd.f32 %v4443, 0.014752088
        %v4445 = vmul.f32 %v4429, %v4444
        %v4446 = vadd.f32 %v4445, 0.112945676
        %v4447 = vmul.f32 %v4429, %v4446
        %v4448 = vadd.f32 %v4447, 0.4994258
        %v4449 = vmul.f32 %v4429, %v4448
        %v4450 = vadd.f32 %v4449, 1.0
        %v4451 = vrcp.pop %v4450
        %v4452 = vmul.f32 %v4450, %v4451
        %v4453 = vsub.f32 1.0, %v4452
        %v4454 = vmul.f32 %v4451, %v4453
        %v4455 = vadd.f32 %v4451, %v4454
        %vm4456 = vweird.f32 %v4450
        %vm4457 = vweird.f32 %v4451
        %vm4458 = vmor %vm4456, %vm4457
        %v4459 = vsel %vm4458, %v4451, %v4455
        %v4460 = vand.u32 2147483647, %v4450
        %vm4461 = vcmp.eq.f32.partialorder %v4460, 8.507059e+37
        %v4462 = vand.u32 %v4450, 2147483648
        %v4463 = vor.u32 1.1754944e-38, %v4462
        %v4464 = vsel %vm4461, %v4463, %v4459
        %v4465 = vmul.f32 %v4440, %v4464
        %v4466 = vmin.f32 %v4465, 1.0
        %v4467 = vmax.f32 %v4466, -1.0
        %v4468 = vmul.f32 %v1088, %v1088
        %v4469 = vmin.f32 16.0, %v4468
        %v4470 = vmul.f32 %v4469, 2.1237322e-06
        %v4471 = vadd.f32 %v4470, 0.00028619796
        %v4472 = vmul.f32 %v4469, %v4471
        %v4473 = vadd.f32 %v4472, 0.0036580483
        %v4474 = vmul.f32 %v4469, %v4473
        %v4475 = vadd.f32 %v4474, 0.05243302
        %v4476 = vmul.f32 %v4469, %v4475
        %v4477 = vadd.f32 %v4476, 0.18741608
        %v4478 = vmul.f32 %v4469, %v4477
        %v4479 = vadd.f32 %v4478, 1.1283791
        %v4480 = vmul.f32 %v1088, %v4479
        %v4481 = vmul.f32 %v4469, 3.8918573e-05
        %v4482 = vadd.f32 %v4481, 0.001143296
        %v4483 = vmul.f32 %v4469, %v4482
        %v4484 = vadd.f32 %v4483, 0.014752088
        %v4485 = vmul.f32 %v4469, %v4484
        %v4486 = vadd.f32 %v4485, 0.112945676
        %v4487 = vmul.f32 %v4469, %v4486
        %v4488 = vadd.f32 %v4487, 0.4994258
        %v4489 = vmul.f32 %v4469, %v4488
        %v4490 = vadd.f32 %v4489, 1.0
        %v4491 = vrcp.pop %v4490
        %v4492 = vmul.f32 %v4490, %v4491
        %v4493 = vsub.f32 1.0, %v4492
        %v4494 = vmul.f32 %v4491, %v4493
        %v4495 = vadd.f32 %v4491, %v4494
        %vm4496 = vweird.f32 %v4490
        %vm4497 = vweird.f32 %v4491
        %vm4498 = vmor %vm4496, %vm4497
        %v4499 = vsel %vm4498, %v4491, %v4495
        %v4500 = vand.u32 2147483647, %v4490
        %vm4501 = vcmp.eq.f32.partialorder %v4500, 8.507059e+37
        %v4502 = vand.u32 %v4490, 2147483648
        %v4503 = vor.u32 1.1754944e-38, %v4502
        %v4504 = vsel %vm4501, %v4503, %v4499
        %v4505 = vmul.f32 %v4480, %v4504
        %v4506 = vmin.f32 %v4505, 1.0
        %v4507 = vmax.f32 %v4506, -1.0
        %v4508 = vmul.f32 %v1089, %v1089
        %v4509 = vmin.f32 16.0, %v4508
        %v4510 = vmul.f32 %v4509, 2.1237322e-06
        %v4511 = vadd.f32 %v4510, 0.00028619796
        %v4512 = vmul.f32 %v4509, %v4511
        %v4513 = vadd.f32 %v4512, 0.0036580483
        %v4514 = vmul.f32 %v4509, %v4513
        %v4515 = vadd.f32 %v4514, 0.05243302
        %v4516 = vmul.f32 %v4509, %v4515
        %v4517 = vadd.f32 %v4516, 0.18741608
        %v4518 = vmul.f32 %v4509, %v4517
        %v4519 = vadd.f32 %v4518, 1.1283791
        %v4520 = vmul.f32 %v1089, %v4519
        %v4521 = vmul.f32 %v4509, 3.8918573e-05
        %v4522 = vadd.f32 %v4521, 0.001143296
        %v4523 = vmul.f32 %v4509, %v4522
        %v4524 = vadd.f32 %v4523, 0.014752088
        %v4525 = vmul.f32 %v4509, %v4524
        %v4526 = vadd.f32 %v4525, 0.112945676
        %v4527 = vmul.f32 %v4509, %v4526
        %v4528 = vadd.f32 %v4527, 0.4994258
        %v4529 = vmul.f32 %v4509, %v4528
        %v4530 = vadd.f32 %v4529, 1.0
        %v4531 = vrcp.pop %v4530
        %v4532 = vmul.f32 %v4530, %v4531
        %v4533 = vsub.f32 1.0, %v4532
        %v4534 = vmul.f32 %v4531, %v4533
        %v4535 = vadd.f32 %v4531, %v4534
        %vm4536 = vweird.f32 %v4530
        %vm4537 = vweird.f32 %v4531
        %vm4538 = vmor %vm4536, %vm4537
        %v4539 = vsel %vm4538, %v4531, %v4535
        %v4540 = vand.u32 2147483647, %v4530
        %vm4541 = vcmp.eq.f32.partialorder %v4540, 8.507059e+37
        %v4542 = vand.u32 %v4530, 2147483648
        %v4543 = vor.u32 1.1754944e-38, %v4542
        %v4544 = vsel %vm4541, %v4543, %v4539
        %v4545 = vmul.f32 %v4520, %v4544
        %v4546 = vmin.f32 %v4545, 1.0
        %v4547 = vmax.f32 %v4546, -1.0
        %v4548 = vmul.f32 %v1090, %v1090
        %v4549 = vmin.f32 16.0, %v4548
        %v4550 = vmul.f32 %v4549, 2.1237322e-06
        %v4551 = vadd.f32 %v4550, 0.00028619796
        %v4552 = vmul.f32 %v4549, %v4551
        %v4553 = vadd.f32 %v4552, 0.0036580483
        %v4554 = vmul.f32 %v4549, %v4553
        %v4555 = vadd.f32 %v4554, 0.05243302
        %v4556 = vmul.f32 %v4549, %v4555
        %v4557 = vadd.f32 %v4556, 0.18741608
        %v4558 = vmul.f32 %v4549, %v4557
        %v4559 = vadd.f32 %v4558, 1.1283791
        %v4560 = vmul.f32 %v1090, %v4559
        %v4561 = vmul.f32 %v4549, 3.8918573e-05
        %v4562 = vadd.f32 %v4561, 0.001143296
        %v4563 = vmul.f32 %v4549, %v4562
        %v4564 = vadd.f32 %v4563, 0.014752088
        %v4565 = vmul.f32 %v4549, %v4564
        %v4566 = vadd.f32 %v4565, 0.112945676
        %v4567 = vmul.f32 %v4549, %v4566
        %v4568 = vadd.f32 %v4567, 0.4994258
        %v4569 = vmul.f32 %v4549, %v4568
        %v4570 = vadd.f32 %v4569, 1.0
        %v4571 = vrcp.pop %v4570
        %v4572 = vmul.f32 %v4570, %v4571
        %v4573 = vsub.f32 1.0, %v4572
        %v4574 = vmul.f32 %v4571, %v4573
        %v4575 = vadd.f32 %v4571, %v4574
        %vm4576 = vweird.f32 %v4570
        %vm4577 = vweird.f32 %v4571
        %vm4578 = vmor %vm4576, %vm4577
        %v4579 = vsel %vm4578, %v4571, %v4575
        %v4580 = vand.u32 2147483647, %v4570
        %vm4581 = vcmp.eq.f32.partialorder %v4580, 8.507059e+37
        %v4582 = vand.u32 %v4570, 2147483648
        %v4583 = vor.u32 1.1754944e-38, %v4582
        %v4584 = vsel %vm4581, %v4583, %v4579
        %v4585 = vmul.f32 %v4560, %v4584
        %v4586 = vmin.f32 %v4585, 1.0
        %v4587 = vmax.f32 %v4586, -1.0
        %v4588 = vmul.f32 %v1091, %v1091
        %v4589 = vmin.f32 16.0, %v4588
        %v4590 = vmul.f32 %v4589, 2.1237322e-06
        %v4591 = vadd.f32 %v4590, 0.00028619796
        %v4592 = vmul.f32 %v4589, %v4591
        %v4593 = vadd.f32 %v4592, 0.0036580483
        %v4594 = vmul.f32 %v4589, %v4593
        %v4595 = vadd.f32 %v4594, 0.05243302
        %v4596 = vmul.f32 %v4589, %v4595
        %v4597 = vadd.f32 %v4596, 0.18741608
        %v4598 = vmul.f32 %v4589, %v4597
        %v4599 = vadd.f32 %v4598, 1.1283791
        %v4600 = vmul.f32 %v1091, %v4599
        %v4601 = vmul.f32 %v4589, 3.8918573e-05
        %v4602 = vadd.f32 %v4601, 0.001143296
        %v4603 = vmul.f32 %v4589, %v4602
        %v4604 = vadd.f32 %v4603, 0.014752088
        %v4605 = vmul.f32 %v4589, %v4604
        %v4606 = vadd.f32 %v4605, 0.112945676
        %v4607 = vmul.f32 %v4589, %v4606
        %v4608 = vadd.f32 %v4607, 0.4994258
        %v4609 = vmul.f32 %v4589, %v4608
        %v4610 = vadd.f32 %v4609, 1.0
        %v4611 = vrcp.pop %v4610
        %v4612 = vmul.f32 %v4610, %v4611
        %v4613 = vsub.f32 1.0, %v4612
        %v4614 = vmul.f32 %v4611, %v4613
        %v4615 = vadd.f32 %v4611, %v4614
        %vm4616 = vweird.f32 %v4610
        %vm4617 = vweird.f32 %v4611
        %vm4618 = vmor %vm4616, %vm4617
        %v4619 = vsel %vm4618, %v4611, %v4615
        %v4620 = vand.u32 2147483647, %v4610
        %vm4621 = vcmp.eq.f32.partialorder %v4620, 8.507059e+37
        %v4622 = vand.u32 %v4610, 2147483648
        %v4623 = vor.u32 1.1754944e-38, %v4622
        %v4624 = vsel %vm4621, %v4623, %v4619
        %v4625 = vmul.f32 %v4600, %v4624
        %v4626 = vmin.f32 %v4625, 1.0
        %v4627 = vmax.f32 %v4626, -1.0
        %v4628 = vmul.f32 %v1092, %v1092
        %v4629 = vmin.f32 16.0, %v4628
        %v4630 = vmul.f32 %v4629, 2.1237322e-06
        %v4631 = vadd.f32 %v4630, 0.00028619796
        %v4632 = vmul.f32 %v4629, %v4631
        %v4633 = vadd.f32 %v4632, 0.0036580483
        %v4634 = vmul.f32 %v4629, %v4633
        %v4635 = vadd.f32 %v4634, 0.05243302
        %v4636 = vmul.f32 %v4629, %v4635
        %v4637 = vadd.f32 %v4636, 0.18741608
        %v4638 = vmul.f32 %v4629, %v4637
        %v4639 = vadd.f32 %v4638, 1.1283791
        %v4640 = vmul.f32 %v1092, %v4639
        %v4641 = vmul.f32 %v4629, 3.8918573e-05
        %v4642 = vadd.f32 %v4641, 0.001143296
        %v4643 = vmul.f32 %v4629, %v4642
        %v4644 = vadd.f32 %v4643, 0.014752088
        %v4645 = vmul.f32 %v4629, %v4644
        %v4646 = vadd.f32 %v4645, 0.112945676
        %v4647 = vmul.f32 %v4629, %v4646
        %v4648 = vadd.f32 %v4647, 0.4994258
        %v4649 = vmul.f32 %v4629, %v4648
        %v4650 = vadd.f32 %v4649, 1.0
        %v4651 = vrcp.pop %v4650
        %v4652 = vmul.f32 %v4650, %v4651
        %v4653 = vsub.f32 1.0, %v4652
        %v4654 = vmul.f32 %v4651, %v4653
        %v4655 = vadd.f32 %v4651, %v4654
        %vm4656 = vweird.f32 %v4650
        %vm4657 = vweird.f32 %v4651
        %vm4658 = vmor %vm4656, %vm4657
        %v4659 = vsel %vm4658, %v4651, %v4655
        %v4660 = vand.u32 2147483647, %v4650
        %vm4661 = vcmp.eq.f32.partialorder %v4660, 8.507059e+37
        %v4662 = vand.u32 %v4650, 2147483648
        %v4663 = vor.u32 1.1754944e-38, %v4662
        %v4664 = vsel %vm4661, %v4663, %v4659
        %v4665 = vmul.f32 %v4640, %v4664
        %v4666 = vmin.f32 %v4665, 1.0
        %v4667 = vmax.f32 %v4666, -1.0
        %v4668 = vmul.f32 %v1093, %v1093
        %v4669 = vmin.f32 16.0, %v4668
        %v4670 = vmul.f32 %v4669, 2.1237322e-06
        %v4671 = vadd.f32 %v4670, 0.00028619796
        %v4672 = vmul.f32 %v4669, %v4671
        %v4673 = vadd.f32 %v4672, 0.0036580483
        %v4674 = vmul.f32 %v4669, %v4673
        %v4675 = vadd.f32 %v4674, 0.05243302
        %v4676 = vmul.f32 %v4669, %v4675
        %v4677 = vadd.f32 %v4676, 0.18741608
        %v4678 = vmul.f32 %v4669, %v4677
        %v4679 = vadd.f32 %v4678, 1.1283791
        %v4680 = vmul.f32 %v1093, %v4679
        %v4681 = vmul.f32 %v4669, 3.8918573e-05
        %v4682 = vadd.f32 %v4681, 0.001143296
        %v4683 = vmul.f32 %v4669, %v4682
        %v4684 = vadd.f32 %v4683, 0.014752088
        %v4685 = vmul.f32 %v4669, %v4684
        %v4686 = vadd.f32 %v4685, 0.112945676
        %v4687 = vmul.f32 %v4669, %v4686
        %v4688 = vadd.f32 %v4687, 0.4994258
        %v4689 = vmul.f32 %v4669, %v4688
        %v4690 = vadd.f32 %v4689, 1.0
        %v4691 = vrcp.pop %v4690
        %v4692 = vmul.f32 %v4690, %v4691
        %v4693 = vsub.f32 1.0, %v4692
        %v4694 = vmul.f32 %v4691, %v4693
        %v4695 = vadd.f32 %v4691, %v4694
        %vm4696 = vweird.f32 %v4690
        %vm4697 = vweird.f32 %v4691
        %vm4698 = vmor %vm4696, %vm4697
        %v4699 = vsel %vm4698, %v4691, %v4695
        %v4700 = vand.u32 2147483647, %v4690
        %vm4701 = vcmp.eq.f32.partialorder %v4700, 8.507059e+37
        %v4702 = vand.u32 %v4690, 2147483648
        %v4703 = vor.u32 1.1754944e-38, %v4702
        %v4704 = vsel %vm4701, %v4703, %v4699
        %v4705 = vmul.f32 %v4680, %v4704
        %v4706 = vmin.f32 %v4705, 1.0
        %v4707 = vmax.f32 %v4706, -1.0
        %v4708 = vmul.f32 %v1094, %v1094
        %v4709 = vmin.f32 16.0, %v4708
        %v4710 = vmul.f32 %v4709, 2.1237322e-06
        %v4711 = vadd.f32 %v4710, 0.00028619796
        %v4712 = vmul.f32 %v4709, %v4711
        %v4713 = vadd.f32 %v4712, 0.0036580483
        %v4714 = vmul.f32 %v4709, %v4713
        %v4715 = vadd.f32 %v4714, 0.05243302
        %v4716 = vmul.f32 %v4709, %v4715
        %v4717 = vadd.f32 %v4716, 0.18741608
        %v4718 = vmul.f32 %v4709, %v4717
        %v4719 = vadd.f32 %v4718, 1.1283791
        %v4720 = vmul.f32 %v1094, %v4719
        %v4721 = vmul.f32 %v4709, 3.8918573e-05
        %v4722 = vadd.f32 %v4721, 0.001143296
        %v4723 = vmul.f32 %v4709, %v4722
        %v4724 = vadd.f32 %v4723, 0.014752088
        %v4725 = vmul.f32 %v4709, %v4724
        %v4726 = vadd.f32 %v4725, 0.112945676
        %v4727 = vmul.f32 %v4709, %v4726
        %v4728 = vadd.f32 %v4727, 0.4994258
        %v4729 = vmul.f32 %v4709, %v4728
        %v4730 = vadd.f32 %v4729, 1.0
        %v4731 = vrcp.pop %v4730
        %v4732 = vmul.f32 %v4730, %v4731
        %v4733 = vsub.f32 1.0, %v4732
        %v4734 = vmul.f32 %v4731, %v4733
        %v4735 = vadd.f32 %v4731, %v4734
        %vm4736 = vweird.f32 %v4730
        %vm4737 = vweird.f32 %v4731
        %vm4738 = vmor %vm4736, %vm4737
        %v4739 = vsel %vm4738, %v4731, %v4735
        %v4740 = vand.u32 2147483647, %v4730
        %vm4741 = vcmp.eq.f32.partialorder %v4740, 8.507059e+37
        %v4742 = vand.u32 %v4730, 2147483648
        %v4743 = vor.u32 1.1754944e-38, %v4742
        %v4744 = vsel %vm4741, %v4743, %v4739
        %v4745 = vmul.f32 %v4720, %v4744
        %v4746 = vmin.f32 %v4745, 1.0
        %v4747 = vmax.f32 %v4746, -1.0
        %v4748 = vmul.f32 %v1095, %v1095
        %v4749 = vmin.f32 16.0, %v4748
        %v4750 = vmul.f32 %v4749, 2.1237322e-06
        %v4751 = vadd.f32 %v4750, 0.00028619796
        %v4752 = vmul.f32 %v4749, %v4751
        %v4753 = vadd.f32 %v4752, 0.0036580483
        %v4754 = vmul.f32 %v4749, %v4753
        %v4755 = vadd.f32 %v4754, 0.05243302
        %v4756 = vmul.f32 %v4749, %v4755
        %v4757 = vadd.f32 %v4756, 0.18741608
        %v4758 = vmul.f32 %v4749, %v4757
        %v4759 = vadd.f32 %v4758, 1.1283791
        %v4760 = vmul.f32 %v1095, %v4759
        %v4761 = vmul.f32 %v4749, 3.8918573e-05
        %v4762 = vadd.f32 %v4761, 0.001143296
        %v4763 = vmul.f32 %v4749, %v4762
        %v4764 = vadd.f32 %v4763, 0.014752088
        %v4765 = vmul.f32 %v4749, %v4764
        %v4766 = vadd.f32 %v4765, 0.112945676
        %v4767 = vmul.f32 %v4749, %v4766
        %v4768 = vadd.f32 %v4767, 0.4994258
        %v4769 = vmul.f32 %v4749, %v4768
        %v4770 = vadd.f32 %v4769, 1.0
        %v4771 = vrcp.pop %v4770
        %v4772 = vmul.f32 %v4770, %v4771
        %v4773 = vsub.f32 1.0, %v4772
        %v4774 = vmul.f32 %v4771, %v4773
        %v4775 = vadd.f32 %v4771, %v4774
        %vm4776 = vweird.f32 %v4770
        %vm4777 = vweird.f32 %v4771
        %vm4778 = vmor %vm4776, %vm4777
        %v4779 = vsel %vm4778, %v4771, %v4775
        %v4780 = vand.u32 2147483647, %v4770
        %vm4781 = vcmp.eq.f32.partialorder %v4780, 8.507059e+37
        %v4782 = vand.u32 %v4770, 2147483648
        %v4783 = vor.u32 1.1754944e-38, %v4782
        %v4784 = vsel %vm4781, %v4783, %v4779
        %v4785 = vmul.f32 %v4760, %v4784
        %v4786 = vmin.f32 %v4785, 1.0
        %v4787 = vmax.f32 %v4786, -1.0
        %v4788 = vmul.f32 %v1096, %v1096
        %v4789 = vmin.f32 16.0, %v4788
        %v4790 = vmul.f32 %v4789, 2.1237322e-06
        %v4791 = vadd.f32 %v4790, 0.00028619796
        %v4792 = vmul.f32 %v4789, %v4791
        %v4793 = vadd.f32 %v4792, 0.0036580483
        %v4794 = vmul.f32 %v4789, %v4793
        %v4795 = vadd.f32 %v4794, 0.05243302
        %v4796 = vmul.f32 %v4789, %v4795
        %v4797 = vadd.f32 %v4796, 0.18741608
        %v4798 = vmul.f32 %v4789, %v4797
        %v4799 = vadd.f32 %v4798, 1.1283791
        %v4800 = vmul.f32 %v1096, %v4799
        %v4801 = vmul.f32 %v4789, 3.8918573e-05
        %v4802 = vadd.f32 %v4801, 0.001143296
        %v4803 = vmul.f32 %v4789, %v4802
        %v4804 = vadd.f32 %v4803, 0.014752088
        %v4805 = vmul.f32 %v4789, %v4804
        %v4806 = vadd.f32 %v4805, 0.112945676
        %v4807 = vmul.f32 %v4789, %v4806
        %v4808 = vadd.f32 %v4807, 0.4994258
        %v4809 = vmul.f32 %v4789, %v4808
        %v4810 = vadd.f32 %v4809, 1.0
        %v4811 = vrcp.pop %v4810
        %v4812 = vmul.f32 %v4810, %v4811
        %v4813 = vsub.f32 1.0, %v4812
        %v4814 = vmul.f32 %v4811, %v4813
        %v4815 = vadd.f32 %v4811, %v4814
        %vm4816 = vweird.f32 %v4810
        %vm4817 = vweird.f32 %v4811
        %vm4818 = vmor %vm4816, %vm4817
        %v4819 = vsel %vm4818, %v4811, %v4815
        %v4820 = vand.u32 2147483647, %v4810
        %vm4821 = vcmp.eq.f32.partialorder %v4820, 8.507059e+37
        %v4822 = vand.u32 %v4810, 2147483648
        %v4823 = vor.u32 1.1754944e-38, %v4822
        %v4824 = vsel %vm4821, %v4823, %v4819
        %v4825 = vmul.f32 %v4800, %v4824
        %v4826 = vmin.f32 %v4825, 1.0
        %v4827 = vmax.f32 %v4826, -1.0
        %v4828 = vmul.f32 %v1097, %v1097
        %v4829 = vmin.f32 16.0, %v4828
        %v4830 = vmul.f32 %v4829, 2.1237322e-06
        %v4831 = vadd.f32 %v4830, 0.00028619796
        %v4832 = vmul.f32 %v4829, %v4831
        %v4833 = vadd.f32 %v4832, 0.0036580483
        %v4834 = vmul.f32 %v4829, %v4833
        %v4835 = vadd.f32 %v4834, 0.05243302
        %v4836 = vmul.f32 %v4829, %v4835
        %v4837 = vadd.f32 %v4836, 0.18741608
        %v4838 = vmul.f32 %v4829, %v4837
        %v4839 = vadd.f32 %v4838, 1.1283791
        %v4840 = vmul.f32 %v1097, %v4839
        %v4841 = vmul.f32 %v4829, 3.8918573e-05
        %v4842 = vadd.f32 %v4841, 0.001143296
        %v4843 = vmul.f32 %v4829, %v4842
        %v4844 = vadd.f32 %v4843, 0.014752088
        %v4845 = vmul.f32 %v4829, %v4844
        %v4846 = vadd.f32 %v4845, 0.112945676
        %v4847 = vmul.f32 %v4829, %v4846
        %v4848 = vadd.f32 %v4847, 0.4994258
        %v4849 = vmul.f32 %v4829, %v4848
        %v4850 = vadd.f32 %v4849, 1.0
        %v4851 = vrcp.pop %v4850
        %v4852 = vmul.f32 %v4850, %v4851
        %v4853 = vsub.f32 1.0, %v4852
        %v4854 = vmul.f32 %v4851, %v4853
        %v4855 = vadd.f32 %v4851, %v4854
        %vm4856 = vweird.f32 %v4850
        %vm4857 = vweird.f32 %v4851
        %vm4858 = vmor %vm4856, %vm4857
        %v4859 = vsel %vm4858, %v4851, %v4855
        %v4860 = vand.u32 2147483647, %v4850
        %vm4861 = vcmp.eq.f32.partialorder %v4860, 8.507059e+37
        %v4862 = vand.u32 %v4850, 2147483648
        %v4863 = vor.u32 1.1754944e-38, %v4862
        %v4864 = vsel %vm4861, %v4863, %v4859
        %v4865 = vmul.f32 %v4840, %v4864
        %v4866 = vmin.f32 %v4865, 1.0
        %v4867 = vmax.f32 %v4866, -1.0
        %v4868 = vmul.f32 %v1098, %v1098
        %v4869 = vmin.f32 16.0, %v4868
        %v4870 = vmul.f32 %v4869, 2.1237322e-06
        %v4871 = vadd.f32 %v4870, 0.00028619796
        %v4872 = vmul.f32 %v4869, %v4871
        %v4873 = vadd.f32 %v4872, 0.0036580483
        %v4874 = vmul.f32 %v4869, %v4873
        %v4875 = vadd.f32 %v4874, 0.05243302
        %v4876 = vmul.f32 %v4869, %v4875
        %v4877 = vadd.f32 %v4876, 0.18741608
        %v4878 = vmul.f32 %v4869, %v4877
        %v4879 = vadd.f32 %v4878, 1.1283791
        %v4880 = vmul.f32 %v1098, %v4879
        %v4881 = vmul.f32 %v4869, 3.8918573e-05
        %v4882 = vadd.f32 %v4881, 0.001143296
        %v4883 = vmul.f32 %v4869, %v4882
        %v4884 = vadd.f32 %v4883, 0.014752088
        %v4885 = vmul.f32 %v4869, %v4884
        %v4886 = vadd.f32 %v4885, 0.112945676
        %v4887 = vmul.f32 %v4869, %v4886
        %v4888 = vadd.f32 %v4887, 0.4994258
        %v4889 = vmul.f32 %v4869, %v4888
        %v4890 = vadd.f32 %v4889, 1.0
        %v4891 = vrcp.pop %v4890
        %v4892 = vmul.f32 %v4890, %v4891
        %v4893 = vsub.f32 1.0, %v4892
        %v4894 = vmul.f32 %v4891, %v4893
        %v4895 = vadd.f32 %v4891, %v4894
        %vm4896 = vweird.f32 %v4890
        %vm4897 = vweird.f32 %v4891
        %vm4898 = vmor %vm4896, %vm4897
        %v4899 = vsel %vm4898, %v4891, %v4895
        %v4900 = vand.u32 2147483647, %v4890
        %vm4901 = vcmp.eq.f32.partialorder %v4900, 8.507059e+37
        %v4902 = vand.u32 %v4890, 2147483648
        %v4903 = vor.u32 1.1754944e-38, %v4902
        %v4904 = vsel %vm4901, %v4903, %v4899
        %v4905 = vmul.f32 %v4880, %v4904
        %v4906 = vmin.f32 %v4905, 1.0
        %v4907 = vmax.f32 %v4906, -1.0
        %v4908 = vmul.f32 %v1099, %v1099
        %v4909 = vmin.f32 16.0, %v4908
        %v4910 = vmul.f32 %v4909, 2.1237322e-06
        %v4911 = vadd.f32 %v4910, 0.00028619796
        %v4912 = vmul.f32 %v4909, %v4911
        %v4913 = vadd.f32 %v4912, 0.0036580483
        %v4914 = vmul.f32 %v4909, %v4913
        %v4915 = vadd.f32 %v4914, 0.05243302
        %v4916 = vmul.f32 %v4909, %v4915
        %v4917 = vadd.f32 %v4916, 0.18741608
        %v4918 = vmul.f32 %v4909, %v4917
        %v4919 = vadd.f32 %v4918, 1.1283791
        %v4920 = vmul.f32 %v1099, %v4919
        %v4921 = vmul.f32 %v4909, 3.8918573e-05
        %v4922 = vadd.f32 %v4921, 0.001143296
        %v4923 = vmul.f32 %v4909, %v4922
        %v4924 = vadd.f32 %v4923, 0.014752088
        %v4925 = vmul.f32 %v4909, %v4924
        %v4926 = vadd.f32 %v4925, 0.112945676
        %v4927 = vmul.f32 %v4909, %v4926
        %v4928 = vadd.f32 %v4927, 0.4994258
        %v4929 = vmul.f32 %v4909, %v4928
        %v4930 = vadd.f32 %v4929, 1.0
        %v4931 = vrcp.pop %v4930
        %v4932 = vmul.f32 %v4930, %v4931
        %v4933 = vsub.f32 1.0, %v4932
        %v4934 = vmul.f32 %v4931, %v4933
        %v4935 = vadd.f32 %v4931, %v4934
        %vm4936 = vweird.f32 %v4930
        %vm4937 = vweird.f32 %v4931
        %vm4938 = vmor %vm4936, %vm4937
        %v4939 = vsel %vm4938, %v4931, %v4935
        %v4940 = vand.u32 2147483647, %v4930
        %vm4941 = vcmp.eq.f32.partialorder %v4940, 8.507059e+37
        %v4942 = vand.u32 %v4930, 2147483648
        %v4943 = vor.u32 1.1754944e-38, %v4942
        %v4944 = vsel %vm4941, %v4943, %v4939
        %v4945 = vmul.f32 %v4920, %v4944
        %v4946 = vmin.f32 %v4945, 1.0
        %v4947 = vmax.f32 %v4946, -1.0
        %v4948 = vmul.f32 %v1100, %v1100
        %v4949 = vmin.f32 16.0, %v4948
        %v4950 = vmul.f32 %v4949, 2.1237322e-06
        %v4951 = vadd.f32 %v4950, 0.00028619796
        %v4952 = vmul.f32 %v4949, %v4951
        %v4953 = vadd.f32 %v4952, 0.0036580483
        %v4954 = vmul.f32 %v4949, %v4953
        %v4955 = vadd.f32 %v4954, 0.05243302
        %v4956 = vmul.f32 %v4949, %v4955
        %v4957 = vadd.f32 %v4956, 0.18741608
        %v4958 = vmul.f32 %v4949, %v4957
        %v4959 = vadd.f32 %v4958, 1.1283791
        %v4960 = vmul.f32 %v1100, %v4959
        %v4961 = vmul.f32 %v4949, 3.8918573e-05
        %v4962 = vadd.f32 %v4961, 0.001143296
        %v4963 = vmul.f32 %v4949, %v4962
        %v4964 = vadd.f32 %v4963, 0.014752088
        %v4965 = vmul.f32 %v4949, %v4964
        %v4966 = vadd.f32 %v4965, 0.112945676
        %v4967 = vmul.f32 %v4949, %v4966
        %v4968 = vadd.f32 %v4967, 0.4994258
        %v4969 = vmul.f32 %v4949, %v4968
        %v4970 = vadd.f32 %v4969, 1.0
        %v4971 = vrcp.pop %v4970
        %v4972 = vmul.f32 %v4970, %v4971
        %v4973 = vsub.f32 1.0, %v4972
        %v4974 = vmul.f32 %v4971, %v4973
        %v4975 = vadd.f32 %v4971, %v4974
        %vm4976 = vweird.f32 %v4970
        %vm4977 = vweird.f32 %v4971
        %vm4978 = vmor %vm4976, %vm4977
        %v4979 = vsel %vm4978, %v4971, %v4975
        %v4980 = vand.u32 2147483647, %v4970
        %vm4981 = vcmp.eq.f32.partialorder %v4980, 8.507059e+37
        %v4982 = vand.u32 %v4970, 2147483648
        %v4983 = vor.u32 1.1754944e-38, %v4982
        %v4984 = vsel %vm4981, %v4983, %v4979
        %v4985 = vmul.f32 %v4960, %v4984
        %v4986 = vmin.f32 %v4985, 1.0
        %v4987 = vmax.f32 %v4986, -1.0
        %v4988 = vmul.f32 %v1101, %v1101
        %v4989 = vmin.f32 16.0, %v4988
        %v4990 = vmul.f32 %v4989, 2.1237322e-06
        %v4991 = vadd.f32 %v4990, 0.00028619796
        %v4992 = vmul.f32 %v4989, %v4991
        %v4993 = vadd.f32 %v4992, 0.0036580483
        %v4994 = vmul.f32 %v4989, %v4993
        %v4995 = vadd.f32 %v4994, 0.05243302
        %v4996 = vmul.f32 %v4989, %v4995
        %v4997 = vadd.f32 %v4996, 0.18741608
        %v4998 = vmul.f32 %v4989, %v4997
        %v4999 = vadd.f32 %v4998, 1.1283791
        %v5000 = vmul.f32 %v1101, %v4999
        %v5001 = vmul.f32 %v4989, 3.8918573e-05
        %v5002 = vadd.f32 %v5001, 0.001143296
        %v5003 = vmul.f32 %v4989, %v5002
        %v5004 = vadd.f32 %v5003, 0.014752088
        %v5005 = vmul.f32 %v4989, %v5004
        %v5006 = vadd.f32 %v5005, 0.112945676
        %v5007 = vmul.f32 %v4989, %v5006
        %v5008 = vadd.f32 %v5007, 0.4994258
        %v5009 = vmul.f32 %v4989, %v5008
        %v5010 = vadd.f32 %v5009, 1.0
        %v5011 = vrcp.pop %v5010
        %v5012 = vmul.f32 %v5010, %v5011
        %v5013 = vsub.f32 1.0, %v5012
        %v5014 = vmul.f32 %v5011, %v5013
        %v5015 = vadd.f32 %v5011, %v5014
        %vm5016 = vweird.f32 %v5010
        %vm5017 = vweird.f32 %v5011
        %vm5018 = vmor %vm5016, %vm5017
        %v5019 = vsel %vm5018, %v5011, %v5015
        %v5020 = vand.u32 2147483647, %v5010
        %vm5021 = vcmp.eq.f32.partialorder %v5020, 8.507059e+37
        %v5022 = vand.u32 %v5010, 2147483648
        %v5023 = vor.u32 1.1754944e-38, %v5022
        %v5024 = vsel %vm5021, %v5023, %v5019
        %v5025 = vmul.f32 %v5000, %v5024
        %v5026 = vmin.f32 %v5025, 1.0
        %v5027 = vmax.f32 %v5026, -1.0
        %v5028 = vmul.f32 %v1102, %v1102
        %v5029 = vmin.f32 16.0, %v5028
        %v5030 = vmul.f32 %v5029, 2.1237322e-06
        %v5031 = vadd.f32 %v5030, 0.00028619796
        %v5032 = vmul.f32 %v5029, %v5031
        %v5033 = vadd.f32 %v5032, 0.0036580483
        %v5034 = vmul.f32 %v5029, %v5033
        %v5035 = vadd.f32 %v5034, 0.05243302
        %v5036 = vmul.f32 %v5029, %v5035
        %v5037 = vadd.f32 %v5036, 0.18741608
        %v5038 = vmul.f32 %v5029, %v5037
        %v5039 = vadd.f32 %v5038, 1.1283791
        %v5040 = vmul.f32 %v1102, %v5039
        %v5041 = vmul.f32 %v5029, 3.8918573e-05
        %v5042 = vadd.f32 %v5041, 0.001143296
        %v5043 = vmul.f32 %v5029, %v5042
        %v5044 = vadd.f32 %v5043, 0.014752088
        %v5045 = vmul.f32 %v5029, %v5044
        %v5046 = vadd.f32 %v5045, 0.112945676
        %v5047 = vmul.f32 %v5029, %v5046
        %v5048 = vadd.f32 %v5047, 0.4994258
        %v5049 = vmul.f32 %v5029, %v5048
        %v5050 = vadd.f32 %v5049, 1.0
        %v5051 = vrcp.pop %v5050
        %v5052 = vmul.f32 %v5050, %v5051
        %v5053 = vsub.f32 1.0, %v5052
        %v5054 = vmul.f32 %v5051, %v5053
        %v5055 = vadd.f32 %v5051, %v5054
        %vm5056 = vweird.f32 %v5050
        %vm5057 = vweird.f32 %v5051
        %vm5058 = vmor %vm5056, %vm5057
        %v5059 = vsel %vm5058, %v5051, %v5055
        %v5060 = vand.u32 2147483647, %v5050
        %vm5061 = vcmp.eq.f32.partialorder %v5060, 8.507059e+37
        %v5062 = vand.u32 %v5050, 2147483648
        %v5063 = vor.u32 1.1754944e-38, %v5062
        %v5064 = vsel %vm5061, %v5063, %v5059
        %v5065 = vmul.f32 %v5040, %v5064
        %v5066 = vmin.f32 %v5065, 1.0
        %v5067 = vmax.f32 %v5066, -1.0
        %v5068 = vmul.f32 %v1103, %v1103
        %v5069 = vmin.f32 16.0, %v5068
        %v5070 = vmul.f32 %v5069, 2.1237322e-06
        %v5071 = vadd.f32 %v5070, 0.00028619796
        %v5072 = vmul.f32 %v5069, %v5071
        %v5073 = vadd.f32 %v5072, 0.0036580483
        %v5074 = vmul.f32 %v5069, %v5073
        %v5075 = vadd.f32 %v5074, 0.05243302
        %v5076 = vmul.f32 %v5069, %v5075
        %v5077 = vadd.f32 %v5076, 0.18741608
        %v5078 = vmul.f32 %v5069, %v5077
        %v5079 = vadd.f32 %v5078, 1.1283791
        %v5080 = vmul.f32 %v1103, %v5079
        %v5081 = vmul.f32 %v5069, 3.8918573e-05
        %v5082 = vadd.f32 %v5081, 0.001143296
        %v5083 = vmul.f32 %v5069, %v5082
        %v5084 = vadd.f32 %v5083, 0.014752088
        %v5085 = vmul.f32 %v5069, %v5084
        %v5086 = vadd.f32 %v5085, 0.112945676
        %v5087 = vmul.f32 %v5069, %v5086
        %v5088 = vadd.f32 %v5087, 0.4994258
        %v5089 = vmul.f32 %v5069, %v5088
        %v5090 = vadd.f32 %v5089, 1.0
        %v5091 = vrcp.pop %v5090
        %v5092 = vmul.f32 %v5090, %v5091
        %v5093 = vsub.f32 1.0, %v5092
        %v5094 = vmul.f32 %v5091, %v5093
        %v5095 = vadd.f32 %v5091, %v5094
        %vm5096 = vweird.f32 %v5090
        %vm5097 = vweird.f32 %v5091
        %vm5098 = vmor %vm5096, %vm5097
        %v5099 = vsel %vm5098, %v5091, %v5095
        %v5100 = vand.u32 2147483647, %v5090
        %vm5101 = vcmp.eq.f32.partialorder %v5100, 8.507059e+37
        %v5102 = vand.u32 %v5090, 2147483648
        %v5103 = vor.u32 1.1754944e-38, %v5102
        %v5104 = vsel %vm5101, %v5103, %v5099
        %v5105 = vmul.f32 %v5080, %v5104
        %v5106 = vmin.f32 %v5105, 1.0
        %v5107 = vmax.f32 %v5106, -1.0
        %v5108 = vmul.f32 %v1104, %v1104
        %v5109 = vmin.f32 16.0, %v5108
        %v5110 = vmul.f32 %v5109, 2.1237322e-06
        %v5111 = vadd.f32 %v5110, 0.00028619796
        %v5112 = vmul.f32 %v5109, %v5111
        %v5113 = vadd.f32 %v5112, 0.0036580483
        %v5114 = vmul.f32 %v5109, %v5113
        %v5115 = vadd.f32 %v5114, 0.05243302
        %v5116 = vmul.f32 %v5109, %v5115
        %v5117 = vadd.f32 %v5116, 0.18741608
        %v5118 = vmul.f32 %v5109, %v5117
        %v5119 = vadd.f32 %v5118, 1.1283791
        %v5120 = vmul.f32 %v1104, %v5119
        %v5121 = vmul.f32 %v5109, 3.8918573e-05
        %v5122 = vadd.f32 %v5121, 0.001143296
        %v5123 = vmul.f32 %v5109, %v5122
        %v5124 = vadd.f32 %v5123, 0.014752088
        %v5125 = vmul.f32 %v5109, %v5124
        %v5126 = vadd.f32 %v5125, 0.112945676
        %v5127 = vmul.f32 %v5109, %v5126
        %v5128 = vadd.f32 %v5127, 0.4994258
        %v5129 = vmul.f32 %v5109, %v5128
        %v5130 = vadd.f32 %v5129, 1.0
        %v5131 = vrcp.pop %v5130
        %v5132 = vmul.f32 %v5130, %v5131
        %v5133 = vsub.f32 1.0, %v5132
        %v5134 = vmul.f32 %v5131, %v5133
        %v5135 = vadd.f32 %v5131, %v5134
        %vm5136 = vweird.f32 %v5130
        %vm5137 = vweird.f32 %v5131
        %vm5138 = vmor %vm5136, %vm5137
        %v5139 = vsel %vm5138, %v5131, %v5135
        %v5140 = vand.u32 2147483647, %v5130
        %vm5141 = vcmp.eq.f32.partialorder %v5140, 8.507059e+37
        %v5142 = vand.u32 %v5130, 2147483648
        %v5143 = vor.u32 1.1754944e-38, %v5142
        %v5144 = vsel %vm5141, %v5143, %v5139
        %v5145 = vmul.f32 %v5120, %v5144
        %v5146 = vmin.f32 %v5145, 1.0
        %v5147 = vmax.f32 %v5146, -1.0
        %v5148 = vmul.f32 %v1105, %v1105
        %v5149 = vmin.f32 16.0, %v5148
        %v5150 = vmul.f32 %v5149, 2.1237322e-06
        %v5151 = vadd.f32 %v5150, 0.00028619796
        %v5152 = vmul.f32 %v5149, %v5151
        %v5153 = vadd.f32 %v5152, 0.0036580483
        %v5154 = vmul.f32 %v5149, %v5153
        %v5155 = vadd.f32 %v5154, 0.05243302
        %v5156 = vmul.f32 %v5149, %v5155
        %v5157 = vadd.f32 %v5156, 0.18741608
        %v5158 = vmul.f32 %v5149, %v5157
        %v5159 = vadd.f32 %v5158, 1.1283791
        %v5160 = vmul.f32 %v1105, %v5159
        %v5161 = vmul.f32 %v5149, 3.8918573e-05
        %v5162 = vadd.f32 %v5161, 0.001143296
        %v5163 = vmul.f32 %v5149, %v5162
        %v5164 = vadd.f32 %v5163, 0.014752088
        %v5165 = vmul.f32 %v5149, %v5164
        %v5166 = vadd.f32 %v5165, 0.112945676
        %v5167 = vmul.f32 %v5149, %v5166
        %v5168 = vadd.f32 %v5167, 0.4994258
        %v5169 = vmul.f32 %v5149, %v5168
        %v5170 = vadd.f32 %v5169, 1.0
        %v5171 = vrcp.pop %v5170
        %v5172 = vmul.f32 %v5170, %v5171
        %v5173 = vsub.f32 1.0, %v5172
        %v5174 = vmul.f32 %v5171, %v5173
        %v5175 = vadd.f32 %v5171, %v5174
        %vm5176 = vweird.f32 %v5170
        %vm5177 = vweird.f32 %v5171
        %vm5178 = vmor %vm5176, %vm5177
        %v5179 = vsel %vm5178, %v5171, %v5175
        %v5180 = vand.u32 2147483647, %v5170
        %vm5181 = vcmp.eq.f32.partialorder %v5180, 8.507059e+37
        %v5182 = vand.u32 %v5170, 2147483648
        %v5183 = vor.u32 1.1754944e-38, %v5182
        %v5184 = vsel %vm5181, %v5183, %v5179
        %v5185 = vmul.f32 %v5160, %v5184
        %v5186 = vmin.f32 %v5185, 1.0
        %v5187 = vmax.f32 %v5186, -1.0
        %v5188 = vmul.f32 %v1106, %v1106
        %v5189 = vmin.f32 16.0, %v5188
        %v5190 = vmul.f32 %v5189, 2.1237322e-06
        %v5191 = vadd.f32 %v5190, 0.00028619796
        %v5192 = vmul.f32 %v5189, %v5191
        %v5193 = vadd.f32 %v5192, 0.0036580483
        %v5194 = vmul.f32 %v5189, %v5193
        %v5195 = vadd.f32 %v5194, 0.05243302
        %v5196 = vmul.f32 %v5189, %v5195
        %v5197 = vadd.f32 %v5196, 0.18741608
        %v5198 = vmul.f32 %v5189, %v5197
        %v5199 = vadd.f32 %v5198, 1.1283791
        %v5200 = vmul.f32 %v1106, %v5199
        %v5201 = vmul.f32 %v5189, 3.8918573e-05
        %v5202 = vadd.f32 %v5201, 0.001143296
        %v5203 = vmul.f32 %v5189, %v5202
        %v5204 = vadd.f32 %v5203, 0.014752088
        %v5205 = vmul.f32 %v5189, %v5204
        %v5206 = vadd.f32 %v5205, 0.112945676
        %v5207 = vmul.f32 %v5189, %v5206
        %v5208 = vadd.f32 %v5207, 0.4994258
        %v5209 = vmul.f32 %v5189, %v5208
        %v5210 = vadd.f32 %v5209, 1.0
        %v5211 = vrcp.pop %v5210
        %v5212 = vmul.f32 %v5210, %v5211
        %v5213 = vsub.f32 1.0, %v5212
        %v5214 = vmul.f32 %v5211, %v5213
        %v5215 = vadd.f32 %v5211, %v5214
        %vm5216 = vweird.f32 %v5210
        %vm5217 = vweird.f32 %v5211
        %vm5218 = vmor %vm5216, %vm5217
        %v5219 = vsel %vm5218, %v5211, %v5215
        %v5220 = vand.u32 2147483647, %v5210
        %vm5221 = vcmp.eq.f32.partialorder %v5220, 8.507059e+37
        %v5222 = vand.u32 %v5210, 2147483648
        %v5223 = vor.u32 1.1754944e-38, %v5222
        %v5224 = vsel %vm5221, %v5223, %v5219
        %v5225 = vmul.f32 %v5200, %v5224
        %v5226 = vmin.f32 %v5225, 1.0
        %v5227 = vmax.f32 %v5226, -1.0
        %v5228 = vmul.f32 %v1107, %v1107
        %v5229 = vmin.f32 16.0, %v5228
        %v5230 = vmul.f32 %v5229, 2.1237322e-06
        %v5231 = vadd.f32 %v5230, 0.00028619796
        %v5232 = vmul.f32 %v5229, %v5231
        %v5233 = vadd.f32 %v5232, 0.0036580483
        %v5234 = vmul.f32 %v5229, %v5233
        %v5235 = vadd.f32 %v5234, 0.05243302
        %v5236 = vmul.f32 %v5229, %v5235
        %v5237 = vadd.f32 %v5236, 0.18741608
        %v5238 = vmul.f32 %v5229, %v5237
        %v5239 = vadd.f32 %v5238, 1.1283791
        %v5240 = vmul.f32 %v1107, %v5239
        %v5241 = vmul.f32 %v5229, 3.8918573e-05
        %v5242 = vadd.f32 %v5241, 0.001143296
        %v5243 = vmul.f32 %v5229, %v5242
        %v5244 = vadd.f32 %v5243, 0.014752088
        %v5245 = vmul.f32 %v5229, %v5244
        %v5246 = vadd.f32 %v5245, 0.112945676
        %v5247 = vmul.f32 %v5229, %v5246
        %v5248 = vadd.f32 %v5247, 0.4994258
        %v5249 = vmul.f32 %v5229, %v5248
        %v5250 = vadd.f32 %v5249, 1.0
        %v5251 = vrcp.pop %v5250
        %v5252 = vmul.f32 %v5250, %v5251
        %v5253 = vsub.f32 1.0, %v5252
        %v5254 = vmul.f32 %v5251, %v5253
        %v5255 = vadd.f32 %v5251, %v5254
        %vm5256 = vweird.f32 %v5250
        %vm5257 = vweird.f32 %v5251
        %vm5258 = vmor %vm5256, %vm5257
        %v5259 = vsel %vm5258, %v5251, %v5255
        %v5260 = vand.u32 2147483647, %v5250
        %vm5261 = vcmp.eq.f32.partialorder %v5260, 8.507059e+37
        %v5262 = vand.u32 %v5250, 2147483648
        %v5263 = vor.u32 1.1754944e-38, %v5262
        %v5264 = vsel %vm5261, %v5263, %v5259
        %v5265 = vmul.f32 %v5240, %v5264
        %v5266 = vmin.f32 %v5265, 1.0
        %v5267 = vmax.f32 %v5266, -1.0
        %v5268 = vadd.f32 %v1147, 1.0
        %v5269 = vadd.f32 %v1187, 1.0
        %v5270 = vadd.f32 %v1227, 1.0
        %v5271 = vadd.f32 %v1267, 1.0
        %v5272 = vadd.f32 %v1307, 1.0
        %v5273 = vadd.f32 %v1347, 1.0
        %v5274 = vadd.f32 %v1387, 1.0
        %v5275 = vadd.f32 %v1427, 1.0
        %v5276 = vadd.f32 %v1467, 1.0
        %v5277 = vadd.f32 %v1507, 1.0
        %v5278 = vadd.f32 %v1547, 1.0
        %v5279 = vadd.f32 %v1587, 1.0
        %v5280 = vadd.f32 %v1627, 1.0
        %v5281 = vadd.f32 %v1667, 1.0
        %v5282 = vadd.f32 %v1707, 1.0
        %v5283 = vadd.f32 %v1747, 1.0
        %v5284 = vadd.f32 %v1787, 1.0
        %v5285 = vadd.f32 %v1827, 1.0
        %v5286 = vadd.f32 %v1867, 1.0
        %v5287 = vadd.f32 %v1907, 1.0
        %v5288 = vadd.f32 %v1947, 1.0
        %v5289 = vadd.f32 %v1987, 1.0
        %v5290 = vadd.f32 %v2027, 1.0
        %v5291 = vadd.f32 %v2067, 1.0
        %v5292 = vadd.f32 %v2107, 1.0
        %v5293 = vadd.f32 %v2147, 1.0
        %v5294 = vadd.f32 %v2187, 1.0
        %v5295 = vadd.f32 %v2227, 1.0
        %v5296 = vadd.f32 %v2267, 1.0
        %v5297 = vadd.f32 %v2307, 1.0
        %v5298 = vadd.f32 %v2347, 1.0
        %v5299 = vadd.f32 %v2387, 1.0
        %v5300 = vadd.f32 %v2427, 1.0
        %v5301 = vadd.f32 %v2467, 1.0
        %v5302 = vadd.f32 %v2507, 1.0
        %v5303 = vadd.f32 %v2547, 1.0
        %v5304 = vadd.f32 %v2587, 1.0
        %v5305 = vadd.f32 %v2627, 1.0
        %v5306 = vadd.f32 %v2667, 1.0
        %v5307 = vadd.f32 %v2707, 1.0
        %v5308 = vadd.f32 %v2747, 1.0
        %v5309 = vadd.f32 %v2787, 1.0
        %v5310 = vadd.f32 %v2827, 1.0
        %v5311 = vadd.f32 %v2867, 1.0
        %v5312 = vadd.f32 %v2907, 1.0
        %v5313 = vadd.f32 %v2947, 1.0
        %v5314 = vadd.f32 %v2987, 1.0
        %v5315 = vadd.f32 %v3027, 1.0
        %v5316 = vadd.f32 %v3067, 1.0
        %v5317 = vadd.f32 %v3107, 1.0
        %v5318 = vadd.f32 %v3147, 1.0
        %v5319 = vadd.f32 %v3187, 1.0
        %v5320 = vadd.f32 %v3227, 1.0
        %v5321 = vadd.f32 %v3267, 1.0
        %v5322 = vadd.f32 %v3307, 1.0
        %v5323 = vadd.f32 %v3347, 1.0
        %v5324 = vadd.f32 %v3387, 1.0
        %v5325 = vadd.f32 %v3427, 1.0
        %v5326 = vadd.f32 %v3467, 1.0
        %v5327 = vadd.f32 %v3507, 1.0
        %v5328 = vadd.f32 %v3547, 1.0
        %v5329 = vadd.f32 %v3587, 1.0
        %v5330 = vadd.f32 %v3627, 1.0
        %v5331 = vadd.f32 %v3667, 1.0
        %v5332 = vadd.f32 %v3707, 1.0
        %v5333 = vadd.f32 %v3747, 1.0
        %v5334 = vadd.f32 %v3787, 1.0
        %v5335 = vadd.f32 %v3827, 1.0
        %v5336 = vadd.f32 %v3867, 1.0
        %v5337 = vadd.f32 %v3907, 1.0
        %v5338 = vadd.f32 %v3947, 1.0
        %v5339 = vadd.f32 %v3987, 1.0
        %v5340 = vadd.f32 %v4027, 1.0
        %v5341 = vadd.f32 %v4067, 1.0
        %v5342 = vadd.f32 %v4107, 1.0
        %v5343 = vadd.f32 %v4147, 1.0
        %v5344 = vadd.f32 %v4187, 1.0
        %v5345 = vadd.f32 %v4227, 1.0
        %v5346 = vadd.f32 %v4267, 1.0
        %v5347 = vadd.f32 %v4307, 1.0
        %v5348 = vadd.f32 %v4347, 1.0
        %v5349 = vadd.f32 %v4387, 1.0
        %v5350 = vadd.f32 %v4427, 1.0
        %v5351 = vadd.f32 %v4467, 1.0
        %v5352 = vadd.f32 %v4507, 1.0
        %v5353 = vadd.f32 %v4547, 1.0
        %v5354 = vadd.f32 %v4587, 1.0
        %v5355 = vadd.f32 %v4627, 1.0
        %v5356 = vadd.f32 %v4667, 1.0
        %v5357 = vadd.f32 %v4707, 1.0
        %v5358 = vadd.f32 %v4747, 1.0
        %v5359 = vadd.f32 %v4787, 1.0
        %v5360 = vadd.f32 %v4827, 1.0
        %v5361 = vadd.f32 %v4867, 1.0
        %v5362 = vadd.f32 %v4907, 1.0
        %v5363 = vadd.f32 %v4947, 1.0
        %v5364 = vadd.f32 %v4987, 1.0
        %v5365 = vadd.f32 %v5027, 1.0
        %v5366 = vadd.f32 %v5067, 1.0
        %v5367 = vadd.f32 %v5107, 1.0
        %v5368 = vadd.f32 %v5147, 1.0
        %v5369 = vadd.f32 %v5187, 1.0
        %v5370 = vadd.f32 %v5227, 1.0
        %v5371 = vadd.f32 %v5267, 1.0
        %v5372 = vmul.f32 %v900, %v5268
        %v5373 = vmul.f32 %v901, %v5269
        %v5374 = vmul.f32 %v902, %v5270
        %v5375 = vmul.f32 %v903, %v5271
        %v5376 = vmul.f32 %v904, %v5272
        %v5377 = vmul.f32 %v905, %v5273
        %v5378 = vmul.f32 %v906, %v5274
        %v5379 = vmul.f32 %v907, %v5275
        %v5380 = vmul.f32 %v908, %v5276
        %v5381 = vmul.f32 %v909, %v5277
        %v5382 = vmul.f32 %v910, %v5278
        %v5383 = vmul.f32 %v911, %v5279
        %v5384 = vmul.f32 %v912, %v5280
        %v5385 = vmul.f32 %v913, %v5281
        %v5386 = vmul.f32 %v914, %v5282
        %v5387 = vmul.f32 %v915, %v5283
        %v5388 = vmul.f32 %v916, %v5284
        %v5389 = vmul.f32 %v917, %v5285
        %v5390 = vmul.f32 %v918, %v5286
        %v5391 = vmul.f32 %v919, %v5287
        %v5392 = vmul.f32 %v920, %v5288
        %v5393 = vmul.f32 %v921, %v5289
        %v5394 = vmul.f32 %v922, %v5290
        %v5395 = vmul.f32 %v923, %v5291
        %v5396 = vmul.f32 %v924, %v5292
        %v5397 = vmul.f32 %v925, %v5293
        %v5398 = vmul.f32 %v926, %v5294
        %v5399 = vmul.f32 %v927, %v5295
        %v5400 = vmul.f32 %v928, %v5296
        %v5401 = vmul.f32 %v929, %v5297
        %v5402 = vmul.f32 %v930, %v5298
        %v5403 = vmul.f32 %v931, %v5299
        %v5404 = vmul.f32 %v932, %v5300
        %v5405 = vmul.f32 %v933, %v5301
        %v5406 = vmul.f32 %v934, %v5302
        %v5407 = vmul.f32 %v935, %v5303
        %v5408 = vmul.f32 %v936, %v5304
        %v5409 = vmul.f32 %v937, %v5305
        %v5410 = vmul.f32 %v938, %v5306
        %v5411 = vmul.f32 %v939, %v5307
        %v5412 = vmul.f32 %v940, %v5308
        %v5413 = vmul.f32 %v941, %v5309
        %v5414 = vmul.f32 %v942, %v5310
        %v5415 = vmul.f32 %v943, %v5311
        %v5416 = vmul.f32 %v944, %v5312
        %v5417 = vmul.f32 %v945, %v5313
        %v5418 = vmul.f32 %v946, %v5314
        %v5419 = vmul.f32 %v947, %v5315
        %v5420 = vmul.f32 %v948, %v5316
        %v5421 = vmul.f32 %v949, %v5317
        %v5422 = vmul.f32 %v950, %v5318
        %v5423 = vmul.f32 %v951, %v5319
        %v5424 = vmul.f32 %v952, %v5320
        %v5425 = vmul.f32 %v953, %v5321
        %v5426 = vmul.f32 %v954, %v5322
        %v5427 = vmul.f32 %v955, %v5323
        %v5428 = vmul.f32 %v956, %v5324
        %v5429 = vmul.f32 %v957, %v5325
        %v5430 = vmul.f32 %v958, %v5326
        %v5431 = vmul.f32 %v959, %v5327
        %v5432 = vmul.f32 %v960, %v5328
        %v5433 = vmul.f32 %v961, %v5329
        %v5434 = vmul.f32 %v962, %v5330
        %v5435 = vmul.f32 %v963, %v5331
        %v5436 = vmul.f32 %v964, %v5332
        %v5437 = vmul.f32 %v965, %v5333
        %v5438 = vmul.f32 %v966, %v5334
        %v5439 = vmul.f32 %v967, %v5335
        %v5440 = vmul.f32 %v968, %v5336
        %v5441 = vmul.f32 %v969, %v5337
        %v5442 = vmul.f32 %v970, %v5338
        %v5443 = vmul.f32 %v971, %v5339
        %v5444 = vmul.f32 %v972, %v5340
        %v5445 = vmul.f32 %v973, %v5341
        %v5446 = vmul.f32 %v974, %v5342
        %v5447 = vmul.f32 %v975, %v5343
        %v5448 = vmul.f32 %v976, %v5344
        %v5449 = vmul.f32 %v977, %v5345
        %v5450 = vmul.f32 %v978, %v5346
        %v5451 = vmul.f32 %v979, %v5347
        %v5452 = vmul.f32 %v980, %v5348
        %v5453 = vmul.f32 %v981, %v5349
        %v5454 = vmul.f32 %v982, %v5350
        %v5455 = vmul.f32 %v983, %v5351
        %v5456 = vmul.f32 %v984, %v5352
        %v5457 = vmul.f32 %v985, %v5353
        %v5458 = vmul.f32 %v986, %v5354
        %v5459 = vmul.f32 %v987, %v5355
        %v5460 = vmul.f32 %v988, %v5356
        %v5461 = vmul.f32 %v989, %v5357
        %v5462 = vmul.f32 %v990, %v5358
        %v5463 = vmul.f32 %v991, %v5359
        %v5464 = vmul.f32 %v992, %v5360
        %v5465 = vmul.f32 %v993, %v5361
        %v5466 = vmul.f32 %v994, %v5362
        %v5467 = vmul.f32 %v995, %v5363
        %v5468 = vmul.f32 %v996, %v5364
        %v5469 = vmul.f32 %v997, %v5365
        %v5470 = vmul.f32 %v998, %v5366
        %v5471 = vmul.f32 %v999, %v5367
        %v5472 = vmul.f32 %v1000, %v5368
        %v5473 = vmul.f32 %v1001, %v5369
        %v5474 = vmul.f32 %v1002, %v5370
        %v5475 = vmul.f32 %v1003, %v5371
        %v5476 = vld [vmem:[#allocation2] sm:$0xff]
        %v5477 = vld [vmem:[#allocation2 + $0x8] sm:$0xff]
        %v5478 = vld [vmem:[#allocation2 + $0x10] sm:$0xff]
        %v5479 = vld [vmem:[#allocation2 + $0x18] sm:$0xff]
        %v5480 = vld [vmem:[#allocation2 + $0x20] sm:$0xff]
        %v5481 = vld [vmem:[#allocation2 + $0x28] sm:$0xff]
        %v5482 = vld [vmem:[#allocation2 + $0x30] sm:$0xff]
        %v5483 = vld [vmem:[#allocation2 + $0x38] sm:$0xff]
        %v5484 = vld [vmem:[#allocation2 + $0x40] sm:$0xff]
        %v5485 = vld [vmem:[#allocation2 + $0x48] sm:$0xff]
        %v5486 = vld [vmem:[#allocation2 + $0x50] sm:$0xff]
        %v5487 = vld [vmem:[#allocation2 + $0x58] sm:$0xff]
        %v5488 = vld [vmem:[#allocation2 + $0x60] sm:$0xff]
        %v5489 = vld [vmem:[#allocation2 + $0x68] sm:$0xff]
        %v5490 = vld [vmem:[#allocation2 + $0x70] sm:$0xff]
        %v5491 = vld [vmem:[#allocation2 + $0x78] sm:$0xff]
        %v5492 = vld [vmem:[#allocation2 + $0x80] sm:$0xff]
        %v5493 = vld [vmem:[#allocation2 + $0x88] sm:$0xff]
        %v5494 = vld [vmem:[#allocation2 + $0x90] sm:$0xff]
        %v5495 = vld [vmem:[#allocation2 + $0x98] sm:$0xff]
        %v5496 = vld [vmem:[#allocation2 + $0xa0] sm:$0xff]
        %v5497 = vld [vmem:[#allocation2 + $0xa8] sm:$0xff]
        %v5498 = vld [vmem:[#allocation2 + $0xb0] sm:$0xff]
        %v5499 = vld [vmem:[#allocation2 + $0xb8] sm:$0xff]
        %v5500 = vld [vmem:[#allocation2 + $0xc0] sm:$0xff]
        %v5501 = vld [vmem:[#allocation2 + $0xc8] sm:$0xff]
        %v5502 = vpack.c.bf16 %v5376, %v5372
        %v5503 = vpack.c.bf16 %v5377, %v5373
        %v5504 = vpack.c.bf16 %v5378, %v5374
        %v5505 = vpack.c.bf16 %v5379, %v5375
        %v5506 = vpack.c.bf16 %v5384, %v5380
        %v5507 = vpack.c.bf16 %v5385, %v5381
        %v5508 = vpack.c.bf16 %v5386, %v5382
        %v5509 = vpack.c.bf16 %v5387, %v5383
        %v5510 = vpack.c.bf16 %v5392, %v5388
        %v5511 = vpack.c.bf16 %v5393, %v5389
        %v5512 = vpack.c.bf16 %v5394, %v5390
        %v5513 = vpack.c.bf16 %v5395, %v5391
        %v5514 = vpack.c.bf16 %v5400, %v5396
        %v5515 = vpack.c.bf16 %v5401, %v5397
        %v5516 = vpack.c.bf16 %v5402, %v5398
        %v5517 = vpack.c.bf16 %v5403, %v5399
        %v5518 = vpack.c.bf16 %v5408, %v5404
        %v5519 = vpack.c.bf16 %v5409, %v5405
        %v5520 = vpack.c.bf16 %v5410, %v5406
        %v5521 = vpack.c.bf16 %v5411, %v5407
        %v5522 = vpack.c.bf16 %v5416, %v5412
        %v5523 = vpack.c.bf16 %v5417, %v5413
        %v5524 = vpack.c.bf16 %v5418, %v5414
        %v5525 = vpack.c.bf16 %v5419, %v5415
        %v5526 = vpack.c.bf16 %v5424, %v5420
        %v5527 = vpack.c.bf16 %v5425, %v5421
        %v5528 = vpack.c.bf16 %v5426, %v5422
        %v5529 = vpack.c.bf16 %v5427, %v5423
        %v5530 = vpack.c.bf16 %v5432, %v5428
        %v5531 = vpack.c.bf16 %v5433, %v5429
        %v5532 = vpack.c.bf16 %v5434, %v5430
        %v5533 = vpack.c.bf16 %v5435, %v5431
        %v5534 = vpack.c.bf16 %v5440, %v5436
        %v5535 = vpack.c.bf16 %v5441, %v5437
        %v5536 = vpack.c.bf16 %v5442, %v5438
        %v5537 = vpack.c.bf16 %v5443, %v5439
        %v5538 = vpack.c.bf16 %v5448, %v5444
        %v5539 = vpack.c.bf16 %v5449, %v5445
        %v5540 = vpack.c.bf16 %v5450, %v5446
        %v5541 = vpack.c.bf16 %v5451, %v5447
        %v5542 = vpack.c.bf16 %v5456, %v5452
        %v5543 = vpack.c.bf16 %v5457, %v5453
        %v5544 = vpack.c.bf16 %v5458, %v5454
        %v5545 = vpack.c.bf16 %v5459, %v5455
        %v5546 = vpack.c.bf16 %v5464, %v5460
        %v5547 = vpack.c.bf16 %v5465, %v5461
        %v5548 = vpack.c.bf16 %v5466, %v5462
        %v5549 = vpack.c.bf16 %v5467, %v5463
        %v5550 = vpack.c.bf16 %v5472, %v5468
        %v5551 = vpack.c.bf16 %v5473, %v5469
        %v5552 = vpack.c.bf16 %v5474, %v5470
        %v5553 = vpack.c.bf16 %v5475, %v5471
        %v5554 = vld [vmem:[#allocation9] sm:$0xf]
        %v5555 = vld [vmem:[#allocation9 + $0x4] sm:$0xf]
        %v5556 = vld [vmem:[#allocation9 + $0x8] sm:$0xf]
        %v5557 = vld [vmem:[#allocation9 + $0xc] sm:$0xf]
        %v5558 = vld [vmem:[#allocation9 + $0x10] sm:$0xf]
        %v5559 = vld [vmem:[#allocation9 + $0x14] sm:$0xf]
        %v5560 = vld [vmem:[#allocation9 + $0x18] sm:$0xf]
        %v5561 = vld [vmem:[#allocation9 + $0x1c] sm:$0xf]
        %v5562 = vld [vmem:[#allocation9 + $0x20] sm:$0xf]
        %v5563 = vld [vmem:[#allocation9 + $0x24] sm:$0xf]
        %v5564 = vld [vmem:[#allocation9 + $0x28] sm:$0xf]
        %v5565 = vld [vmem:[#allocation9 + $0x2c] sm:$0xf]
        %v5566 = vld [vmem:[#allocation9 + $0x30] sm:$0xf]
        %v5567 = vld [vmem:[#allocation9 + $0x34] sm:$0xf]
        %v5568 = vld [vmem:[#allocation9 + $0x38] sm:$0xf]
        %v5569 = vld [vmem:[#allocation9 + $0x3c] sm:$0xf]
        %v5570 = vld [vmem:[#allocation9 + $0x40] sm:$0xf]
        %v5571 = vld [vmem:[#allocation9 + $0x44] sm:$0xf]
        %v5572 = vld [vmem:[#allocation9 + $0x48] sm:$0xf]
        %v5573 = vld [vmem:[#allocation9 + $0x4c] sm:$0xf]
        %v5574 = vld [vmem:[#allocation9 + $0x50] sm:$0xf]
        %v5575 = vld [vmem:[#allocation9 + $0x54] sm:$0xf]
        %v5576 = vld [vmem:[#allocation9 + $0x58] sm:$0xf]
        %v5577 = vld [vmem:[#allocation9 + $0x5c] sm:$0xf]
        %v5578 = vld [vmem:[#allocation9 + $0x60] sm:$0xf]
        %v5579 = vld [vmem:[#allocation9 + $0x64] sm:$0xf]
        %v5580 = vld [vmem:[#allocation9 + $0x68] sm:$0xf]
        %v5581 = vld [vmem:[#allocation9 + $0x6c] sm:$0xf]
        %v5582 = vld [vmem:[#allocation9 + $0x70] sm:$0xf]
        %v5583 = vld [vmem:[#allocation9 + $0x74] sm:$0xf]
        %v5584 = vld [vmem:[#allocation9 + $0x78] sm:$0xf]
        %v5585 = vld [vmem:[#allocation9 + $0x7c] sm:$0xf]
        %v5586 = vld [vmem:[#allocation9 + $0x80] sm:$0xf]
        %v5587 = vld [vmem:[#allocation9 + $0x84] sm:$0xf]
        %v5588 = vld [vmem:[#allocation9 + $0x88] sm:$0xf]
        %v5589 = vld [vmem:[#allocation9 + $0x8c] sm:$0xf]
        %v5590 = vld [vmem:[#allocation9 + $0x90] sm:$0xf]
        %v5591 = vld [vmem:[#allocation9 + $0x94] sm:$0xf]
        %v5592 = vld [vmem:[#allocation9 + $0x98] sm:$0xf]
        %v5593 = vld [vmem:[#allocation9 + $0x9c] sm:$0xf]
        %v5594 = vld [vmem:[#allocation9 + $0xa0] sm:$0xf]
        %v5595 = vld [vmem:[#allocation9 + $0xa4] sm:$0xf]
        %v5596 = vld [vmem:[#allocation9 + $0xa8] sm:$0xf]
        %v5597 = vld [vmem:[#allocation9 + $0xac] sm:$0xf]
        %v5598 = vld [vmem:[#allocation9 + $0xb0] sm:$0xf]
        %v5599 = vld [vmem:[#allocation9 + $0xb4] sm:$0xf]
        %v5600 = vld [vmem:[#allocation9 + $0xb8] sm:$0xf]
        %v5601 = vld [vmem:[#allocation9 + $0xbc] sm:$0xf]
        %v5602 = vld [vmem:[#allocation9 + $0xc0] sm:$0xf]
        %v5603 = vld [vmem:[#allocation9 + $0xc4] sm:$0xf]
        %v5604 = vld [vmem:[#allocation9 + $0xc8] sm:$0xf]
        %v5605 = vld [vmem:[#allocation9 + $0xcc] sm:$0xf]
        %v5606 = vld [vmem:[#allocation9 + $0xd0] sm:$0xf]
        %v5607 = vld [vmem:[#allocation9 + $0xd4] sm:$0xf]
        %v5608 = vld [vmem:[#allocation9 + $0xd8] sm:$0xf]
        %v5609 = vld [vmem:[#allocation9 + $0xdc] sm:$0xf]
        %v5610 = vld [vmem:[#allocation9 + $0xe0] sm:$0xf]
        %v5611 = vld [vmem:[#allocation9 + $0xe4] sm:$0xf]
        %v5612 = vld [vmem:[#allocation9 + $0xe8] sm:$0xf]
        %v5613 = vld [vmem:[#allocation9 + $0xec] sm:$0xf]
        %v5614 = vld [vmem:[#allocation9 + $0xf0] sm:$0xf]
        %v5615 = vld [vmem:[#allocation9 + $0xf4] sm:$0xf]
        %v5616 = vld [vmem:[#allocation9 + $0xf8] sm:$0xf]
        %v5617 = vld [vmem:[#allocation9 + $0xfc] sm:$0xf]
        %v5682 = vunpack.c.l.b16 %v5554
        %v5683 = vunpack.c.l.b16 %v5555
        %v5684 = vunpack.c.l.b16 %v5556
        %v5685 = vunpack.c.l.b16 %v5557
        %v5686 = vunpack.c.l.b16 %v5558
        %v5687 = vunpack.c.l.b16 %v5559
        %v5688 = vunpack.c.l.b16 %v5560
        %v5689 = vunpack.c.l.b16 %v5561
        %v5690 = vunpack.c.l.b16 %v5562
        %v5691 = vunpack.c.l.b16 %v5563
        %v5692 = vunpack.c.l.b16 %v5564
        %v5693 = vunpack.c.l.b16 %v5565
        %v5694 = vunpack.c.l.b16 %v5566
        %v5695 = vunpack.c.l.b16 %v5567
        %v5696 = vunpack.c.l.b16 %v5568
        %v5697 = vunpack.c.l.b16 %v5569
        %v5698 = vunpack.c.l.b16 %v5570
        %v5699 = vunpack.c.l.b16 %v5571
        %v5700 = vunpack.c.l.b16 %v5572
        %v5701 = vunpack.c.l.b16 %v5573
        %v5702 = vunpack.c.l.b16 %v5574
        %v5703 = vunpack.c.l.b16 %v5575
        %v5704 = vunpack.c.l.b16 %v5576
        %v5705 = vunpack.c.l.b16 %v5577
        %v5706 = vunpack.c.l.b16 %v5578
        %v5707 = vunpack.c.l.b16 %v5579
        %v5708 = vunpack.c.l.b16 %v5580
        %v5709 = vunpack.c.l.b16 %v5581
        %v5710 = vunpack.c.l.b16 %v5582
        %v5711 = vunpack.c.l.b16 %v5583
        %v5712 = vunpack.c.l.b16 %v5584
        %v5713 = vunpack.c.l.b16 %v5585
        %v5714 = vunpack.c.l.b16 %v5586
        %v5715 = vunpack.c.l.b16 %v5587
        %v5716 = vunpack.c.l.b16 %v5588
        %v5717 = vunpack.c.l.b16 %v5589
        %v5718 = vunpack.c.l.b16 %v5590
        %v5719 = vunpack.c.l.b16 %v5591
        %v5720 = vunpack.c.l.b16 %v5592
        %v5721 = vunpack.c.l.b16 %v5593
        %v5722 = vunpack.c.l.b16 %v5594
        %v5723 = vunpack.c.l.b16 %v5595
        %v5724 = vunpack.c.l.b16 %v5596
        %v5725 = vunpack.c.l.b16 %v5597
        %v5726 = vunpack.c.l.b16 %v5598
        %v5727 = vunpack.c.l.b16 %v5599
        %v5728 = vunpack.c.l.b16 %v5600
        %v5729 = vunpack.c.l.b16 %v5601
        %v5730 = vunpack.c.l.b16 %v5602
        %v5731 = vunpack.c.l.b16 %v5603
        %v5732 = vunpack.c.l.b16 %v5604
        %v5733 = vunpack.c.l.b16 %v5605
        %v5734 = vunpack.c.l.b16 %v5606
        %v5735 = vunpack.c.l.b16 %v5607
        %v5736 = vunpack.c.l.b16 %v5608
        %v5737 = vunpack.c.l.b16 %v5609
        %v5738 = vunpack.c.l.b16 %v5610
        %v5739 = vunpack.c.l.b16 %v5611
        %v5740 = vunpack.c.l.b16 %v5612
        %v5741 = vunpack.c.l.b16 %v5613
        %v5742 = vunpack.c.l.b16 %v5614
        %v5743 = vunpack.c.l.b16 %v5615
        %v5744 = vunpack.c.l.b16 %v5616
        %v5745 = vunpack.c.l.b16 %v5617
        %v5746 = vpack.c.b16 %v5683, %v5682
        %v5747 = vpack.c.b16 %v5685, %v5684
        %v5748 = vpack.c.b16 %v5687, %v5686
        %v5749 = vpack.c.b16 %v5689, %v5688
        %v5750 = vpack.c.b16 %v5691, %v5690
        %v5751 = vpack.c.b16 %v5693, %v5692
        %v5752 = vpack.c.b16 %v5695, %v5694
        %v5753 = vpack.c.b16 %v5697, %v5696
        %v5754 = vpack.c.b16 %v5699, %v5698
        %v5755 = vpack.c.b16 %v5701, %v5700
        %v5756 = vpack.c.b16 %v5703, %v5702
        %v5757 = vpack.c.b16 %v5705, %v5704
        %v5758 = vpack.c.b16 %v5707, %v5706
        %v5759 = vpack.c.b16 %v5709, %v5708
        %v5760 = vpack.c.b16 %v5711, %v5710
        %v5761 = vpack.c.b16 %v5713, %v5712
        %v5762 = vpack.c.b16 %v5715, %v5714
        %v5763 = vpack.c.b16 %v5717, %v5716
        %v5764 = vpack.c.b16 %v5719, %v5718
        %v5765 = vpack.c.b16 %v5721, %v5720
        %v5766 = vpack.c.b16 %v5723, %v5722
        %v5767 = vpack.c.b16 %v5725, %v5724
        %v5768 = vpack.c.b16 %v5727, %v5726
        %v5769 = vpack.c.b16 %v5729, %v5728
        %v5770 = vpack.c.b16 %v5731, %v5730
        %v5771 = vpack.c.b16 %v5733, %v5732
        %v5772 = vpack.c.b16 %v5735, %v5734
        %v5773 = vpack.c.b16 %v5737, %v5736
        %v5774 = vpack.c.b16 %v5739, %v5738
        %v5775 = vpack.c.b16 %v5741, %v5740
        %v5776 = vpack.c.b16 %v5743, %v5742
        %v5777 = vpack.c.b16 %v5745, %v5744
        %5810 = vmatpush.bf16.msra.mxu0 %v5753
        %5811 = vmatpush.bf16.msra.mxu0 %v5752
        %5812 = vmatpush.bf16.msra.mxu0 %v5751
        %5813 = vmatpush.bf16.msra.mxu0 %v5750
        %5814 = vmatpush.bf16.msra.mxu0 %v5749
        %5815 = vmatpush.bf16.msra.mxu0 %v5748
        %5816 = vmatpush.bf16.msra.mxu0 %v5747
        %5817 = vmatpush.bf16.msra.mxu0 %v5746
        %5818 = vmatmul.bf16.gmra.mxu0 %v5502
        %v5819 = vpop.f32.mrf.mxu0
        %v5820 = vadd.f32 0.0, %v5819
        %v5821 = vpop.f32.mrf.mxu0
        %v5822 = vadd.f32 0.0, %v5821
        %5823 = vmatmul.bf16.gmra.mxu0 %v5506
        %v5824 = vpop.f32.mrf.mxu0
        %v5825 = vadd.f32 0.0, %v5824
        %v5826 = vpop.f32.mrf.mxu0
        %v5827 = vadd.f32 0.0, %v5826
        %5828 = vmatmul.bf16.gmra.mxu0 %v5510
        %v5829 = vpop.f32.mrf.mxu0
        %v5830 = vadd.f32 0.0, %v5829
        %v5831 = vpop.f32.mrf.mxu0
        %v5832 = vadd.f32 0.0, %v5831
        %5833 = vmatmul.bf16.gmra.mxu0 %v5514
        %v5834 = vpop.f32.mrf.mxu0
        %v5835 = vadd.f32 0.0, %v5834
        %v5836 = vpop.f32.mrf.mxu0
        %v5837 = vadd.f32 0.0, %v5836
        %5838 = vmatmul.bf16.gmra.mxu0 %v5518
        %v5839 = vpop.f32.mrf.mxu0
        %v5840 = vadd.f32 0.0, %v5839
        %v5841 = vpop.f32.mrf.mxu0
        %v5842 = vadd.f32 0.0, %v5841
        %5843 = vmatmul.bf16.gmra.mxu0 %v5522
        %v5844 = vpop.f32.mrf.mxu0
        %v5845 = vadd.f32 0.0, %v5844
        %v5846 = vpop.f32.mrf.mxu0
        %v5847 = vadd.f32 0.0, %v5846
        %5848 = vmatmul.bf16.gmra.mxu0 %v5526
        %v5849 = vpop.f32.mrf.mxu0
        %v5850 = vadd.f32 0.0, %v5849
        %v5851 = vpop.f32.mrf.mxu0
        %v5852 = vadd.f32 0.0, %v5851
        %5853 = vmatmul.bf16.gmra.mxu0 %v5530
        %v5854 = vpop.f32.mrf.mxu0
        %v5855 = vadd.f32 0.0, %v5854
        %v5856 = vpop.f32.mrf.mxu0
        %v5857 = vadd.f32 0.0, %v5856
        %5858 = vmatmul.bf16.gmra.mxu0 %v5534
        %v5859 = vpop.f32.mrf.mxu0
        %v5860 = vadd.f32 0.0, %v5859
        %v5861 = vpop.f32.mrf.mxu0
        %v5862 = vadd.f32 0.0, %v5861
        %5863 = vmatmul.bf16.gmra.mxu0 %v5538
        %v5864 = vpop.f32.mrf.mxu0
        %v5865 = vadd.f32 0.0, %v5864
        %v5866 = vpop.f32.mrf.mxu0
        %v5867 = vadd.f32 0.0, %v5866
        %5868 = vmatmul.bf16.gmra.mxu0 %v5542
        %v5869 = vpop.f32.mrf.mxu0
        %v5870 = vadd.f32 0.0, %v5869
        %v5871 = vpop.f32.mrf.mxu0
        %v5872 = vadd.f32 0.0, %v5871
        %5873 = vmatmul.bf16.gmra.mxu0 %v5546
        %v5874 = vpop.f32.mrf.mxu0
        %v5875 = vadd.f32 0.0, %v5874
        %v5876 = vpop.f32.mrf.mxu0
        %v5877 = vadd.f32 0.0, %v5876
        %5878 = vmatmul.bf16.gmra.mxu0 %v5550
        %v5879 = vpop.f32.mrf.mxu0
        %v5880 = vadd.f32 0.0, %v5879
        %v5881 = vpop.f32.mrf.mxu0
        %v5882 = vadd.f32 0.0, %v5881
        %5883 = vdwg.mxu0
        %5884 = vmatpush.bf16.msra.mxu0 %v5761
        %5885 = vmatpush.bf16.msra.mxu0 %v5760
        %5886 = vmatpush.bf16.msra.mxu0 %v5759
        %5887 = vmatpush.bf16.msra.mxu0 %v5758
        %5888 = vmatpush.bf16.msra.mxu0 %v5757
        %5889 = vmatpush.bf16.msra.mxu0 %v5756
        %5890 = vmatpush.bf16.msra.mxu0 %v5755
        %5891 = vmatpush.bf16.msra.mxu0 %v5754
        %5892 = vmatmul.bf16.gmra.mxu0 %v5503
        %v5893 = vpop.f32.mrf.mxu0
        %v5894 = vadd.f32 %v5820, %v5893
        %v5895 = vpop.f32.mrf.mxu0
        %v5896 = vadd.f32 %v5822, %v5895
        %5897 = vmatmul.bf16.gmra.mxu0 %v5507
        %v5898 = vpop.f32.mrf.mxu0
        %v5899 = vadd.f32 %v5825, %v5898
        %v5900 = vpop.f32.mrf.mxu0
        %v5901 = vadd.f32 %v5827, %v5900
        %5902 = vmatmul.bf16.gmra.mxu0 %v5511
        %v5903 = vpop.f32.mrf.mxu0
        %v5904 = vadd.f32 %v5830, %v5903
        %v5905 = vpop.f32.mrf.mxu0
        %v5906 = vadd.f32 %v5832, %v5905
        %5907 = vmatmul.bf16.gmra.mxu0 %v5515
        %v5908 = vpop.f32.mrf.mxu0
        %v5909 = vadd.f32 %v5835, %v5908
        %v5910 = vpop.f32.mrf.mxu0
        %v5911 = vadd.f32 %v5837, %v5910
        %5912 = vmatmul.bf16.gmra.mxu0 %v5519
        %v5913 = vpop.f32.mrf.mxu0
        %v5914 = vadd.f32 %v5840, %v5913
        %v5915 = vpop.f32.mrf.mxu0
        %v5916 = vadd.f32 %v5842, %v5915
        %5917 = vmatmul.bf16.gmra.mxu0 %v5523
        %v5918 = vpop.f32.mrf.mxu0
        %v5919 = vadd.f32 %v5845, %v5918
        %v5920 = vpop.f32.mrf.mxu0
        %v5921 = vadd.f32 %v5847, %v5920
        %5922 = vmatmul.bf16.gmra.mxu0 %v5527
        %v5923 = vpop.f32.mrf.mxu0
        %v5924 = vadd.f32 %v5850, %v5923
        %v5925 = vpop.f32.mrf.mxu0
        %v5926 = vadd.f32 %v5852, %v5925
        %5927 = vmatmul.bf16.gmra.mxu0 %v5531
        %v5928 = vpop.f32.mrf.mxu0
        %v5929 = vadd.f32 %v5855, %v5928
        %v5930 = vpop.f32.mrf.mxu0
        %v5931 = vadd.f32 %v5857, %v5930
        %5932 = vmatmul.bf16.gmra.mxu0 %v5535
        %v5933 = vpop.f32.mrf.mxu0
        %v5934 = vadd.f32 %v5860, %v5933
        %v5935 = vpop.f32.mrf.mxu0
        %v5936 = vadd.f32 %v5862, %v5935
        %5937 = vmatmul.bf16.gmra.mxu0 %v5539
        %v5938 = vpop.f32.mrf.mxu0
        %v5939 = vadd.f32 %v5865, %v5938
        %v5940 = vpop.f32.mrf.mxu0
        %v5941 = vadd.f32 %v5867, %v5940
        %5942 = vmatmul.bf16.gmra.mxu0 %v5543
        %v5943 = vpop.f32.mrf.mxu0
        %v5944 = vadd.f32 %v5870, %v5943
        %v5945 = vpop.f32.mrf.mxu0
        %v5946 = vadd.f32 %v5872, %v5945
        %5947 = vmatmul.bf16.gmra.mxu0 %v5547
        %v5948 = vpop.f32.mrf.mxu0
        %v5949 = vadd.f32 %v5875, %v5948
        %v5950 = vpop.f32.mrf.mxu0
        %v5951 = vadd.f32 %v5877, %v5950
        %5952 = vmatmul.bf16.gmra.mxu0 %v5551
        %v5953 = vpop.f32.mrf.mxu0
        %v5954 = vadd.f32 %v5880, %v5953
        %v5955 = vpop.f32.mrf.mxu0
        %v5956 = vadd.f32 %v5882, %v5955
        %5957 = vdwg.mxu0
        %5958 = vmatpush.bf16.msra.mxu0 %v5769
        %5959 = vmatpush.bf16.msra.mxu0 %v5768
        %5960 = vmatpush.bf16.msra.mxu0 %v5767
        %5961 = vmatpush.bf16.msra.mxu0 %v5766
        %5962 = vmatpush.bf16.msra.mxu0 %v5765
        %5963 = vmatpush.bf16.msra.mxu0 %v5764
        %5964 = vmatpush.bf16.msra.mxu0 %v5763
        %5965 = vmatpush.bf16.msra.mxu0 %v5762
        %5966 = vmatmul.bf16.gmra.mxu0 %v5504
        %v5967 = vpop.f32.mrf.mxu0
        %v5968 = vadd.f32 %v5894, %v5967
        %v5969 = vpop.f32.mrf.mxu0
        %v5970 = vadd.f32 %v5896, %v5969
        %5971 = vmatmul.bf16.gmra.mxu0 %v5508
        %v5972 = vpop.f32.mrf.mxu0
        %v5973 = vadd.f32 %v5899, %v5972
        %v5974 = vpop.f32.mrf.mxu0
        %v5975 = vadd.f32 %v5901, %v5974
        %5976 = vmatmul.bf16.gmra.mxu0 %v5512
        %v5977 = vpop.f32.mrf.mxu0
        %v5978 = vadd.f32 %v5904, %v5977
        %v5979 = vpop.f32.mrf.mxu0
        %v5980 = vadd.f32 %v5906, %v5979
        %5981 = vmatmul.bf16.gmra.mxu0 %v5516
        %v5982 = vpop.f32.mrf.mxu0
        %v5983 = vadd.f32 %v5909, %v5982
        %v5984 = vpop.f32.mrf.mxu0
        %v5985 = vadd.f32 %v5911, %v5984
        %5986 = vmatmul.bf16.gmra.mxu0 %v5520
        %v5987 = vpop.f32.mrf.mxu0
        %v5988 = vadd.f32 %v5914, %v5987
        %v5989 = vpop.f32.mrf.mxu0
        %v5990 = vadd.f32 %v5916, %v5989
        %5991 = vmatmul.bf16.gmra.mxu0 %v5524
        %v5992 = vpop.f32.mrf.mxu0
        %v5993 = vadd.f32 %v5919, %v5992
        %v5994 = vpop.f32.mrf.mxu0
        %v5995 = vadd.f32 %v5921, %v5994
        %5996 = vmatmul.bf16.gmra.mxu0 %v5528
        %v5997 = vpop.f32.mrf.mxu0
        %v5998 = vadd.f32 %v5924, %v5997
        %v5999 = vpop.f32.mrf.mxu0
        %v6000 = vadd.f32 %v5926, %v5999
        %6001 = vmatmul.bf16.gmra.mxu0 %v5532
        %v6002 = vpop.f32.mrf.mxu0
        %v6003 = vadd.f32 %v5929, %v6002
        %v6004 = vpop.f32.mrf.mxu0
        %v6005 = vadd.f32 %v5931, %v6004
        %6006 = vmatmul.bf16.gmra.mxu0 %v5536
        %v6007 = vpop.f32.mrf.mxu0
        %v6008 = vadd.f32 %v5934, %v6007
        %v6009 = vpop.f32.mrf.mxu0
        %v6010 = vadd.f32 %v5936, %v6009
        %6011 = vmatmul.bf16.gmra.mxu0 %v5540
        %v6012 = vpop.f32.mrf.mxu0
        %v6013 = vadd.f32 %v5939, %v6012
        %v6014 = vpop.f32.mrf.mxu0
        %v6015 = vadd.f32 %v5941, %v6014
        %6016 = vmatmul.bf16.gmra.mxu0 %v5544
        %v6017 = vpop.f32.mrf.mxu0
        %v6018 = vadd.f32 %v5944, %v6017
        %v6019 = vpop.f32.mrf.mxu0
        %v6020 = vadd.f32 %v5946, %v6019
        %6021 = vmatmul.bf16.gmra.mxu0 %v5548
        %v6022 = vpop.f32.mrf.mxu0
        %v6023 = vadd.f32 %v5949, %v6022
        %v6024 = vpop.f32.mrf.mxu0
        %v6025 = vadd.f32 %v5951, %v6024
        %6026 = vmatmul.bf16.gmra.mxu0 %v5552
        %v6027 = vpop.f32.mrf.mxu0
        %v6028 = vadd.f32 %v5954, %v6027
        %v6029 = vpop.f32.mrf.mxu0
        %v6030 = vadd.f32 %v5956, %v6029
        %6031 = vdwg.mxu0
        %6032 = vmatpush.bf16.msra.mxu0 %v5777
        %6033 = vmatpush.bf16.msra.mxu0 %v5776
        %6034 = vmatpush.bf16.msra.mxu0 %v5775
        %6035 = vmatpush.bf16.msra.mxu0 %v5774
        %6036 = vmatpush.bf16.msra.mxu0 %v5773
        %6037 = vmatpush.bf16.msra.mxu0 %v5772
        %6038 = vmatpush.bf16.msra.mxu0 %v5771
        %6039 = vmatpush.bf16.msra.mxu0 %v5770
        %6040 = vmatmul.bf16.gmra.mxu0 %v5505
        %v6041 = vpop.f32.mrf.mxu0
        %v6042 = vadd.f32 %v5968, %v6041
        %v6043 = vpop.f32.mrf.mxu0
        %v6044 = vadd.f32 %v5970, %v6043
        %6045 = vmatmul.bf16.gmra.mxu0 %v5509
        %v6046 = vpop.f32.mrf.mxu0
        %v6047 = vadd.f32 %v5973, %v6046
        %v6048 = vpop.f32.mrf.mxu0
        %v6049 = vadd.f32 %v5975, %v6048
        %6050 = vmatmul.bf16.gmra.mxu0 %v5513
        %v6051 = vpop.f32.mrf.mxu0
        %v6052 = vadd.f32 %v5978, %v6051
        %v6053 = vpop.f32.mrf.mxu0
        %v6054 = vadd.f32 %v5980, %v6053
        %6055 = vmatmul.bf16.gmra.mxu0 %v5517
        %v6056 = vpop.f32.mrf.mxu0
        %v6057 = vadd.f32 %v5983, %v6056
        %v6058 = vpop.f32.mrf.mxu0
        %v6059 = vadd.f32 %v5985, %v6058
        %6060 = vmatmul.bf16.gmra.mxu0 %v5521
        %v6061 = vpop.f32.mrf.mxu0
        %v6062 = vadd.f32 %v5988, %v6061
        %v6063 = vpop.f32.mrf.mxu0
        %v6064 = vadd.f32 %v5990, %v6063
        %6065 = vmatmul.bf16.gmra.mxu0 %v5525
        %v6066 = vpop.f32.mrf.mxu0
        %v6067 = vadd.f32 %v5993, %v6066
        %v6068 = vpop.f32.mrf.mxu0
        %v6069 = vadd.f32 %v5995, %v6068
        %6070 = vmatmul.bf16.gmra.mxu0 %v5529
        %v6071 = vpop.f32.mrf.mxu0
        %v6072 = vadd.f32 %v5998, %v6071
        %v6073 = vpop.f32.mrf.mxu0
        %v6074 = vadd.f32 %v6000, %v6073
        %6075 = vmatmul.bf16.gmra.mxu0 %v5533
        %v6076 = vpop.f32.mrf.mxu0
        %v6077 = vadd.f32 %v6003, %v6076
        %v6078 = vpop.f32.mrf.mxu0
        %v6079 = vadd.f32 %v6005, %v6078
        %6080 = vmatmul.bf16.gmra.mxu0 %v5537
        %v6081 = vpop.f32.mrf.mxu0
        %v6082 = vadd.f32 %v6008, %v6081
        %v6083 = vpop.f32.mrf.mxu0
        %v6084 = vadd.f32 %v6010, %v6083
        %6085 = vmatmul.bf16.gmra.mxu0 %v5541
        %v6086 = vpop.f32.mrf.mxu0
        %v6087 = vadd.f32 %v6013, %v6086
        %v6088 = vpop.f32.mrf.mxu0
        %v6089 = vadd.f32 %v6015, %v6088
        %6090 = vmatmul.bf16.gmra.mxu0 %v5545
        %v6091 = vpop.f32.mrf.mxu0
        %v6092 = vadd.f32 %v6018, %v6091
        %v6093 = vpop.f32.mrf.mxu0
        %v6094 = vadd.f32 %v6020, %v6093
        %6095 = vmatmul.bf16.gmra.mxu0 %v5549
        %v6096 = vpop.f32.mrf.mxu0
        %v6097 = vadd.f32 %v6023, %v6096
        %v6098 = vpop.f32.mrf.mxu0
        %v6099 = vadd.f32 %v6025, %v6098
        %6100 = vmatmul.bf16.gmra.mxu0 %v5553
        %v6101 = vpop.f32.mrf.mxu0
        %v6102 = vadd.f32 %v6028, %v6101
        %v6103 = vpop.f32.mrf.mxu0
        %v6104 = vadd.f32 %v6030, %v6103
        %6105 = vdwg.mxu0
        %v6106 = vadd.f32 %v5476, %v6042
        %v6107 = vadd.f32 %v5477, %v6044
        %v6108 = vadd.f32 %v5478, %v6047
        %v6109 = vadd.f32 %v5479, %v6049
        %v6110 = vadd.f32 %v5480, %v6052
        %v6111 = vadd.f32 %v5481, %v6054
        %v6112 = vadd.f32 %v5482, %v6057
        %v6113 = vadd.f32 %v5483, %v6059
        %v6114 = vadd.f32 %v5484, %v6062
        %v6115 = vadd.f32 %v5485, %v6064
        %v6116 = vadd.f32 %v5486, %v6067
        %v6117 = vadd.f32 %v5487, %v6069
        %v6118 = vadd.f32 %v5488, %v6072
        %v6119 = vadd.f32 %v5489, %v6074
        %v6120 = vadd.f32 %v5490, %v6077
        %v6121 = vadd.f32 %v5491, %v6079
        %v6122 = vadd.f32 %v5492, %v6082
        %v6123 = vadd.f32 %v5493, %v6084
        %v6124 = vadd.f32 %v5494, %v6087
        %v6125 = vadd.f32 %v5495, %v6089
        %v6126 = vadd.f32 %v5496, %v6092
        %v6127 = vadd.f32 %v5497, %v6094
        %v6128 = vadd.f32 %v5498, %v6097
        %v6129 = vadd.f32 %v5499, %v6099
        %v6130 = vadd.f32 %v5500, %v6102
        %v6131 = vadd.f32 %v5501, %v6104
        %6132 = vst [vmem:[#allocation2] sm:$0xff] %v6106
        %6133 = vst [vmem:[#allocation2 + $0x8] sm:$0xff] %v6107
        %6134 = vst [vmem:[#allocation2 + $0x10] sm:$0xff] %v6108
        %6135 = vst [vmem:[#allocation2 + $0x18] sm:$0xff] %v6109
        %6136 = vst [vmem:[#allocation2 + $0x20] sm:$0xff] %v6110
        %6137 = vst [vmem:[#allocation2 + $0x28] sm:$0xff] %v6111
        %6138 = vst [vmem:[#allocation2 + $0x30] sm:$0xff] %v6112
        %6139 = vst [vmem:[#allocation2 + $0x38] sm:$0xff] %v6113
        %6140 = vst [vmem:[#allocation2 + $0x40] sm:$0xff] %v6114
        %6141 = vst [vmem:[#allocation2 + $0x48] sm:$0xff] %v6115
        %6142 = vst [vmem:[#allocation2 + $0x50] sm:$0xff] %v6116
        %6143 = vst [vmem:[#allocation2 + $0x58] sm:$0xff] %v6117
        %6144 = vst [vmem:[#allocation2 + $0x60] sm:$0xff] %v6118
        %6145 = vst [vmem:[#allocation2 + $0x68] sm:$0xff] %v6119
        %6146 = vst [vmem:[#allocation2 + $0x70] sm:$0xff] %v6120
        %6147 = vst [vmem:[#allocation2 + $0x78] sm:$0xff] %v6121
        %6148 = vst [vmem:[#allocation2 + $0x80] sm:$0xff] %v6122
        %6149 = vst [vmem:[#allocation2 + $0x88] sm:$0xff] %v6123
        %6150 = vst [vmem:[#allocation2 + $0x90] sm:$0xff] %v6124
        %6151 = vst [vmem:[#allocation2 + $0x98] sm:$0xff] %v6125
        %6152 = vst [vmem:[#allocation2 + $0xa0] sm:$0xff] %v6126
        %6153 = vst [vmem:[#allocation2 + $0xa8] sm:$0xff] %v6127
        %6154 = vst [vmem:[#allocation2 + $0xb0] sm:$0xff] %v6128
        %6155 = vst [vmem:[#allocation2 + $0xb8] sm:$0xff] %v6129
        %6156 = vst [vmem:[#allocation2 + $0xc0] sm:$0xff] %v6130
        %6157 = vst [vmem:[#allocation2 + $0xc8] sm:$0xff] %v6131
        // Predicated region
        $region61: #{tpu_custom_call.1} parent=39 // pred_check
          %p6158 = pneg %p333
        $region62: #{tpu_custom_call.1} parent=39 // pred_check_branch
          %6160 = sbr.rel (%p6158) target = $region64
        $region63: #{tpu_custom_call.1} parent=39 // pred_region
          %v6161 = vld [vmem:[#allocation2] sm:$0xff]
          %v6162 = vld [vmem:[#allocation2 + $0x8] sm:$0xff]
          %v6163 = vld [vmem:[#allocation2 + $0x10] sm:$0xff]
          %v6164 = vld [vmem:[#allocation2 + $0x18] sm:$0xff]
          %v6165 = vld [vmem:[#allocation2 + $0x20] sm:$0xff]
          %v6166 = vld [vmem:[#allocation2 + $0x28] sm:$0xff]
          %v6167 = vld [vmem:[#allocation2 + $0x30] sm:$0xff]
          %v6168 = vld [vmem:[#allocation2 + $0x38] sm:$0xff]
          %v6169 = vld [vmem:[#allocation2 + $0x40] sm:$0xff]
          %v6170 = vld [vmem:[#allocation2 + $0x48] sm:$0xff]
          %v6171 = vld [vmem:[#allocation2 + $0x50] sm:$0xff]
          %v6172 = vld [vmem:[#allocation2 + $0x58] sm:$0xff]
          %v6173 = vld [vmem:[#allocation2 + $0x60] sm:$0xff]
          %v6174 = vld [vmem:[#allocation2 + $0x68] sm:$0xff]
          %v6175 = vld [vmem:[#allocation2 + $0x70] sm:$0xff]
          %v6176 = vld [vmem:[#allocation2 + $0x78] sm:$0xff]
          %v6177 = vld [vmem:[#allocation2 + $0x80] sm:$0xff]
          %v6178 = vld [vmem:[#allocation2 + $0x88] sm:$0xff]
          %v6179 = vld [vmem:[#allocation2 + $0x90] sm:$0xff]
          %v6180 = vld [vmem:[#allocation2 + $0x98] sm:$0xff]
          %v6181 = vld [vmem:[#allocation2 + $0xa0] sm:$0xff]
          %v6182 = vld [vmem:[#allocation2 + $0xa8] sm:$0xff]
          %v6183 = vld [vmem:[#allocation2 + $0xb0] sm:$0xff]
          %v6184 = vld [vmem:[#allocation2 + $0xb8] sm:$0xff]
          %v6185 = vld [vmem:[#allocation2 + $0xc0] sm:$0xff]
          %v6186 = vld [vmem:[#allocation2 + $0xc8] sm:$0xff]
          %v6187 = vld [vmem:[%s4] sm:$0x1]
          %v6189 = vperm.slane %v6187, 0
          %v6191 = vadd.f32 %v6161, %v6189
          %v6192 = vadd.f32 %v6162, %v6189
          %v6193 = vadd.f32 %v6163, %v6189
          %v6194 = vadd.f32 %v6164, %v6189
          %v6195 = vadd.f32 %v6165, %v6189
          %v6196 = vadd.f32 %v6166, %v6189
          %v6197 = vadd.f32 %v6167, %v6189
          %v6198 = vadd.f32 %v6168, %v6189
          %v6199 = vadd.f32 %v6169, %v6189
          %v6200 = vadd.f32 %v6170, %v6189
          %v6201 = vadd.f32 %v6171, %v6189
          %v6202 = vadd.f32 %v6172, %v6189
          %v6203 = vadd.f32 %v6173, %v6189
          %v6204 = vadd.f32 %v6174, %v6189
          %v6205 = vadd.f32 %v6175, %v6189
          %v6206 = vadd.f32 %v6176, %v6189
          %v6207 = vadd.f32 %v6177, %v6189
          %v6208 = vadd.f32 %v6178, %v6189
          %v6209 = vadd.f32 %v6179, %v6189
          %v6210 = vadd.f32 %v6180, %v6189
          %v6211 = vadd.f32 %v6181, %v6189
          %v6212 = vadd.f32 %v6182, %v6189
          %v6213 = vadd.f32 %v6183, %v6189
          %v6214 = vadd.f32 %v6184, %v6189
          %v6215 = vadd.f32 %v6185, %v6189
          %v6216 = vadd.f32 %v6186, %v6189
          %6217 = vst [vmem:[%s327] sm:$0xff] %v6191
          %6218 = vst [vmem:[%s327 + $0x8] sm:$0xff] %v6192
          %6219 = vst [vmem:[%s327 + $0x10] sm:$0xff] %v6193
          %6220 = vst [vmem:[%s327 + $0x18] sm:$0xff] %v6194
          %6221 = vst [vmem:[%s327 + $0x20] sm:$0xff] %v6195
          %6222 = vst [vmem:[%s327 + $0x28] sm:$0xff] %v6196
          %6223 = vst [vmem:[%s327 + $0x30] sm:$0xff] %v6197
          %6224 = vst [vmem:[%s327 + $0x38] sm:$0xff] %v6198
          %6225 = vst [vmem:[%s327 + $0x40] sm:$0xff] %v6199
          %6226 = vst [vmem:[%s327 + $0x48] sm:$0xff] %v6200
          %6227 = vst [vmem:[%s327 + $0x50] sm:$0xff] %v6201
          %6228 = vst [vmem:[%s327 + $0x58] sm:$0xff] %v6202
          %6229 = vst [vmem:[%s327 + $0x60] sm:$0xff] %v6203
          %6230 = vst [vmem:[%s327 + $0x68] sm:$0xff] %v6204
          %6231 = vst [vmem:[%s327 + $0x70] sm:$0xff] %v6205
          %6232 = vst [vmem:[%s327 + $0x78] sm:$0xff] %v6206
          %6233 = vst [vmem:[%s327 + $0x80] sm:$0xff] %v6207
          %6234 = vst [vmem:[%s327 + $0x88] sm:$0xff] %v6208
          %6235 = vst [vmem:[%s327 + $0x90] sm:$0xff] %v6209
          %6236 = vst [vmem:[%s327 + $0x98] sm:$0xff] %v6210
          %6237 = vst [vmem:[%s327 + $0xa0] sm:$0xff] %v6211
          %6238 = vst [vmem:[%s327 + $0xa8] sm:$0xff] %v6212
          %6239 = vst [vmem:[%s327 + $0xb0] sm:$0xff] %v6213
          %6240 = vst [vmem:[%s327 + $0xb8] sm:$0xff] %v6214
          %6241 = vst [vmem:[%s327 + $0xc0] sm:$0xff] %v6215
          %6242 = vst [vmem:[%s327 + $0xc8] sm:$0xff] %v6216
        $region64: #{tpu_custom_call.1} parent=39 // pred_fallthru
          _
        %s6243 = sand.u32 %s169, 1
        %s6244 = scalar_lea.sflag [#allocation5], %s6243
        %s6245 = sand.u32 %s169, 1
        %s6246 = smul.addr %s6245, 208
        %s6247 = scalar_lea.vmem [#allocation11], %s6246
        // Predicated region
        $region65: #{tpu_custom_call.1} parent=39 // pred_check
          %p6248 = pneg %p179
        $region66: #{tpu_custom_call.1} parent=39 // pred_check_branch
          %6250 = sbr.rel (%p6248) target = $region68
        $region67: #{tpu_custom_call.1} parent=39 // pred_region
          %s6251 = smul.u32 26, %s28
          %6253 = vsyncadd %s6244, 0
          %s6254 = smul.addr %s6251, 8
          %s6255 = scalar_lea.hbm %s5, %s6254
          %s6256 = sshll.u32 %s6247, 4
          %s6257 = int_to_ptr.vmem [resolvable:$true] %s6256
          %s6258 = sshll.u32 %s6255, 4
          %s6259 = int_to_ptr.hbm [resolvable:$true] %s6258
          %6264 = dma.vmem_to_hbm [thread:$0]  %s6257, 3328, %s6259, %s6244, 128, 128, 8
        $region68: #{tpu_custom_call.1} parent=39 // pred_fallthru
          _
      $region40: #{tpu_custom_call.1} parent=5 // pred_fallthru
        _
      %p6265 = scmp.le.s32.totalorder 2, %s19
      // Predicated region
      $region69: #{tpu_custom_call.1} parent=5 // pred_check
        %p6266 = pneg %p6265
      $region70: #{tpu_custom_call.1} parent=5 // pred_check_branch
        %6268 = sbr.rel (%p6266) target = $region72
      $region71: #{tpu_custom_call.1} parent=5 // pred_region
        %s6269 = ssub.s32 %s19, 2
        // Predicated region
        $region73: #{tpu_custom_call.1} parent=71 // pred_check
          %p6270 = pneg %p185
        $region74: #{tpu_custom_call.1} parent=71 // pred_check_branch
          %6272 = sbr.rel (%p6270) target = $region76
        $region75: #{tpu_custom_call.1} parent=71 // pred_region
          %s6273 = sand.u32 %s170, 1
          %s6274 = scalar_lea.sflag [#allocation5], %s6273
          %s6275 = sand.u32 %s170, 1
          %s6276 = smul.addr %s6275, 208
          %s6277 = scalar_lea.vmem [#allocation11], %s6276
          %6279 = dma.done %s6274, 3328
        $region76: #{tpu_custom_call.1} parent=71 // pred_fallthru
          _
      $region72: #{tpu_custom_call.1} parent=5 // pred_fallthru
        _
    $region6: #{tpu_custom_call.1} parent=1 // loop_footer
      %s23 = sadd.s32 1, %s19
    $region7: #{tpu_custom_call.1} parent=1 // loop_footer_branch
      %18 = sbr.rel target = $region3
    $region8: #{tpu_custom_call.1} parent=1 // loop_exit
      _
    %6280 = vsyncpa [#allocation4], 1
    %s6281 = scalar_lea.sflag [#allocation4], 1
    %6282 = vsyncpa %s6281, 1
    %6283 = vsyncpa [#allocation7], 1
    %6284 = vsyncpa [#allocation10], 1
    %6285 = vsyncpa [#allocation5], 1
    %s6286 = scalar_lea.sflag [#allocation5], 1
    %6287 = vsyncpa %s6286, 1

</llo_original>
